<compile_context>
chip_gen: v7x
topology: tpu7x:2x2x1
jax: 0.10.0
libtpu: 0.0.40
codegen_flags: <defaults>
</compile_context>

<pallas_src>
import functools
import math

import numpy as np
import jax
import jax.numpy as jnp
from jax import lax
from jax.experimental import pallas as pl
from jax.experimental.pallas import tpu as pltpu


# ---------------------------------------------------------------------------
# Fused kernel: conv1 -> BN1 -> ReLU -> conv2 -> BN2 -> ReLU in one body.
# ---------------------------------------------------------------------------
def _bn_relu(acc, proj, gamma, beta, inv_count, eps):
    # acc: (M, nout) f32, lanes = (wo, co).  proj[i, j] = (i % cout == j % cout)
    # for real columns -> channel-sum + broadcast back across wo groups.
    colsum = jnp.sum(acc, axis=0, keepdims=True)          # (1, nout)
    colssq = jnp.sum(acc * acc, axis=0, keepdims=True)    # (1, nout)
    s = jnp.dot(colsum, proj, preferred_element_type=jnp.float32)
    ss = jnp.dot(colssq, proj, preferred_element_type=jnp.float32)
    mean = s * inv_count
    var = jnp.maximum(ss * inv_count - mean * mean, 0.0)  # clamp cancellation
    scale = gamma * lax.rsqrt(var + eps)
    bias = beta - mean * scale
    return jnp.maximum(acc * scale + bias, 0.0)


def fused_block_kernel(slabs1_ref, band1_ref, g1_ref, b1_ref, proj1_ref,
                       gather_ref, band2_ref, g2_ref, b2_ref, proj2_ref,
                       out_ref, *, inv_count1, inv_count2, eps):
    m1 = slabs1_ref.shape[0]
    n_taps = band2_ref.shape[0]

    # ---- Layer 1: single K-concatenated banded matmul (bf16 -> f32 acc) ----
    acc1 = jnp.dot(slabs1_ref[...], band1_ref[...],
                   preferred_element_type=jnp.float32)            # (M, Wo*Cout)
    y1 = _bn_relu(acc1, proj1_ref[...], g1_ref[...], b1_ref[...], inv_count1, eps)
    y1b = y1.astype(jnp.bfloat16)

    # ---- Layer 2: D/H halo via 0/1 gather matmul, then 9 banded matmuls ----
    gath = jnp.dot(gather_ref[...], y1b,
                   preferred_element_type=jnp.float32)            # (9*M, Wo*Cout)
    gath = gath.astype(jnp.bfloat16)                              # exact (0/1 gather)
    acc2 = jnp.zeros((m1, out_ref.shape[1]), jnp.float32)
    for t in range(n_taps):
        acc2 = acc2 + jnp.dot(gath[t * m1:(t + 1) * m1, :], band2_ref[t],
                              preferred_element_type=jnp.float32)

    out_ref[...] = _bn_relu(acc2, proj2_ref[...], g2_ref[...], b2_ref[...],
                            inv_count2, eps)


def fused_block(slabs1, band1, g1, b1, proj1, gather, band2, g2, b2, proj2,
                *, count1, count2, eps=1e-5):
    m1 = slabs1.shape[0]
    nout2 = band2.shape[-1]
    kernel = functools.partial(fused_block_kernel,
                               inv_count1=1.0 / float(count1),
                               inv_count2=1.0 / float(count2), eps=eps)

    def full(a):
        return pl.BlockSpec(a.shape, lambda i, _nd=a.ndim: (0,) * _nd)

    return pl.pallas_call(
        kernel,
        out_shape=jax.ShapeDtypeStruct((m1, nout2), jnp.float32),
        grid=(1,),
        in_specs=[full(slabs1), full(band1), full(g1), full(b1), full(proj1),
                  full(gather), full(band2), full(g2), full(b2), full(proj2)],
        out_specs=pl.BlockSpec((m1, nout2), lambda i: (0, 0)),
        compiler_params=pltpu.CompilerParams(dimension_semantics=("arbitrary",)),
    )(slabs1, band1, g1, b1, proj1, gather, band2, g2, b2, proj2)


# ---------------------------------------------------------------------------
# XLA glue (inside jit): K-concatenated layer-1 slabs.  No K blowup per tap.
# ---------------------------------------------------------------------------
def _make_slabs(x_ndhwc, stride):
    """(N, D, H, W, C) -> (N*Do*Ho, 9*(W+2)*C) bf16, k=3, padding=1."""
    n, d, h, w, c = x_ndhwc.shape
    do = (d + 2 - 3) // stride + 1
    ho = (h + 2 - 3) // stride + 1
    xp = jnp.pad(x_ndhwc, ((0, 0), (1, 1), (1, 1), (1, 1), (0, 0)))
    xp = xp.reshape(n, d + 2, h + 2, (w + 2) * c)      # fold (W, C) into lanes
    slabs = []
    for kd in range(3):
        for kh in range(3):
            sl = xp[:, kd:kd + stride * (do - 1) + 1:stride,
                       kh:kh + stride * (ho - 1) + 1:stride, :]
            slabs.append(sl.reshape(n * do * ho, (w + 2) * c))
    return jnp.concatenate(slabs, axis=-1).astype(jnp.bfloat16), (n, do, ho)


# ---------------------------------------------------------------------------
# One-time (host/prep) weight preprocessing.
# ---------------------------------------------------------------------------
def _make_band_stride2(w, in_w, out_w):
    """w: (3,3,3,Cin,Cout) -> (9*(in_w+2)*Cin, out_w*Cout) bf16 banded weights."""
    _, _, _, cin, cout = w.shape
    wp = in_w + 2
    sel = np.zeros((3, wp, out_w), np.float32)
    for kw in range(3):
        for wo in range(out_w):
            sel[kw, 2 * wo + kw, wo] = 1.0
    band = jnp.einsum("kiw,dekco->deicwo", jnp.asarray(sel), w)
    return band.reshape(9 * wp * cin, out_w * cout).astype(jnp.bfloat16)


def _make_band_pad1(w, width, nout_pad):
    """Stride-1, pad-1 banded weights with W-padding folded in (zero rows for
    out-of-range wi) and output columns zero-padded to nout_pad."""
    _, _, _, cin, cout = w.shape
    sel = np.zeros((3, width, width), np.float32)      # sel[kw, wi, wo]
    for kw in range(3):
        for wo in range(width):
            wi = wo + kw - 1
            if 0 <= wi < width:
                sel[kw, wi, wo] = 1.0
    band = jnp.einsum("kiw,dekco->deicwo", jnp.asarray(sel), w)
    band = band.reshape(9, width * cin, width * cout)
    band = jnp.pad(band, ((0, 0), (0, 0), (0, nout_pad - width * cout)))
    return band.astype(jnp.bfloat16)


def _make_gather(n, do, ho):
    """0/1 row-gather matrix (9*M, M): tap t picks y1 row (n, do+kd-1, ho+kh-1)
    for output row (n, do, ho); zero rows implement the D/H padding."""
    m = n * do * ho
    s = np.zeros((9, m, m), np.float32)
    for kd in range(3):
        for kh in range(3):
            t = kd * 3 + kh
            for b in range(n):
                for d in range(do):
                    ds_ = d + kd - 1
                    if not (0 <= ds_ < do):
                        continue
                    for hh in range(ho):
                        hs = hh + kh - 1
                        if not (0 <= hs < ho):
                            continue
                        s[t, (b * do + d) * ho + hh, (b * do + ds_) * ho + hs] = 1.0
    return jnp.asarray(s.reshape(9 * m, m), jnp.bfloat16)


def _make_proj(nout, cout, real_n):
    i = np.arange(nout)[:, None]
    j = np.arange(nout)[None, :]
    p = ((i % cout) == (j % cout)) & (i < real_n)
    return jnp.asarray(p, jnp.float32)


def xavier_uniform_conv3d(key, cin, cout, k=3):
    # Generated directly in (kd, kh, kw, Cin, Cout); a real PyTorch state_dict
    # would need a permute from (Cout, Cin, kd, kh, kw) first.
    fan_in = cin * k ** 3
    fan_out = cout * k ** 3
    bound = math.sqrt(6.0 / (fan_in + fan_out))
    return jax.random.uniform(key, (k, k, k, cin, cout), jnp.float32,
                              minval=-bound, maxval=bound)


def prepare_params(key, cin, cout, n, d, h, w):
    k1, k2 = jax.random.split(key)
    w1 = xavier_uniform_conv3d(k1, cin, cout)
    w2 = xavier_uniform_conv3d(k2, cout, cout)
    do1 = (d + 2 - 3) // 2 + 1
    ho1 = (h + 2 - 3) // 2 + 1
    wo1 = (w + 2 - 3) // 2 + 1
    nout1 = wo1 * cout                      # intermediate lanes (stay unpadded)
    nout2 = ((nout1 + 127) // 128) * 128    # final output lanes padded to 128
    gamma = jnp.ones((cout,), jnp.float32)  # BatchNorm3d default weight
    beta = jnp.zeros((cout,), jnp.float32)  # BatchNorm3d default bias
    return {
        "w1": w1, "w2": w2,
        "band1": _make_band_stride2(w1, w, wo1),
        "band2": _make_band_pad1(w2, wo1, nout2),
        "gather": _make_gather(n, do1, ho1),
        "proj1": _make_proj(nout1, cout, nout1),
        "proj2": _make_proj(nout2, cout, nout1),
        "g1": jnp.tile(gamma, wo1).reshape(1, nout1),
        "b1": jnp.tile(beta, wo1).reshape(1, nout1),
        "g2": jnp.pad(jnp.tile(gamma, wo1), (0, nout2 - nout1)).reshape(1, nout2),
        "b2": jnp.pad(jnp.tile(beta, wo1), (0, nout2 - nout1)).reshape(1, nout2),
    }


# ---------------------------------------------------------------------------
# Forward pass (jitted): XLA only does pad/slice/reshape/transpose glue.
# ---------------------------------------------------------------------------
def bottle_conv_resnet_block(x_ncdhw, band1, g1, b1, proj1,
                             gather, band2, g2, b2, proj2, *, cout):
    x = jnp.transpose(x_ncdhw, (0, 2, 3, 4, 1))        # NCDHW -> NDHWC
    slabs1, (n, do1, ho1) = _make_slabs(x, stride=2)
    nout1 = g1.shape[1]
    wo1 = nout1 // cout
    count = n * do1 * ho1 * wo1                         # per-channel BN count (both layers)
    out = fused_block(slabs1, band1, g1, b1, proj1,
                      gather, band2, g2, b2, proj2,
                      count1=count, count2=count)       # (M, nout2_padded)
    y = out[:, :nout1].reshape(n, do1, ho1, wo1, cout)
    return jnp.transpose(y, (0, 4, 1, 2, 3))            # NDHWC -> NCDHW


# ---------------------------------------------------------------------------
# Pure-JAX reference (f32) for a correctness sanity check.
# ---------------------------------------------------------------------------
def _reference(x, w1, w2, eps=1e-5):
    def conv_bn_relu(z, w, stride):
        y = lax.conv_general_dilated(
            z, w, window_strides=(stride,) * 3, padding=[(1, 1)] * 3,
            dimension_numbers=("NCDHW", "DHWIO", "NCDHW"))
        mean = jnp.mean(y, axis=(0, 2, 3, 4), keepdims=True)
        var = jnp.mean((y - mean) ** 2, axis=(0, 2, 3, 4), keepdims=True)
        return jnp.maximum((y - mean) * lax.rsqrt(var + eps), 0.0)
    return conv_bn_relu(conv_bn_relu(x, w1, 2), w2, 1)


if __name__ == "__main__":
    key = jax.random.PRNGKey(0)
    kx, kp = jax.random.split(key)

    N, Cin, Cout, D, H, W = 2, 4, 8, 16, 16, 16
    x = jax.random.normal(kx, (N, Cin, D, H, W), jnp.float32)   # NCDHW like PyTorch
    prep = prepare_params(kp, Cin, Cout, N, D, H, W)

    fwd = jax.jit(functools.partial(bottle_conv_resnet_block, cout=Cout))
    out = fwd(x, prep["band1"], prep["g1"], prep["b1"], prep["proj1"],
              prep["gather"], prep["band2"], prep["g2"], prep["b2"], prep["proj2"])
    jax.block_until_ready(out)

    assert out.shape == (N, Cout, 8, 8, 8), out.shape
    assert bool(jnp.all(jnp.isfinite(out)))

    # Loose-tolerance check vs an f32 XLA reference (bf16 conv operands -> ~1e-2).
    ref = jax.jit(_reference)(x, prep["w1"], prep["w2"])
    jax.block_until_ready(ref)
    assert np.allclose(np.asarray(out), np.asarray(ref), atol=1e-1, rtol=1e-1), (
        float(jnp.max(jnp.abs(out - ref))))

    print("KERNEL_OK")
</pallas_src>

<mosaic_0001>
module attributes {stable_mosaic.version = 11 : i64} {
  func.func @fused_block_kernel(%arg0: i32, %arg1: memref<128x648xbf16, #tpu.memory_space<vmem>>, %arg2: memref<648x64xbf16, #tpu.memory_space<vmem>>, %arg3: memref<1x64xf32, #tpu.memory_space<vmem>>, %arg4: memref<1x64xf32, #tpu.memory_space<vmem>>, %arg5: memref<64x64xf32, #tpu.memory_space<vmem>>, %arg6: memref<1152x128xbf16, #tpu.memory_space<vmem>>, %arg7: memref<9x64x128xbf16, #tpu.memory_space<vmem>>, %arg8: memref<1x128xf32, #tpu.memory_space<vmem>>, %arg9: memref<1x128xf32, #tpu.memory_space<vmem>>, %arg10: memref<128x128xf32, #tpu.memory_space<vmem>>, %arg11: memref<128x128xf32, #tpu.memory_space<vmem>>) attributes {dimension_semantics = [#tpu.dimension_semantics<arbitrary>], iteration_bounds = array<i64: 1>, scalar_prefetch = 0 : i64, scratch_operands = 0 : i64, tpu.core_type = #tpu.core_type<tc>, window_params = [{pipeline_mode = #tpu.pipeline_mode<synchronous>, transform_indices = @transform_0, window_bounds = array<i64: 128, 648>}, {pipeline_mode = #tpu.pipeline_mode<synchronous>, transform_indices = @transform_1, window_bounds = array<i64: 648, 64>}, {pipeline_mode = #tpu.pipeline_mode<synchronous>, transform_indices = @transform_2, window_bounds = array<i64: 1, 64>}, {pipeline_mode = #tpu.pipeline_mode<synchronous>, transform_indices = @transform_3, window_bounds = array<i64: 1, 64>}, {pipeline_mode = #tpu.pipeline_mode<synchronous>, transform_indices = @transform_4, window_bounds = array<i64: 64, 64>}, {pipeline_mode = #tpu.pipeline_mode<synchronous>, transform_indices = @transform_5, window_bounds = array<i64: 1152, 128>}, {pipeline_mode = #tpu.pipeline_mode<synchronous>, transform_indices = @transform_6, window_bounds = array<i64: 9, 64, 128>}, {pipeline_mode = #tpu.pipeline_mode<synchronous>, transform_indices = @transform_7, window_bounds = array<i64: 1, 128>}, {pipeline_mode = #tpu.pipeline_mode<synchronous>, transform_indices = @transform_8, window_bounds = array<i64: 1, 128>}, {pipeline_mode = #tpu.pipeline_mode<synchronous>, transform_indices = @transform_9, window_bounds = array<i64: 128, 128>}, {pipeline_mode = #tpu.pipeline_mode<synchronous>, transform_indices = @transform_10, window_bounds = array<i64: 128, 128>}]} {
    %c0 = arith.constant 0 : index
    %c0_0 = arith.constant 0 : index
    %0 = vector.load %arg1[%c0, %c0_0] : memref<128x648xbf16, #tpu.memory_space<vmem>>, vector<128x648xbf16>
    %c0_1 = arith.constant 0 : index
    %c0_2 = arith.constant 0 : index
    %1 = vector.load %arg2[%c0_1, %c0_2] : memref<648x64xbf16, #tpu.memory_space<vmem>>, vector<648x64xbf16>
    %cst = arith.constant dense<0.000000e+00> : vector<128x64xf32>
    %2 = tpu.matmul %0, %1, %cst {dimension_numbers = #tpu.dot_dimension_numbers<[1], [0], [0], [1], [0, 0, 1, 1], [], []>} : vector<128x648xbf16>, vector<648x64xbf16>, vector<128x64xf32> -> vector<128x64xf32>
    %c0_3 = arith.constant 0 : index
    %c0_4 = arith.constant 0 : index
    %3 = vector.load %arg5[%c0_3, %c0_4] : memref<64x64xf32, #tpu.memory_space<vmem>>, vector<64x64xf32>
    %c0_5 = arith.constant 0 : index
    %c0_6 = arith.constant 0 : index
    %4 = vector.load %arg3[%c0_5, %c0_6] : memref<1x64xf32, #tpu.memory_space<vmem>>, vector<1x64xf32>
    %c0_7 = arith.constant 0 : index
    %c0_8 = arith.constant 0 : index
    %5 = vector.load %arg4[%c0_7, %c0_8] : memref<1x64xf32, #tpu.memory_space<vmem>>, vector<1x64xf32>
    %cst_9 = arith.constant dense<0.000000e+00> : vector<64xf32>
    %6 = vector.multi_reduction <add>, %2, %cst_9 [0] : vector<128x64xf32> to vector<64xf32>
    %7 = vector.shape_cast %6 : vector<64xf32> to vector<1x64xf32>
    %8 = arith.mulf %2, %2 : vector<128x64xf32>
    %cst_10 = arith.constant dense<0.000000e+00> : vector<64xf32>
    %9 = vector.multi_reduction <add>, %8, %cst_10 [0] : vector<128x64xf32> to vector<64xf32>
    %10 = vector.shape_cast %9 : vector<64xf32> to vector<1x64xf32>
    %cst_11 = arith.constant dense<0.000000e+00> : vector<1x64xf32>
    %11 = tpu.matmul %7, %3, %cst_11 {dimension_numbers = #tpu.dot_dimension_numbers<[1], [0], [0], [1], [0, 0, 1, 1], [], []>} : vector<1x64xf32>, vector<64x64xf32>, vector<1x64xf32> -> vector<1x64xf32>
    %cst_12 = arith.constant dense<0.000000e+00> : vector<1x64xf32>
    %12 = tpu.matmul %10, %3, %cst_12 {dimension_numbers = #tpu.dot_dimension_numbers<[1], [0], [0], [1], [0, 0, 1, 1], [], []>} : vector<1x64xf32>, vector<64x64xf32>, vector<1x64xf32> -> vector<1x64xf32>
    %cst_13 = arith.constant 9.765625E-4 : f32
    %13 = vector.broadcast %cst_13 : f32 to vector<1x64xf32>
    %14 = arith.mulf %11, %13 : vector<1x64xf32>
    %cst_14 = arith.constant 9.765625E-4 : f32
    %15 = vector.broadcast %cst_14 : f32 to vector<1x64xf32>
    %16 = arith.mulf %12, %15 : vector<1x64xf32>
    %17 = arith.mulf %14, %14 : vector<1x64xf32>
    %18 = arith.subf %16, %17 : vector<1x64xf32>
    %cst_15 = arith.constant 0.000000e+00 : f32
    %19 = vector.broadcast %cst_15 : f32 to vector<1x64xf32>
    %20 = arith.maximumf %18, %19 : vector<1x64xf32>
    %cst_16 = arith.constant 9.99999974E-6 : f32
    %21 = vector.broadcast %cst_16 : f32 to vector<1x64xf32>
    %22 = arith.addf %20, %21 : vector<1x64xf32>
    %23 = math.rsqrt %22 : vector<1x64xf32>
    %24 = arith.mulf %4, %23 : vector<1x64xf32>
    %25 = arith.mulf %14, %24 : vector<1x64xf32>
    %26 = arith.subf %5, %25 : vector<1x64xf32>
    %27 = vector.broadcast %24 : vector<1x64xf32> to vector<128x64xf32>
    %28 = arith.mulf %2, %27 : vector<128x64xf32>
    %29 = vector.broadcast %26 : vector<1x64xf32> to vector<128x64xf32>
    %30 = arith.addf %28, %29 : vector<128x64xf32>
    %cst_17 = arith.constant 0.000000e+00 : f32
    %31 = vector.broadcast %cst_17 : f32 to vector<128x64xf32>
    %32 = arith.maximumf %30, %31 : vector<128x64xf32>
    %33 = arith.truncf %32 : vector<128x64xf32> to vector<128x64xbf16>
    %c0_18 = arith.constant 0 : index
    %c0_19 = arith.constant 0 : index
    %34 = vector.load %arg6[%c0_18, %c0_19] : memref<1152x128xbf16, #tpu.memory_space<vmem>>, vector<1152x128xbf16>
    %cst_20 = arith.constant dense<0.000000e+00> : vector<1152x64xf32>
    %35 = tpu.matmul %34, %33, %cst_20 {dimension_numbers = #tpu.dot_dimension_numbers<[1], [0], [0], [1], [0, 0, 1, 1], [], []>} : vector<1152x128xbf16>, vector<128x64xbf16>, vector<1152x64xf32> -> vector<1152x64xf32>
    %36 = arith.truncf %35 : vector<1152x64xf32> to vector<1152x64xbf16>
    %cst_21 = arith.constant 0.000000e+00 : f32
    %37 = vector.broadcast %cst_21 : f32 to vector<128x128xf32>
    %38 = vector.extract_strided_slice %36 {offsets = [0, 0], sizes = [128, 64], strides = [1, 1]} : vector<1152x64xbf16> to vector<128x64xbf16>
    %c0_22 = arith.constant 0 : index
    %c0_23 = arith.constant 0 : index
    %c0_24 = arith.constant 0 : index
    %39 = vector.load %arg7[%c0_22, %c0_23, %c0_24] : memref<9x64x128xbf16, #tpu.memory_space<vmem>>, vector<1x64x128xbf16>
    %40 = vector.shape_cast %39 : vector<1x64x128xbf16> to vector<64x128xbf16>
    %cst_25 = arith.constant dense<0.000000e+00> : vector<128x128xf32>
    %41 = tpu.matmul %38, %40, %cst_25 {dimension_numbers = #tpu.dot_dimension_numbers<[1], [0], [0], [1], [0, 0, 1, 1], [], []>} : vector<128x64xbf16>, vector<64x128xbf16>, vector<128x128xf32> -> vector<128x128xf32>
    %42 = arith.addf %37, %41 : vector<128x128xf32>
    %43 = vector.extract_strided_slice %36 {offsets = [128, 0], sizes = [128, 64], strides = [1, 1]} : vector<1152x64xbf16> to vector<128x64xbf16>
    %c1 = arith.constant 1 : index
    %c0_26 = arith.constant 0 : index
    %c0_27 = arith.constant 0 : index
    %44 = vector.load %arg7[%c1, %c0_26, %c0_27] : memref<9x64x128xbf16, #tpu.memory_space<vmem>>, vector<1x64x128xbf16>
    %45 = vector.shape_cast %44 : vector<1x64x128xbf16> to vector<64x128xbf16>
    %cst_28 = arith.constant dense<0.000000e+00> : vector<128x128xf32>
    %46 = tpu.matmul %43, %45, %cst_28 {dimension_numbers = #tpu.dot_dimension_numbers<[1], [0], [0], [1], [0, 0, 1, 1], [], []>} : vector<128x64xbf16>, vector<64x128xbf16>, vector<128x128xf32> -> vector<128x128xf32>
    %47 = arith.addf %42, %46 : vector<128x128xf32>
    %48 = vector.extract_strided_slice %36 {offsets = [256, 0], sizes = [128, 64], strides = [1, 1]} : vector<1152x64xbf16> to vector<128x64xbf16>
    %c2 = arith.constant 2 : index
    %c0_29 = arith.constant 0 : index
    %c0_30 = arith.constant 0 : index
    %49 = vector.load %arg7[%c2, %c0_29, %c0_30] : memref<9x64x128xbf16, #tpu.memory_space<vmem>>, vector<1x64x128xbf16>
    %50 = vector.shape_cast %49 : vector<1x64x128xbf16> to vector<64x128xbf16>
    %cst_31 = arith.constant dense<0.000000e+00> : vector<128x128xf32>
    %51 = tpu.matmul %48, %50, %cst_31 {dimension_numbers = #tpu.dot_dimension_numbers<[1], [0], [0], [1], [0, 0, 1, 1], [], []>} : vector<128x64xbf16>, vector<64x128xbf16>, vector<128x128xf32> -> vector<128x128xf32>
    %52 = arith.addf %47, %51 : vector<128x128xf32>
    %53 = vector.extract_strided_slice %36 {offsets = [384, 0], sizes = [128, 64], strides = [1, 1]} : vector<1152x64xbf16> to vector<128x64xbf16>
    %c3 = arith.constant 3 : index
    %c0_32 = arith.constant 0 : index
    %c0_33 = arith.constant 0 : index
    %54 = vector.load %arg7[%c3, %c0_32, %c0_33] : memref<9x64x128xbf16, #tpu.memory_space<vmem>>, vector<1x64x128xbf16>
    %55 = vector.shape_cast %54 : vector<1x64x128xbf16> to vector<64x128xbf16>
    %cst_34 = arith.constant dense<0.000000e+00> : vector<128x128xf32>
    %56 = tpu.matmul %53, %55, %cst_34 {dimension_numbers = #tpu.dot_dimension_numbers<[1], [0], [0], [1], [0, 0, 1, 1], [], []>} : vector<128x64xbf16>, vector<64x128xbf16>, vector<128x128xf32> -> vector<128x128xf32>
    %57 = arith.addf %52, %56 : vector<128x128xf32>
    %58 = vector.extract_strided_slice %36 {offsets = [512, 0], sizes = [128, 64], strides = [1, 1]} : vector<1152x64xbf16> to vector<128x64xbf16>
    %c4 = arith.constant 4 : index
    %c0_35 = arith.constant 0 : index
    %c0_36 = arith.constant 0 : index
    %59 = vector.load %arg7[%c4, %c0_35, %c0_36] : memref<9x64x128xbf16, #tpu.memory_space<vmem>>, vector<1x64x128xbf16>
    %60 = vector.shape_cast %59 : vector<1x64x128xbf16> to vector<64x128xbf16>
    %cst_37 = arith.constant dense<0.000000e+00> : vector<128x128xf32>
    %61 = tpu.matmul %58, %60, %cst_37 {dimension_numbers = #tpu.dot_dimension_numbers<[1], [0], [0], [1], [0, 0, 1, 1], [], []>} : vector<128x64xbf16>, vector<64x128xbf16>, vector<128x128xf32> -> vector<128x128xf32>
    %62 = arith.addf %57, %61 : vector<128x128xf32>
    %63 = vector.extract_strided_slice %36 {offsets = [640, 0], sizes = [128, 64], strides = [1, 1]} : vector<1152x64xbf16> to vector<128x64xbf16>
    %c5 = arith.constant 5 : index
    %c0_38 = arith.constant 0 : index
    %c0_39 = arith.constant 0 : index
    %64 = vector.load %arg7[%c5, %c0_38, %c0_39] : memref<9x64x128xbf16, #tpu.memory_space<vmem>>, vector<1x64x128xbf16>
    %65 = vector.shape_cast %64 : vector<1x64x128xbf16> to vector<64x128xbf16>
    %cst_40 = arith.constant dense<0.000000e+00> : vector<128x128xf32>
    %66 = tpu.matmul %63, %65, %cst_40 {dimension_numbers = #tpu.dot_dimension_numbers<[1], [0], [0], [1], [0, 0, 1, 1], [], []>} : vector<128x64xbf16>, vector<64x128xbf16>, vector<128x128xf32> -> vector<128x128xf32>
    %67 = arith.addf %62, %66 : vector<128x128xf32>
    %68 = vector.extract_strided_slice %36 {offsets = [768, 0], sizes = [128, 64], strides = [1, 1]} : vector<1152x64xbf16> to vector<128x64xbf16>
    %c6 = arith.constant 6 : index
    %c0_41 = arith.constant 0 : index
    %c0_42 = arith.constant 0 : index
    %69 = vector.load %arg7[%c6, %c0_41, %c0_42] : memref<9x64x128xbf16, #tpu.memory_space<vmem>>, vector<1x64x128xbf16>
    %70 = vector.shape_cast %69 : vector<1x64x128xbf16> to vector<64x128xbf16>
    %cst_43 = arith.constant dense<0.000000e+00> : vector<128x128xf32>
    %71 = tpu.matmul %68, %70, %cst_43 {dimension_numbers = #tpu.dot_dimension_numbers<[1], [0], [0], [1], [0, 0, 1, 1], [], []>} : vector<128x64xbf16>, vector<64x128xbf16>, vector<128x128xf32> -> vector<128x128xf32>
    %72 = arith.addf %67, %71 : vector<128x128xf32>
    %73 = vector.extract_strided_slice %36 {offsets = [896, 0], sizes = [128, 64], strides = [1, 1]} : vector<1152x64xbf16> to vector<128x64xbf16>
    %c7 = arith.constant 7 : index
    %c0_44 = arith.constant 0 : index
    %c0_45 = arith.constant 0 : index
    %74 = vector.load %arg7[%c7, %c0_44, %c0_45] : memref<9x64x128xbf16, #tpu.memory_space<vmem>>, vector<1x64x128xbf16>
    %75 = vector.shape_cast %74 : vector<1x64x128xbf16> to vector<64x128xbf16>
    %cst_46 = arith.constant dense<0.000000e+00> : vector<128x128xf32>
    %76 = tpu.matmul %73, %75, %cst_46 {dimension_numbers = #tpu.dot_dimension_numbers<[1], [0], [0], [1], [0, 0, 1, 1], [], []>} : vector<128x64xbf16>, vector<64x128xbf16>, vector<128x128xf32> -> vector<128x128xf32>
    %77 = arith.addf %72, %76 : vector<128x128xf32>
    %78 = vector.extract_strided_slice %36 {offsets = [1024, 0], sizes = [128, 64], strides = [1, 1]} : vector<1152x64xbf16> to vector<128x64xbf16>
    %c8 = arith.constant 8 : index
    %c0_47 = arith.constant 0 : index
    %c0_48 = arith.constant 0 : index
    %79 = vector.load %arg7[%c8, %c0_47, %c0_48] : memref<9x64x128xbf16, #tpu.memory_space<vmem>>, vector<1x64x128xbf16>
    %80 = vector.shape_cast %79 : vector<1x64x128xbf16> to vector<64x128xbf16>
    %cst_49 = arith.constant dense<0.000000e+00> : vector<128x128xf32>
    %81 = tpu.matmul %78, %80, %cst_49 {dimension_numbers = #tpu.dot_dimension_numbers<[1], [0], [0], [1], [0, 0, 1, 1], [], []>} : vector<128x64xbf16>, vector<64x128xbf16>, vector<128x128xf32> -> vector<128x128xf32>
    %82 = arith.addf %77, %81 : vector<128x128xf32>
    %c0_50 = arith.constant 0 : index
    %c0_51 = arith.constant 0 : index
    %83 = vector.load %arg10[%c0_50, %c0_51] : memref<128x128xf32, #tpu.memory_space<vmem>>, vector<128x128xf32>
    %c0_52 = arith.constant 0 : index
    %c0_53 = arith.constant 0 : index
    %84 = vector.load %arg8[%c0_52, %c0_53] : memref<1x128xf32, #tpu.memory_space<vmem>>, vector<1x128xf32>
    %c0_54 = arith.constant 0 : index
    %c0_55 = arith.constant 0 : index
    %85 = vector.load %arg9[%c0_54, %c0_55] : memref<1x128xf32, #tpu.memory_space<vmem>>, vector<1x128xf32>
    %cst_56 = arith.constant dense<0.000000e+00> : vector<128xf32>
    %86 = vector.multi_reduction <add>, %82, %cst_56 [0] : vector<128x128xf32> to vector<128xf32>
    %87 = vector.shape_cast %86 : vector<128xf32> to vector<1x128xf32>
    %88 = arith.mulf %82, %82 : vector<128x128xf32>
    %cst_57 = arith.constant dense<0.000000e+00> : vector<128xf32>
    %89 = vector.multi_reduction <add>, %88, %cst_57 [0] : vector<128x128xf32> to vector<128xf32>
    %90 = vector.shape_cast %89 : vector<128xf32> to vector<1x128xf32>
    %cst_58 = arith.constant dense<0.000000e+00> : vector<1x128xf32>
    %91 = tpu.matmul %87, %83, %cst_58 {dimension_numbers = #tpu.dot_dimension_numbers<[1], [0], [0], [1], [0, 0, 1, 1], [], []>} : vector<1x128xf32>, vector<128x128xf32>, vector<1x128xf32> -> vector<1x128xf32>
    %cst_59 = arith.constant dense<0.000000e+00> : vector<1x128xf32>
    %92 = tpu.matmul %90, %83, %cst_59 {dimension_numbers = #tpu.dot_dimension_numbers<[1], [0], [0], [1], [0, 0, 1, 1], [], []>} : vector<1x128xf32>, vector<128x128xf32>, vector<1x128xf32> -> vector<1x128xf32>
    %cst_60 = arith.constant 9.765625E-4 : f32
    %93 = vector.broadcast %cst_60 : f32 to vector<1x128xf32>
    %94 = arith.mulf %91, %93 : vector<1x128xf32>
    %cst_61 = arith.constant 9.765625E-4 : f32
    %95 = vector.broadcast %cst_61 : f32 to vector<1x128xf32>
    %96 = arith.mulf %92, %95 : vector<1x128xf32>
    %97 = arith.mulf %94, %94 : vector<1x128xf32>
    %98 = arith.subf %96, %97 : vector<1x128xf32>
    %cst_62 = arith.constant 0.000000e+00 : f32
    %99 = vector.broadcast %cst_62 : f32 to vector<1x128xf32>
    %100 = arith.maximumf %98, %99 : vector<1x128xf32>
    %cst_63 = arith.constant 9.99999974E-6 : f32
    %101 = vector.broadcast %cst_63 : f32 to vector<1x128xf32>
    %102 = arith.addf %100, %101 : vector<1x128xf32>
    %103 = math.rsqrt %102 : vector<1x128xf32>
    %104 = arith.mulf %84, %103 : vector<1x128xf32>
    %105 = arith.mulf %94, %104 : vector<1x128xf32>
    %106 = arith.subf %85, %105 : vector<1x128xf32>
    %107 = vector.broadcast %104 : vector<1x128xf32> to vector<128x128xf32>
    %108 = arith.mulf %82, %107 : vector<128x128xf32>
    %109 = vector.broadcast %106 : vector<1x128xf32> to vector<128x128xf32>
    %110 = arith.addf %108, %109 : vector<128x128xf32>
    %cst_64 = arith.constant 0.000000e+00 : f32
    %111 = vector.broadcast %cst_64 : f32 to vector<128x128xf32>
    %112 = arith.maximumf %110, %111 : vector<128x128xf32>
    %c0_65 = arith.constant 0 : index
    %c0_66 = arith.constant 0 : index
    %113 = vector.load %arg11[%c0_65, %c0_66] : memref<128x128xf32, #tpu.memory_space<vmem>>, vector<128x128xf32>
    tpu.vector_store %arg11[%c0_65, %c0_66], %112 {strides = array<i32>} : memref<128x128xf32, #tpu.memory_space<vmem>>, vector<128x128xf32>,
    return
  }
  func.func @transform_0(%arg0: i32) -> (i32, i32) {
    %c0_i32 = arith.constant 0 : i32
    %c0_i32_0 = arith.constant 0 : i32
    %c0_i32_1 = arith.constant 0 : i32
    return %c0_i32, %c0_i32_0 : i32, i32
  }
  func.func @transform_1(%arg0: i32) -> (i32, i32) {
    %c0_i32 = arith.constant 0 : i32
    %c0_i32_0 = arith.constant 0 : i32
    %c0_i32_1 = arith.constant 0 : i32
    return %c0_i32, %c0_i32_0 : i32, i32
  }
  func.func @transform_2(%arg0: i32) -> (i32, i32) {
    %c0_i32 = arith.constant 0 : i32
    %c0_i32_0 = arith.constant 0 : i32
    %c0_i32_1 = arith.constant 0 : i32
    return %c0_i32, %c0_i32_0 : i32, i32
  }
  func.func @transform_3(%arg0: i32) -> (i32, i32) {
    %c0_i32 = arith.constant 0 : i32
    %c0_i32_0 = arith.constant 0 : i32
    %c0_i32_1 = arith.constant 0 : i32
    return %c0_i32, %c0_i32_0 : i32, i32
  }
  func.func @transform_4(%arg0: i32) -> (i32, i32) {
    %c0_i32 = arith.constant 0 : i32
    %c0_i32_0 = arith.constant 0 : i32
    %c0_i32_1 = arith.constant 0 : i32
    return %c0_i32, %c0_i32_0 : i32, i32
  }
  func.func @transform_5(%arg0: i32) -> (i32, i32) {
    %c0_i32 = arith.constant 0 : i32
    %c0_i32_0 = arith.constant 0 : i32
    %c0_i32_1 = arith.constant 0 : i32
    return %c0_i32, %c0_i32_0 : i32, i32
  }
  func.func @transform_6(%arg0: i32) -> (i32, i32, i32) {
    %c0_i32 = arith.constant 0 : i32
    %c0_i32_0 = arith.constant 0 : i32
    %c0_i32_1 = arith.constant 0 : i32
    %c0_i32_2 = arith.constant 0 : i32
    return %c0_i32, %c0_i32_0, %c0_i32_1 : i32, i32, i32
  }
  func.func @transform_7(%arg0: i32) -> (i32, i32) {
    %c0_i32 = arith.constant 0 : i32
    %c0_i32_0 = arith.constant 0 : i32
    %c0_i32_1 = arith.constant 0 : i32
    return %c0_i32, %c0_i32_0 : i32, i32
  }
  func.func @transform_8(%arg0: i32) -> (i32, i32) {
    %c0_i32 = arith.constant 0 : i32
    %c0_i32_0 = arith.constant 0 : i32
    %c0_i32_1 = arith.constant 0 : i32
    return %c0_i32, %c0_i32_0 : i32, i32
  }
  func.func @transform_9(%arg0: i32) -> (i32, i32) {
    %c0_i32 = arith.constant 0 : i32
    %c0_i32_0 = arith.constant 0 : i32
    %c0_i32_1 = arith.constant 0 : i32
    return %c0_i32, %c0_i32_0 : i32, i32
  }
  func.func @transform_10(%arg0: i32) -> (i32, i32) {
    %c0_i32 = arith.constant 0 : i32
    %c0_i32_0 = arith.constant 0 : i32
    %c0_i32_1 = arith.constant 0 : i32
    return %c0_i32, %c0_i32_0 : i32, i32
  }
}

</mosaic_0001>

<llo_original>
// kernel: bottle_conv_resnet_block.1
$region0: #{bottle_conv_resnet_block.1}
  #allocation0 [shape = 'u32[]', space=smem, size = 0x4, offset = 0x4, fixed_abs, tag = 'smem constant byte address 0x4 - core index']
  #allocation1 [shape = 'u32[144,128]{1,0:T(1,128)}', space=vmem, size = 0x12000, scoped, tag = 'internal scratch']
  %s0 = inlined_call_operand.vmem [shape: bf16[128,648], index: 0, kind: input, shape index: {}]
  %s1 = inlined_call_operand.vmem [shape: bf16[648,64], index: 1, kind: input, shape index: {}]
  %s2 = inlined_call_operand.vmem [shape: f32[1,64], index: 2, kind: input, shape index: {}]
  %s3 = inlined_call_operand.vmem [shape: f32[1,64], index: 3, kind: input, shape index: {}]
  %s4 = inlined_call_operand.vmem [shape: f32[64,64], index: 4, kind: input, shape index: {}]
  %s5 = inlined_call_operand.vmem [shape: bf16[1152,128], index: 5, kind: input, shape index: {}]
  %s6 = inlined_call_operand.vmem [shape: bf16[9,64,128], index: 6, kind: input, shape index: {}]
  %s7 = inlined_call_operand.vmem [shape: f32[1,128], index: 7, kind: input, shape index: {}]
  %s8 = inlined_call_operand.vmem [shape: f32[1,128], index: 8, kind: input, shape index: {}]
  %s9 = inlined_call_operand.vmem [shape: f32[128,128], index: 9, kind: input, shape index: {}]
  %s10 = inlined_call_operand.vmem [shape: f32[128,128], index: 10, kind: output, shape index: {}]
  %s11 = sld [smem:[#allocation0]]
  $region50: #{bottle_conv_resnet_block.1} parent=0
    _
  %s13 = ssub.s32 1, %s11
  %s14 = scalar_select 0, %s13, %s11
  // Predicated region
  $region2: #{bottle_conv_resnet_block.1} parent=0 // pred_check
    _
  $region3: #{bottle_conv_resnet_block.1} parent=0 // pred_check_branch
    %16 = sbr.rel (0) target = $region5
  $region4: #{bottle_conv_resnet_block.1} parent=0 // pred_region
    _
  $region5: #{bottle_conv_resnet_block.1} parent=0 // pred_fallthru
    _
  // Predicated region
  $region6: #{bottle_conv_resnet_block.1} parent=0 // pred_check
    _
  $region7: #{bottle_conv_resnet_block.1} parent=0 // pred_check_branch
    %18 = sbr.rel (0) target = $region9
  $region8: #{bottle_conv_resnet_block.1} parent=0 // pred_region
    _
  $region9: #{bottle_conv_resnet_block.1} parent=0 // pred_fallthru
    _
  // Predicated region
  $region10: #{bottle_conv_resnet_block.1} parent=0 // pred_check
    _
  $region11: #{bottle_conv_resnet_block.1} parent=0 // pred_check_branch
    %20 = sbr.rel (0) target = $region13
  $region12: #{bottle_conv_resnet_block.1} parent=0 // pred_region
    _
  $region13: #{bottle_conv_resnet_block.1} parent=0 // pred_fallthru
    _
  // Predicated region
  $region14: #{bottle_conv_resnet_block.1} parent=0 // pred_check
    _
  $region15: #{bottle_conv_resnet_block.1} parent=0 // pred_check_branch
    %22 = sbr.rel (0) target = $region17
  $region16: #{bottle_conv_resnet_block.1} parent=0 // pred_region
    _
  $region17: #{bottle_conv_resnet_block.1} parent=0 // pred_fallthru
    _
  // Predicated region
  $region18: #{bottle_conv_resnet_block.1} parent=0 // pred_check
    _
  $region19: #{bottle_conv_resnet_block.1} parent=0 // pred_check_branch
    %24 = sbr.rel (0) target = $region21
  $region20: #{bottle_conv_resnet_block.1} parent=0 // pred_region
    _
  $region21: #{bottle_conv_resnet_block.1} parent=0 // pred_fallthru
    _
  // Predicated region
  $region22: #{bottle_conv_resnet_block.1} parent=0 // pred_check
    _
  $region23: #{bottle_conv_resnet_block.1} parent=0 // pred_check_branch
    %26 = sbr.rel (0) target = $region25
  $region24: #{bottle_conv_resnet_block.1} parent=0 // pred_region
    _
  $region25: #{bottle_conv_resnet_block.1} parent=0 // pred_fallthru
    _
  // Predicated region
  $region26: #{bottle_conv_resnet_block.1} parent=0 // pred_check
    _
  $region27: #{bottle_conv_resnet_block.1} parent=0 // pred_check_branch
    %28 = sbr.rel (0) target = $region29
  $region28: #{bottle_conv_resnet_block.1} parent=0 // pred_region
    _
  $region29: #{bottle_conv_resnet_block.1} parent=0 // pred_fallthru
    _
  // Predicated region
  $region30: #{bottle_conv_resnet_block.1} parent=0 // pred_check
    _
  $region31: #{bottle_conv_resnet_block.1} parent=0 // pred_check_branch
    %30 = sbr.rel (0) target = $region33
  $region32: #{bottle_conv_resnet_block.1} parent=0 // pred_region
    _
  $region33: #{bottle_conv_resnet_block.1} parent=0 // pred_fallthru
    _
  // Predicated region
  $region34: #{bottle_conv_resnet_block.1} parent=0 // pred_check
    _
  $region35: #{bottle_conv_resnet_block.1} parent=0 // pred_check_branch
    %32 = sbr.rel (0) target = $region37
  $region36: #{bottle_conv_resnet_block.1} parent=0 // pred_region
    _
  $region37: #{bottle_conv_resnet_block.1} parent=0 // pred_fallthru
    _
  // Predicated region
  $region38: #{bottle_conv_resnet_block.1} parent=0 // pred_check
    _
  $region39: #{bottle_conv_resnet_block.1} parent=0 // pred_check_branch
    %34 = sbr.rel (0) target = $region41
  $region40: #{bottle_conv_resnet_block.1} parent=0 // pred_region
    _
  $region41: #{bottle_conv_resnet_block.1} parent=0 // pred_fallthru
    _
  %v36 = vld [vmem:[%s0] sm:$0xff]
  %v37 = vld [vmem:[%s0 + $0x8] sm:$0xff]
  %v38 = vld [vmem:[%s0 + $0x10] sm:$0xff]
  %v39 = vld [vmem:[%s0 + $0x18] sm:$0xff]
  %v40 = vld [vmem:[%s0 + $0x20] sm:$0xff]
  %v41 = vld [vmem:[%s0 + $0x28] sm:$0xff]
  %v42 = vld [vmem:[%s0 + $0x30] sm:$0xff]
  %v43 = vld [vmem:[%s0 + $0x38] sm:$0xff]
  %v44 = vld [vmem:[%s0 + $0x40] sm:$0xff]
  %v45 = vld [vmem:[%s0 + $0x48] sm:$0xff]
  %v46 = vld [vmem:[%s0 + $0x50] sm:$0xff]
  %v47 = vld [vmem:[%s0 + $0x58] sm:$0xff]
  %v48 = vld [vmem:[%s0 + $0x60] sm:$0xff]
  %v49 = vld [vmem:[%s0 + $0x68] sm:$0xff]
  %v50 = vld [vmem:[%s0 + $0x70] sm:$0xff]
  %v51 = vld [vmem:[%s0 + $0x78] sm:$0xff]
  %v52 = vld [vmem:[%s0 + $0x80] sm:$0xff]
  %v53 = vld [vmem:[%s0 + $0x88] sm:$0xff]
  %v54 = vld [vmem:[%s0 + $0x90] sm:$0xff]
  %v55 = vld [vmem:[%s0 + $0x98] sm:$0xff]
  %v56 = vld [vmem:[%s0 + $0xa0] sm:$0xff]
  %v57 = vld [vmem:[%s0 + $0xa8] sm:$0xff]
  %v58 = vld [vmem:[%s0 + $0xb0] sm:$0xff]
  %v59 = vld [vmem:[%s0 + $0xb8] sm:$0xff]
  %v60 = vld [vmem:[%s0 + $0xc0] sm:$0xff]
  %v61 = vld [vmem:[%s0 + $0xc8] sm:$0xff]
  %v62 = vld [vmem:[%s0 + $0xd0] sm:$0xff]
  %v63 = vld [vmem:[%s0 + $0xd8] sm:$0xff]
  %v64 = vld [vmem:[%s0 + $0xe0] sm:$0xff]
  %v65 = vld [vmem:[%s0 + $0xe8] sm:$0xff]
  %v66 = vld [vmem:[%s0 + $0xf0] sm:$0xff]
  %v67 = vld [vmem:[%s0 + $0xf8] sm:$0xff]
  %v68 = vld [vmem:[%s0 + $0x100] sm:$0xff]
  %v69 = vld [vmem:[%s0 + $0x108] sm:$0xff]
  %v70 = vld [vmem:[%s0 + $0x110] sm:$0xff]
  %v71 = vld [vmem:[%s0 + $0x118] sm:$0xff]
  %v72 = vld [vmem:[%s0 + $0x120] sm:$0xff]
  %v73 = vld [vmem:[%s0 + $0x128] sm:$0xff]
  %v74 = vld [vmem:[%s0 + $0x130] sm:$0xff]
  %v75 = vld [vmem:[%s0 + $0x138] sm:$0xff]
  %v76 = vld [vmem:[%s0 + $0x140] sm:$0xff]
  %v77 = vld [vmem:[%s0 + $0x148] sm:$0xff]
  %v78 = vld [vmem:[%s0 + $0x150] sm:$0xff]
  %v79 = vld [vmem:[%s0 + $0x158] sm:$0xff]
  %v80 = vld [vmem:[%s0 + $0x160] sm:$0xff]
  %v81 = vld [vmem:[%s0 + $0x168] sm:$0xff]
  %v82 = vld [vmem:[%s0 + $0x170] sm:$0xff]
  %v83 = vld [vmem:[%s0 + $0x178] sm:$0xff]
  %v84 = vld [vmem:[%s1] sm:$0xf]
  %v85 = vld [vmem:[%s1 + $0x4] sm:$0xf]
  %v86 = vld [vmem:[%s1 + $0x8] sm:$0xf]
  %v87 = vld [vmem:[%s1 + $0xc] sm:$0xf]
  %v88 = vld [vmem:[%s1 + $0x10] sm:$0xf]
  %v89 = vld [vmem:[%s1 + $0x14] sm:$0xf]
  %v90 = vld [vmem:[%s1 + $0x18] sm:$0xf]
  %v91 = vld [vmem:[%s1 + $0x1c] sm:$0xf]
  %v92 = vld [vmem:[%s1 + $0x20] sm:$0xf]
  %v93 = vld [vmem:[%s1 + $0x24] sm:$0xf]
  %v94 = vld [vmem:[%s1 + $0x28] sm:$0xf]
  %v95 = vld [vmem:[%s1 + $0x2c] sm:$0xf]
  %v96 = vld [vmem:[%s1 + $0x30] sm:$0xf]
  %v97 = vld [vmem:[%s1 + $0x34] sm:$0xf]
  %v98 = vld [vmem:[%s1 + $0x38] sm:$0xf]
  %v99 = vld [vmem:[%s1 + $0x3c] sm:$0xf]
  %v100 = vld [vmem:[%s1 + $0x40] sm:$0xf]
  %v101 = vld [vmem:[%s1 + $0x44] sm:$0xf]
  %v102 = vld [vmem:[%s1 + $0x48] sm:$0xf]
  %v103 = vld [vmem:[%s1 + $0x4c] sm:$0xf]
  %v104 = vld [vmem:[%s1 + $0x50] sm:$0xf]
  %v105 = vld [vmem:[%s1 + $0x54] sm:$0xf]
  %v106 = vld [vmem:[%s1 + $0x58] sm:$0xf]
  %v107 = vld [vmem:[%s1 + $0x5c] sm:$0xf]
  %v108 = vld [vmem:[%s1 + $0x60] sm:$0xf]
  %v109 = vld [vmem:[%s1 + $0x64] sm:$0xf]
  %v110 = vld [vmem:[%s1 + $0x68] sm:$0xf]
  %v111 = vld [vmem:[%s1 + $0x6c] sm:$0xf]
  %v112 = vld [vmem:[%s1 + $0x70] sm:$0xf]
  %v113 = vld [vmem:[%s1 + $0x74] sm:$0xf]
  %v114 = vld [vmem:[%s1 + $0x78] sm:$0xf]
  %v115 = vld [vmem:[%s1 + $0x7c] sm:$0xf]
  %v116 = vld [vmem:[%s1 + $0x80] sm:$0xf]
  %v117 = vld [vmem:[%s1 + $0x84] sm:$0xf]
  %v118 = vld [vmem:[%s1 + $0x88] sm:$0xf]
  %v119 = vld [vmem:[%s1 + $0x8c] sm:$0xf]
  %v120 = vld [vmem:[%s1 + $0x90] sm:$0xf]
  %v121 = vld [vmem:[%s1 + $0x94] sm:$0xf]
  %v122 = vld [vmem:[%s1 + $0x98] sm:$0xf]
  %v123 = vld [vmem:[%s1 + $0x9c] sm:$0xf]
  %v124 = vld [vmem:[%s1 + $0xa0] sm:$0xf]
  %v125 = vld [vmem:[%s1 + $0xa4] sm:$0xf]
  %v126 = vld [vmem:[%s1 + $0xa8] sm:$0xf]
  %v127 = vld [vmem:[%s1 + $0xac] sm:$0xf]
  %v128 = vld [vmem:[%s1 + $0xb0] sm:$0xf]
  %v129 = vld [vmem:[%s1 + $0xb4] sm:$0xf]
  %v130 = vld [vmem:[%s1 + $0xb8] sm:$0xf]
  %v131 = vld [vmem:[%s1 + $0xbc] sm:$0xf]
  %v132 = vld [vmem:[%s1 + $0xc0] sm:$0xf]
  %v133 = vld [vmem:[%s1 + $0xc4] sm:$0xf]
  %v134 = vld [vmem:[%s1 + $0xc8] sm:$0xf]
  %v135 = vld [vmem:[%s1 + $0xcc] sm:$0xf]
  %v136 = vld [vmem:[%s1 + $0xd0] sm:$0xf]
  %v137 = vld [vmem:[%s1 + $0xd4] sm:$0xf]
  %v138 = vld [vmem:[%s1 + $0xd8] sm:$0xf]
  %v139 = vld [vmem:[%s1 + $0xdc] sm:$0xf]
  %v140 = vld [vmem:[%s1 + $0xe0] sm:$0xf]
  %v141 = vld [vmem:[%s1 + $0xe4] sm:$0xf]
  %v142 = vld [vmem:[%s1 + $0xe8] sm:$0xf]
  %v143 = vld [vmem:[%s1 + $0xec] sm:$0xf]
  %v144 = vld [vmem:[%s1 + $0xf0] sm:$0xf]
  %v145 = vld [vmem:[%s1 + $0xf4] sm:$0xf]
  %v146 = vld [vmem:[%s1 + $0xf8] sm:$0xf]
  %v147 = vld [vmem:[%s1 + $0xfc] sm:$0xf]
  %v148 = vld [vmem:[%s1 + $0x100] sm:$0xf]
  %v149 = vld [vmem:[%s1 + $0x104] sm:$0xf]
  %v150 = vld [vmem:[%s1 + $0x108] sm:$0xf]
  %v151 = vld [vmem:[%s1 + $0x10c] sm:$0xf]
  %v152 = vld [vmem:[%s1 + $0x110] sm:$0xf]
  %v153 = vld [vmem:[%s1 + $0x114] sm:$0xf]
  %v154 = vld [vmem:[%s1 + $0x118] sm:$0xf]
  %v155 = vld [vmem:[%s1 + $0x11c] sm:$0xf]
  %v156 = vld [vmem:[%s1 + $0x120] sm:$0xf]
  %v157 = vld [vmem:[%s1 + $0x124] sm:$0xf]
  %v158 = vld [vmem:[%s1 + $0x128] sm:$0xf]
  %v159 = vld [vmem:[%s1 + $0x12c] sm:$0xf]
  %v160 = vld [vmem:[%s1 + $0x130] sm:$0xf]
  %v161 = vld [vmem:[%s1 + $0x134] sm:$0xf]
  %v162 = vld [vmem:[%s1 + $0x138] sm:$0xf]
  %v163 = vld [vmem:[%s1 + $0x13c] sm:$0xf]
  %v164 = vld [vmem:[%s1 + $0x140] sm:$0xf]
  %v213 = vunpack.c.l.b16 %v36
  %v214 = vunpack.c.h.b16 %v36
  %v215 = vunpack.c.l.b16 %v37
  %v216 = vunpack.c.h.b16 %v37
  %v217 = vunpack.c.l.b16 %v38
  %v218 = vunpack.c.h.b16 %v38
  %v219 = vunpack.c.l.b16 %v39
  %v220 = vunpack.c.h.b16 %v39
  %v221 = vunpack.c.l.b16 %v40
  %v222 = vunpack.c.h.b16 %v40
  %v223 = vunpack.c.l.b16 %v41
  %v224 = vunpack.c.h.b16 %v41
  %v225 = vunpack.c.l.b16 %v42
  %v226 = vunpack.c.h.b16 %v42
  %v227 = vunpack.c.l.b16 %v43
  %v228 = vunpack.c.h.b16 %v43
  %v229 = vunpack.c.l.b16 %v44
  %v230 = vunpack.c.h.b16 %v44
  %v231 = vunpack.c.l.b16 %v45
  %v232 = vunpack.c.h.b16 %v45
  %v233 = vunpack.c.l.b16 %v46
  %v234 = vunpack.c.h.b16 %v46
  %v235 = vunpack.c.l.b16 %v47
  %v236 = vunpack.c.h.b16 %v47
  %v237 = vunpack.c.l.b16 %v48
  %v238 = vunpack.c.h.b16 %v48
  %v239 = vunpack.c.l.b16 %v49
  %v240 = vunpack.c.h.b16 %v49
  %v241 = vunpack.c.l.b16 %v50
  %v242 = vunpack.c.h.b16 %v50
  %v243 = vunpack.c.l.b16 %v51
  %v244 = vunpack.c.h.b16 %v51
  %v245 = vunpack.c.l.b16 %v52
  %v246 = vunpack.c.h.b16 %v52
  %v247 = vunpack.c.l.b16 %v53
  %v248 = vunpack.c.h.b16 %v53
  %v249 = vunpack.c.l.b16 %v54
  %v250 = vunpack.c.h.b16 %v54
  %v251 = vunpack.c.l.b16 %v55
  %v252 = vunpack.c.h.b16 %v55
  %v253 = vunpack.c.l.b16 %v56
  %v254 = vunpack.c.h.b16 %v56
  %v255 = vunpack.c.l.b16 %v57
  %v256 = vunpack.c.h.b16 %v57
  %v257 = vunpack.c.l.b16 %v58
  %v258 = vunpack.c.h.b16 %v58
  %v259 = vunpack.c.l.b16 %v59
  %v260 = vunpack.c.h.b16 %v59
  %v261 = vunpack.c.l.b16 %v60
  %v262 = vunpack.c.h.b16 %v60
  %v263 = vunpack.c.l.b16 %v61
  %v264 = vunpack.c.h.b16 %v61
  %v265 = vunpack.c.l.b16 %v62
  %v266 = vunpack.c.h.b16 %v62
  %v267 = vunpack.c.l.b16 %v63
  %v268 = vunpack.c.h.b16 %v63
  %v269 = vunpack.c.l.b16 %v64
  %v270 = vunpack.c.h.b16 %v64
  %v271 = vunpack.c.l.b16 %v65
  %v272 = vunpack.c.h.b16 %v65
  %v273 = vunpack.c.l.b16 %v66
  %v274 = vunpack.c.h.b16 %v66
  %v275 = vunpack.c.l.b16 %v67
  %v276 = vunpack.c.h.b16 %v67
  %v277 = vunpack.c.l.b16 %v68
  %v278 = vunpack.c.h.b16 %v68
  %v279 = vunpack.c.l.b16 %v69
  %v280 = vunpack.c.h.b16 %v69
  %v281 = vunpack.c.l.b16 %v70
  %v282 = vunpack.c.h.b16 %v70
  %v283 = vunpack.c.l.b16 %v71
  %v284 = vunpack.c.h.b16 %v71
  %v285 = vunpack.c.l.b16 %v72
  %v286 = vunpack.c.h.b16 %v72
  %v287 = vunpack.c.l.b16 %v73
  %v288 = vunpack.c.h.b16 %v73
  %v289 = vunpack.c.l.b16 %v74
  %v290 = vunpack.c.h.b16 %v74
  %v291 = vunpack.c.l.b16 %v75
  %v292 = vunpack.c.h.b16 %v75
  %v293 = vunpack.c.l.b16 %v76
  %v294 = vunpack.c.h.b16 %v76
  %v295 = vunpack.c.l.b16 %v77
  %v296 = vunpack.c.h.b16 %v77
  %v297 = vunpack.c.l.b16 %v78
  %v298 = vunpack.c.h.b16 %v78
  %v299 = vunpack.c.l.b16 %v79
  %v300 = vunpack.c.h.b16 %v79
  %v301 = vunpack.c.l.b16 %v80
  %v302 = vunpack.c.h.b16 %v80
  %v303 = vunpack.c.l.b16 %v81
  %v304 = vunpack.c.h.b16 %v81
  %v305 = vunpack.c.l.b16 %v82
  %v306 = vunpack.c.h.b16 %v82
  %v307 = vunpack.c.l.b16 %v83
  %v308 = vunpack.c.h.b16 %v83
  %v309 = vpack.c.b16 %v219, %v213
  %v310 = vpack.c.b16 %v220, %v214
  %v311 = vpack.c.b16 %v221, %v215
  %v312 = vpack.c.b16 %v222, %v216
  %v313 = vpack.c.b16 %v223, %v217
  %v314 = vpack.c.b16 %v224, %v218
  %v315 = vpack.c.b16 %v231, %v225
  %v316 = vpack.c.b16 %v232, %v226
  %v317 = vpack.c.b16 %v233, %v227
  %v318 = vpack.c.b16 %v234, %v228
  %v319 = vpack.c.b16 %v235, %v229
  %v320 = vpack.c.b16 %v236, %v230
  %v321 = vpack.c.b16 %v243, %v237
  %v322 = vpack.c.b16 %v244, %v238
  %v323 = vpack.c.b16 %v245, %v239
  %v324 = vpack.c.b16 %v246, %v240
  %v325 = vpack.c.b16 %v247, %v241
  %v326 = vpack.c.b16 %v248, %v242
  %v327 = vpack.c.b16 %v255, %v249
  %v328 = vpack.c.b16 %v256, %v250
  %v329 = vpack.c.b16 %v257, %v251
  %v330 = vpack.c.b16 %v258, %v252
  %v331 = vpack.c.b16 %v259, %v253
  %v332 = vpack.c.b16 %v260, %v254
  %v333 = vpack.c.b16 %v267, %v261
  %v334 = vpack.c.b16 %v268, %v262
  %v335 = vpack.c.b16 %v269, %v263
  %v336 = vpack.c.b16 %v270, %v264
  %v337 = vpack.c.b16 %v271, %v265
  %v338 = vpack.c.b16 %v272, %v266
  %v339 = vpack.c.b16 %v279, %v273
  %v340 = vpack.c.b16 %v280, %v274
  %v341 = vpack.c.b16 %v281, %v275
  %v342 = vpack.c.b16 %v282, %v276
  %v343 = vpack.c.b16 %v283, %v277
  %v344 = vpack.c.b16 %v284, %v278
  %v345 = vpack.c.b16 %v291, %v285
  %v346 = vpack.c.b16 %v292, %v286
  %v347 = vpack.c.b16 %v293, %v287
  %v348 = vpack.c.b16 %v294, %v288
  %v349 = vpack.c.b16 %v295, %v289
  %v350 = vpack.c.b16 %v296, %v290
  %v351 = vpack.c.b16 %v303, %v297
  %v352 = vpack.c.b16 %v304, %v298
  %v353 = vpack.c.b16 %v305, %v299
  %v354 = vpack.c.b16 %v306, %v300
  %v355 = vpack.c.b16 %v307, %v301
  %v356 = vpack.c.b16 %v308, %v302
  %v478 = vunpack.c.l.b16 %v84
  %v479 = vunpack.c.l.b16 %v85
  %v480 = vunpack.c.l.b16 %v86
  %v481 = vunpack.c.l.b16 %v87
  %v482 = vunpack.c.l.b16 %v88
  %v483 = vunpack.c.l.b16 %v89
  %v484 = vunpack.c.l.b16 %v90
  %v485 = vunpack.c.l.b16 %v91
  %v486 = vunpack.c.l.b16 %v92
  %v487 = vunpack.c.l.b16 %v93
  %v488 = vunpack.c.l.b16 %v94
  %v489 = vunpack.c.l.b16 %v95
  %v490 = vunpack.c.l.b16 %v96
  %v491 = vunpack.c.l.b16 %v97
  %v492 = vunpack.c.l.b16 %v98
  %v493 = vunpack.c.l.b16 %v99
  %v494 = vunpack.c.l.b16 %v100
  %v495 = vunpack.c.l.b16 %v101
  %v496 = vunpack.c.l.b16 %v102
  %v497 = vunpack.c.l.b16 %v103
  %v498 = vunpack.c.l.b16 %v104
  %v499 = vunpack.c.l.b16 %v105
  %v500 = vunpack.c.l.b16 %v106
  %v501 = vunpack.c.l.b16 %v107
  %v502 = vunpack.c.l.b16 %v108
  %v503 = vunpack.c.l.b16 %v109
  %v504 = vunpack.c.l.b16 %v110
  %v505 = vunpack.c.l.b16 %v111
  %v506 = vunpack.c.l.b16 %v112
  %v507 = vunpack.c.l.b16 %v113
  %v508 = vunpack.c.l.b16 %v114
  %v509 = vunpack.c.l.b16 %v115
  %v510 = vunpack.c.l.b16 %v116
  %v511 = vunpack.c.l.b16 %v117
  %v512 = vunpack.c.l.b16 %v118
  %v513 = vunpack.c.l.b16 %v119
  %v514 = vunpack.c.l.b16 %v120
  %v515 = vunpack.c.l.b16 %v121
  %v516 = vunpack.c.l.b16 %v122
  %v517 = vunpack.c.l.b16 %v123
  %v518 = vunpack.c.l.b16 %v124
  %v519 = vunpack.c.l.b16 %v125
  %v520 = vunpack.c.l.b16 %v126
  %v521 = vunpack.c.l.b16 %v127
  %v522 = vunpack.c.l.b16 %v128
  %v523 = vunpack.c.l.b16 %v129
  %v524 = vunpack.c.l.b16 %v130
  %v525 = vunpack.c.l.b16 %v131
  %v526 = vunpack.c.l.b16 %v132
  %v527 = vunpack.c.l.b16 %v133
  %v528 = vunpack.c.l.b16 %v134
  %v529 = vunpack.c.l.b16 %v135
  %v530 = vunpack.c.l.b16 %v136
  %v531 = vunpack.c.l.b16 %v137
  %v532 = vunpack.c.l.b16 %v138
  %v533 = vunpack.c.l.b16 %v139
  %v534 = vunpack.c.l.b16 %v140
  %v535 = vunpack.c.l.b16 %v141
  %v536 = vunpack.c.l.b16 %v142
  %v537 = vunpack.c.l.b16 %v143
  %v538 = vunpack.c.l.b16 %v144
  %v539 = vunpack.c.l.b16 %v145
  %v540 = vunpack.c.l.b16 %v146
  %v541 = vunpack.c.l.b16 %v147
  %v542 = vunpack.c.l.b16 %v148
  %v543 = vunpack.c.l.b16 %v149
  %v544 = vunpack.c.l.b16 %v150
  %v545 = vunpack.c.l.b16 %v151
  %v546 = vunpack.c.l.b16 %v152
  %v547 = vunpack.c.l.b16 %v153
  %v548 = vunpack.c.l.b16 %v154
  %v549 = vunpack.c.l.b16 %v155
  %v550 = vunpack.c.l.b16 %v156
  %v551 = vunpack.c.l.b16 %v157
  %v552 = vunpack.c.l.b16 %v158
  %v553 = vunpack.c.l.b16 %v159
  %v554 = vunpack.c.l.b16 %v160
  %v555 = vunpack.c.l.b16 %v161
  %v556 = vunpack.c.l.b16 %v162
  %v557 = vunpack.c.l.b16 %v163
  %v558 = vunpack.c.l.b16 %v164
  %v559 = vpack.c.b16 %v479, %v478
  %v560 = vpack.c.b16 %v481, %v480
  %v561 = vpack.c.b16 %v483, %v482
  %v562 = vpack.c.b16 %v485, %v484
  %v563 = vpack.c.b16 %v487, %v486
  %v564 = vpack.c.b16 %v489, %v488
  %v565 = vpack.c.b16 %v491, %v490
  %v566 = vpack.c.b16 %v493, %v492
  %v567 = vpack.c.b16 %v495, %v494
  %v568 = vpack.c.b16 %v497, %v496
  %v569 = vpack.c.b16 %v499, %v498
  %v570 = vpack.c.b16 %v501, %v500
  %v571 = vpack.c.b16 %v503, %v502
  %v572 = vpack.c.b16 %v505, %v504
  %v573 = vpack.c.b16 %v507, %v506
  %v574 = vpack.c.b16 %v509, %v508
  %v575 = vpack.c.b16 %v511, %v510
  %v576 = vpack.c.b16 %v513, %v512
  %v577 = vpack.c.b16 %v515, %v514
  %v578 = vpack.c.b16 %v517, %v516
  %v579 = vpack.c.b16 %v519, %v518
  %v580 = vpack.c.b16 %v521, %v520
  %v581 = vpack.c.b16 %v523, %v522
  %v582 = vpack.c.b16 %v525, %v524
  %v583 = vpack.c.b16 %v527, %v526
  %v584 = vpack.c.b16 %v529, %v528
  %v585 = vpack.c.b16 %v531, %v530
  %v586 = vpack.c.b16 %v533, %v532
  %v587 = vpack.c.b16 %v535, %v534
  %v588 = vpack.c.b16 %v537, %v536
  %v589 = vpack.c.b16 %v539, %v538
  %v590 = vpack.c.b16 %v541, %v540
  %v591 = vpack.c.b16 %v543, %v542
  %v592 = vpack.c.b16 %v545, %v544
  %v593 = vpack.c.b16 %v547, %v546
  %v594 = vpack.c.b16 %v549, %v548
  %v595 = vpack.c.b16 %v551, %v550
  %v596 = vpack.c.b16 %v553, %v552
  %v597 = vpack.c.b16 %v555, %v554
  %v598 = vpack.c.b16 %v557, %v556
  %v599 = vpack.c.b16 %v558, %v558
  %vm640 = vcmask 64512
  %v642 = vsel %vm640, %v314, 0
  %v645 = vsel %vm640, %v320, 0
  %v648 = vsel %vm640, %v326, 0
  %v651 = vsel %vm640, %v332, 0
  %v654 = vsel %vm640, %v338, 0
  %v657 = vsel %vm640, %v344, 0
  %v660 = vsel %vm640, %v350, 0
  %v663 = vsel %vm640, %v356, 0
  %vm665 = vcmask 1043456
  %v667 = vsel %vm665, %v599, 0
  %669 = vmatprep.subr.bf16.mxu0 0
  %670 = vmatpush1.bf16.msra.mxu0 %v559
  %671 = vmatprep.subr.bf16.mxu0 0
  %672 = vmatpush1.bf16.msra.mxu0 %v560
  %673 = vmatprep.subr.bf16.mxu0 0
  %674 = vmatpush1.bf16.msra.mxu0 %v561
  %675 = vmatprep.subr.bf16.mxu0 0
  %676 = vmatpush1.bf16.msra.mxu0 %v562
  %677 = vmatprep.subr.bf16.mxu0 0
  %678 = vmatpush1.bf16.msra.mxu0 %v563
  %679 = vmatprep.subr.bf16.mxu0 0
  %680 = vmatpush1.bf16.msra.mxu0 %v564
  %681 = vmatprep.subr.bf16.mxu0 0
  %682 = vmatpush1.bf16.msra.mxu0 %v565
  %683 = vmatprep.subr.bf16.mxu0 0
  %684 = vmatpush1.bf16.msra.mxu0 %v566
  %685 = vmatprep.subr.bf16.mxu0 0
  %686 = vmatpush1.bf16.msra.mxu0 %v567
  %687 = vmatprep.subr.bf16.mxu0 0
  %688 = vmatpush1.bf16.msra.mxu0 %v568
  %689 = vmatprep.subr.bf16.mxu0 0
  %690 = vmatpush1.bf16.msra.mxu0 %v569
  %691 = vmatprep.subr.bf16.mxu0 0
  %692 = vmatpush1.bf16.msra.mxu0 %v570
  %693 = vmatprep.subr.bf16.mxu0 0
  %694 = vmatpush1.bf16.msra.mxu0 %v571
  %695 = vmatprep.subr.bf16.mxu0 0
  %696 = vmatpush1.bf16.msra.mxu0 %v572
  %697 = vmatprep.subr.bf16.mxu0 0
  %698 = vmatpush1.bf16.msra.mxu0 %v573
  %699 = vmatprep.subr.bf16.mxu0 0
  %700 = vmatpush1.bf16.msra.mxu0 %v574
  %701 = vmatprep.mubr.bf16.mxu0 %v310
  %702 = vmatmul.mubr.bf16.gmra.mrb[0].mxu0 %v309
  %v703 = vpop.f32.mrb[0].mxu0
  %v704 = vadd.f32 0.0, %v703
  %v705 = vpop.f32.mrb[0].mxu0
  %v706 = vpop.f32.mrb[0].mxu0
  %v707 = vadd.f32 0.0, %v706
  %v708 = vpop.f32.mrb[0].mxu0
  %709 = vmatprep.mubr.bf16.mxu0 %v316
  %710 = vmatmul.mubr.bf16.gmra.mrb[0].mxu0 %v315
  %v711 = vpop.f32.mrb[0].mxu0
  %v712 = vadd.f32 0.0, %v711
  %v713 = vpop.f32.mrb[0].mxu0
  %v714 = vpop.f32.mrb[0].mxu0
  %v715 = vadd.f32 0.0, %v714
  %v716 = vpop.f32.mrb[0].mxu0
  %717 = vmatprep.mubr.bf16.mxu0 %v322
  %718 = vmatmul.mubr.bf16.gmra.mrb[0].mxu0 %v321
  %v719 = vpop.f32.mrb[0].mxu0
  %v720 = vadd.f32 0.0, %v719
  %v721 = vpop.f32.mrb[0].mxu0
  %v722 = vpop.f32.mrb[0].mxu0
  %v723 = vadd.f32 0.0, %v722
  %v724 = vpop.f32.mrb[0].mxu0
  %725 = vmatprep.mubr.bf16.mxu0 %v328
  %726 = vmatmul.mubr.bf16.gmra.mrb[0].mxu0 %v327
  %v727 = vpop.f32.mrb[0].mxu0
  %v728 = vadd.f32 0.0, %v727
  %v729 = vpop.f32.mrb[0].mxu0
  %v730 = vpop.f32.mrb[0].mxu0
  %v731 = vadd.f32 0.0, %v730
  %v732 = vpop.f32.mrb[0].mxu0
  %733 = vmatprep.mubr.bf16.mxu0 %v334
  %734 = vmatmul.mubr.bf16.gmra.mrb[0].mxu0 %v333
  %v735 = vpop.f32.mrb[0].mxu0
  %v736 = vadd.f32 0.0, %v735
  %v737 = vpop.f32.mrb[0].mxu0
  %v738 = vpop.f32.mrb[0].mxu0
  %v739 = vadd.f32 0.0, %v738
  %v740 = vpop.f32.mrb[0].mxu0
  %741 = vmatprep.mubr.bf16.mxu0 %v340
  %742 = vmatmul.mubr.bf16.gmra.mrb[0].mxu0 %v339
  %v743 = vpop.f32.mrb[0].mxu0
  %v744 = vadd.f32 0.0, %v743
  %v745 = vpop.f32.mrb[0].mxu0
  %v746 = vpop.f32.mrb[0].mxu0
  %v747 = vadd.f32 0.0, %v746
  %v748 = vpop.f32.mrb[0].mxu0
  %749 = vmatprep.mubr.bf16.mxu0 %v346
  %750 = vmatmul.mubr.bf16.gmra.mrb[0].mxu0 %v345
  %v751 = vpop.f32.mrb[0].mxu0
  %v752 = vadd.f32 0.0, %v751
  %v753 = vpop.f32.mrb[0].mxu0
  %v754 = vpop.f32.mrb[0].mxu0
  %v755 = vadd.f32 0.0, %v754
  %v756 = vpop.f32.mrb[0].mxu0
  %757 = vmatprep.mubr.bf16.mxu0 %v352
  %758 = vmatmul.mubr.bf16.gmra.mrb[0].mxu0 %v351
  %v759 = vpop.f32.mrb[0].mxu0
  %v760 = vadd.f32 0.0, %v759
  %v761 = vpop.f32.mrb[0].mxu0
  %v762 = vpop.f32.mrb[0].mxu0
  %v763 = vadd.f32 0.0, %v762
  %v764 = vpop.f32.mrb[0].mxu0
  %765 = vdwg.mxu0
  %766 = vmatprep.subr.bf16.mxu0 0
  %767 = vmatpush1.bf16.msra.mxu0 %v575
  %768 = vmatprep.subr.bf16.mxu0 0
  %769 = vmatpush1.bf16.msra.mxu0 %v576
  %770 = vmatprep.subr.bf16.mxu0 0
  %771 = vmatpush1.bf16.msra.mxu0 %v577
  %772 = vmatprep.subr.bf16.mxu0 0
  %773 = vmatpush1.bf16.msra.mxu0 %v578
  %774 = vmatprep.subr.bf16.mxu0 0
  %775 = vmatpush1.bf16.msra.mxu0 %v579
  %776 = vmatprep.subr.bf16.mxu0 0
  %777 = vmatpush1.bf16.msra.mxu0 %v580
  %778 = vmatprep.subr.bf16.mxu0 0
  %779 = vmatpush1.bf16.msra.mxu0 %v581
  %780 = vmatprep.subr.bf16.mxu0 0
  %781 = vmatpush1.bf16.msra.mxu0 %v582
  %782 = vmatprep.subr.bf16.mxu0 0
  %783 = vmatpush1.bf16.msra.mxu0 %v583
  %784 = vmatprep.subr.bf16.mxu0 0
  %785 = vmatpush1.bf16.msra.mxu0 %v584
  %786 = vmatprep.subr.bf16.mxu0 0
  %787 = vmatpush1.bf16.msra.mxu0 %v585
  %788 = vmatprep.subr.bf16.mxu0 0
  %789 = vmatpush1.bf16.msra.mxu0 %v586
  %790 = vmatprep.subr.bf16.mxu0 0
  %791 = vmatpush1.bf16.msra.mxu0 %v587
  %792 = vmatprep.subr.bf16.mxu0 0
  %793 = vmatpush1.bf16.msra.mxu0 %v588
  %794 = vmatprep.subr.bf16.mxu0 0
  %795 = vmatpush1.bf16.msra.mxu0 %v589
  %796 = vmatprep.subr.bf16.mxu0 0
  %797 = vmatpush1.bf16.msra.mxu0 %v590
  %798 = vmatprep.mubr.bf16.mxu0 %v312
  %799 = vmatmul.mubr.bf16.gmra.mrb[0].mxu0 %v311
  %v800 = vpop.f32.mrb[0].mxu0
  %v801 = vadd.f32 %v704, %v800
  %v802 = vpop.f32.mrb[0].mxu0
  %v803 = vpop.f32.mrb[0].mxu0
  %v804 = vadd.f32 %v707, %v803
  %v805 = vpop.f32.mrb[0].mxu0
  %806 = vmatprep.mubr.bf16.mxu0 %v318
  %807 = vmatmul.mubr.bf16.gmra.mrb[0].mxu0 %v317
  %v808 = vpop.f32.mrb[0].mxu0
  %v809 = vadd.f32 %v712, %v808
  %v810 = vpop.f32.mrb[0].mxu0
  %v811 = vpop.f32.mrb[0].mxu0
  %v812 = vadd.f32 %v715, %v811
  %v813 = vpop.f32.mrb[0].mxu0
  %814 = vmatprep.mubr.bf16.mxu0 %v324
  %815 = vmatmul.mubr.bf16.gmra.mrb[0].mxu0 %v323
  %v816 = vpop.f32.mrb[0].mxu0
  %v817 = vadd.f32 %v720, %v816
  %v818 = vpop.f32.mrb[0].mxu0
  %v819 = vpop.f32.mrb[0].mxu0
  %v820 = vadd.f32 %v723, %v819
  %v821 = vpop.f32.mrb[0].mxu0
  %822 = vmatprep.mubr.bf16.mxu0 %v330
  %823 = vmatmul.mubr.bf16.gmra.mrb[0].mxu0 %v329
  %v824 = vpop.f32.mrb[0].mxu0
  %v825 = vadd.f32 %v728, %v824
  %v826 = vpop.f32.mrb[0].mxu0
  %v827 = vpop.f32.mrb[0].mxu0
  %v828 = vadd.f32 %v731, %v827
  %v829 = vpop.f32.mrb[0].mxu0
  %830 = vmatprep.mubr.bf16.mxu0 %v336
  %831 = vmatmul.mubr.bf16.gmra.mrb[0].mxu0 %v335
  %v832 = vpop.f32.mrb[0].mxu0
  %v833 = vadd.f32 %v736, %v832
  %v834 = vpop.f32.mrb[0].mxu0
  %v835 = vpop.f32.mrb[0].mxu0
  %v836 = vadd.f32 %v739, %v835
  %v837 = vpop.f32.mrb[0].mxu0
  %838 = vmatprep.mubr.bf16.mxu0 %v342
  %839 = vmatmul.mubr.bf16.gmra.mrb[0].mxu0 %v341
  %v840 = vpop.f32.mrb[0].mxu0
  %v841 = vadd.f32 %v744, %v840
  %v842 = vpop.f32.mrb[0].mxu0
  %v843 = vpop.f32.mrb[0].mxu0
  %v844 = vadd.f32 %v747, %v843
  %v845 = vpop.f32.mrb[0].mxu0
  %846 = vmatprep.mubr.bf16.mxu0 %v348
  %847 = vmatmul.mubr.bf16.gmra.mrb[0].mxu0 %v347
  %v848 = vpop.f32.mrb[0].mxu0
  %v849 = vadd.f32 %v752, %v848
  %v850 = vpop.f32.mrb[0].mxu0
  %v851 = vpop.f32.mrb[0].mxu0
  %v852 = vadd.f32 %v755, %v851
  %v853 = vpop.f32.mrb[0].mxu0
  %854 = vmatprep.mubr.bf16.mxu0 %v354
  %855 = vmatmul.mubr.bf16.gmra.mrb[0].mxu0 %v353
  %v856 = vpop.f32.mrb[0].mxu0
  %v857 = vadd.f32 %v760, %v856
  %v858 = vpop.f32.mrb[0].mxu0
  %v859 = vpop.f32.mrb[0].mxu0
  %v860 = vadd.f32 %v763, %v859
  %v861 = vpop.f32.mrb[0].mxu0
  %862 = vdwg.mxu0
  %863 = vmatprep.subr.bf16.mxu0 0
  %864 = vmatpush1.bf16.msra.mxu0 %v591
  %865 = vmatprep.subr.bf16.mxu0 0
  %866 = vmatpush1.bf16.msra.mxu0 %v592
  %867 = vmatprep.subr.bf16.mxu0 0
  %868 = vmatpush1.bf16.msra.mxu0 %v593
  %869 = vmatprep.subr.bf16.mxu0 0
  %870 = vmatpush1.bf16.msra.mxu0 %v594
  %871 = vmatprep.subr.bf16.mxu0 0
  %872 = vmatpush1.bf16.msra.mxu0 %v595
  %873 = vmatprep.subr.bf16.mxu0 0
  %874 = vmatpush1.bf16.msra.mxu0 %v596
  %875 = vmatprep.subr.bf16.mxu0 0
  %876 = vmatpush1.bf16.msra.mxu0 %v597
  %877 = vmatprep.subr.bf16.mxu0 0
  %878 = vmatpush1.bf16.msra.mxu0 %v598
  %879 = vmatprep.subr.bf16.mxu0 0
  %880 = vmatpush1.bf16.msra.mxu0 %v667
  %881 = vmatprep.subr.bf16.mxu0 0
  %882 = vmatpush1.bf16.msra.mxu0 0
  %883 = vmatprep.subr.bf16.mxu0 0
  %884 = vmatpush1.bf16.msra.mxu0 0
  %885 = vmatprep.subr.bf16.mxu0 0
  %886 = vmatpush1.bf16.msra.mxu0 0
  %887 = vmatprep.subr.bf16.mxu0 0
  %888 = vmatpush1.bf16.msra.mxu0 0
  %889 = vmatprep.subr.bf16.mxu0 0
  %890 = vmatpush1.bf16.msra.mxu0 0
  %891 = vmatprep.subr.bf16.mxu0 0
  %892 = vmatpush1.bf16.msra.mxu0 0
  %893 = vmatprep.subr.bf16.mxu0 0
  %894 = vmatpush1.bf16.msra.mxu0 0
  %895 = vmatprep.mubr.bf16.mxu0 %v642
  %896 = vmatmul.mubr.bf16.gmra.mrb[0].mxu0 %v313
  %v897 = vpop.f32.mrb[0].mxu0
  %v898 = vadd.f32 %v801, %v897
  %v899 = vpop.f32.mrb[0].mxu0
  %v900 = vpop.f32.mrb[0].mxu0
  %v901 = vadd.f32 %v804, %v900
  %v902 = vpop.f32.mrb[0].mxu0
  %903 = vmatprep.mubr.bf16.mxu0 %v645
  %904 = vmatmul.mubr.bf16.gmra.mrb[0].mxu0 %v319
  %v905 = vpop.f32.mrb[0].mxu0
  %v906 = vadd.f32 %v809, %v905
  %v907 = vpop.f32.mrb[0].mxu0
  %v908 = vpop.f32.mrb[0].mxu0
  %v909 = vadd.f32 %v812, %v908
  %v910 = vpop.f32.mrb[0].mxu0
  %911 = vmatprep.mubr.bf16.mxu0 %v648
  %912 = vmatmul.mubr.bf16.gmra.mrb[0].mxu0 %v325
  %v913 = vpop.f32.mrb[0].mxu0
  %v914 = vadd.f32 %v817, %v913
  %v915 = vpop.f32.mrb[0].mxu0
  %v916 = vpop.f32.mrb[0].mxu0
  %v917 = vadd.f32 %v820, %v916
  %v918 = vpop.f32.mrb[0].mxu0
  %919 = vmatprep.mubr.bf16.mxu0 %v651
  %920 = vmatmul.mubr.bf16.gmra.mrb[0].mxu0 %v331
  %v921 = vpop.f32.mrb[0].mxu0
  %v922 = vadd.f32 %v825, %v921
  %v923 = vpop.f32.mrb[0].mxu0
  %v924 = vpop.f32.mrb[0].mxu0
  %v925 = vadd.f32 %v828, %v924
  %v926 = vpop.f32.mrb[0].mxu0
  %927 = vmatprep.mubr.bf16.mxu0 %v654
  %928 = vmatmul.mubr.bf16.gmra.mrb[0].mxu0 %v337
  %v929 = vpop.f32.mrb[0].mxu0
  %v930 = vadd.f32 %v833, %v929
  %v931 = vpop.f32.mrb[0].mxu0
  %v932 = vpop.f32.mrb[0].mxu0
  %v933 = vadd.f32 %v836, %v932
  %v934 = vpop.f32.mrb[0].mxu0
  %935 = vmatprep.mubr.bf16.mxu0 %v657
  %936 = vmatmul.mubr.bf16.gmra.mrb[0].mxu0 %v343
  %v937 = vpop.f32.mrb[0].mxu0
  %v938 = vadd.f32 %v841, %v937
  %v939 = vpop.f32.mrb[0].mxu0
  %v940 = vpop.f32.mrb[0].mxu0
  %v941 = vadd.f32 %v844, %v940
  %v942 = vpop.f32.mrb[0].mxu0
  %943 = vmatprep.mubr.bf16.mxu0 %v660
  %944 = vmatmul.mubr.bf16.gmra.mrb[0].mxu0 %v349
  %v945 = vpop.f32.mrb[0].mxu0
  %v946 = vadd.f32 %v849, %v945
  %v947 = vpop.f32.mrb[0].mxu0
  %v948 = vpop.f32.mrb[0].mxu0
  %v949 = vadd.f32 %v852, %v948
  %v950 = vpop.f32.mrb[0].mxu0
  %951 = vmatprep.mubr.bf16.mxu0 %v663
  %952 = vmatmul.mubr.bf16.gmra.mrb[0].mxu0 %v355
  %v953 = vpop.f32.mrb[0].mxu0
  %v954 = vadd.f32 %v857, %v953
  %v955 = vpop.f32.mrb[0].mxu0
  %v956 = vpop.f32.mrb[0].mxu0
  %v957 = vadd.f32 %v860, %v956
  %v958 = vpop.f32.mrb[0].mxu0
  %959 = vdwg.mxu0
  %v960 = vld [vmem:[%s4] sm:$0xff]
  %v961 = vld [vmem:[%s4 + $0x8] sm:$0xff]
  %v962 = vld [vmem:[%s4 + $0x10] sm:$0xff]
  %v963 = vld [vmem:[%s4 + $0x18] sm:$0xff]
  %v964 = vld [vmem:[%s4 + $0x20] sm:$0xff]
  %v965 = vld [vmem:[%s4 + $0x28] sm:$0xff]
  %v966 = vld [vmem:[%s4 + $0x30] sm:$0xff]
  %v967 = vld [vmem:[%s4 + $0x38] sm:$0xff]
  %v968 = vld [vmem:[%s2] sm:$0x1]
  %v969 = vld [vmem:[%s3] sm:$0x1]
  %vm970 = vcmask 523264
  %v971 = vsel %vm970, %v898, 0.0
  %v972 = vsel %vm970, %v901, 0.0
  %v973 = vadd.f32 %v971, %v972
  %v974 = vsel %vm970, %v906, 0.0
  %v975 = vadd.f32 %v973, %v974
  %v976 = vsel %vm970, %v909, 0.0
  %v977 = vadd.f32 %v975, %v976
  %v978 = vsel %vm970, %v914, 0.0
  %v979 = vadd.f32 %v977, %v978
  %v980 = vsel %vm970, %v917, 0.0
  %v981 = vadd.f32 %v979, %v980
  %v982 = vsel %vm970, %v922, 0.0
  %v983 = vadd.f32 %v981, %v982
  %v984 = vsel %vm970, %v925, 0.0
  %v985 = vadd.f32 %v983, %v984
  %v986 = vsel %vm970, %v930, 0.0
  %v987 = vadd.f32 %v985, %v986
  %v988 = vsel %vm970, %v933, 0.0
  %v989 = vadd.f32 %v987, %v988
  %v990 = vsel %vm970, %v938, 0.0
  %v991 = vadd.f32 %v989, %v990
  %v992 = vsel %vm970, %v941, 0.0
  %v993 = vadd.f32 %v991, %v992
  %v994 = vsel %vm970, %v946, 0.0
  %v995 = vadd.f32 %v993, %v994
  %v996 = vsel %vm970, %v949, 0.0
  %v997 = vadd.f32 %v995, %v996
  %v998 = vsel %vm970, %v954, 0.0
  %v999 = vadd.f32 %v997, %v998
  %v1000 = vsel %vm970, %v957, 0.0
  %v1001 = vadd.f32 %v999, %v1000
  %v1002 = vrot.slane %v1001, 4
  %v1003 = vadd.f32 %v1001, %v1002
  %v1004 = vrot.slane %v1003, 2
  %v1005 = vadd.f32 %v1003, %v1004
  %v1006 = vrot.slane %v1005, 1
  %v1007 = vadd.f32 %v1005, %v1006
  %v1008 = vmul.f32 %v898, %v898
  %v1009 = vmul.f32 %v901, %v901
  %v1010 = vmul.f32 %v906, %v906
  %v1011 = vmul.f32 %v909, %v909
  %v1012 = vmul.f32 %v914, %v914
  %v1013 = vmul.f32 %v917, %v917
  %v1014 = vmul.f32 %v922, %v922
  %v1015 = vmul.f32 %v925, %v925
  %v1016 = vmul.f32 %v930, %v930
  %v1017 = vmul.f32 %v933, %v933
  %v1018 = vmul.f32 %v938, %v938
  %v1019 = vmul.f32 %v941, %v941
  %v1020 = vmul.f32 %v946, %v946
  %v1021 = vmul.f32 %v949, %v949
  %v1022 = vmul.f32 %v954, %v954
  %v1023 = vmul.f32 %v957, %v957
  %v1024 = vsel %vm970, %v1008, 0.0
  %v1025 = vsel %vm970, %v1009, 0.0
  %v1026 = vadd.f32 %v1024, %v1025
  %v1027 = vsel %vm970, %v1010, 0.0
  %v1028 = vadd.f32 %v1026, %v1027
  %v1029 = vsel %vm970, %v1011, 0.0
  %v1030 = vadd.f32 %v1028, %v1029
  %v1031 = vsel %vm970, %v1012, 0.0
  %v1032 = vadd.f32 %v1030, %v1031
  %v1033 = vsel %vm970, %v1013, 0.0
  %v1034 = vadd.f32 %v1032, %v1033
  %v1035 = vsel %vm970, %v1014, 0.0
  %v1036 = vadd.f32 %v1034, %v1035
  %v1037 = vsel %vm970, %v1015, 0.0
  %v1038 = vadd.f32 %v1036, %v1037
  %v1039 = vsel %vm970, %v1016, 0.0
  %v1040 = vadd.f32 %v1038, %v1039
  %v1041 = vsel %vm970, %v1017, 0.0
  %v1042 = vadd.f32 %v1040, %v1041
  %v1043 = vsel %vm970, %v1018, 0.0
  %v1044 = vadd.f32 %v1042, %v1043
  %v1045 = vsel %vm970, %v1019, 0.0
  %v1046 = vadd.f32 %v1044, %v1045
  %v1047 = vsel %vm970, %v1020, 0.0
  %v1048 = vadd.f32 %v1046, %v1047
  %v1049 = vsel %vm970, %v1021, 0.0
  %v1050 = vadd.f32 %v1048, %v1049
  %v1051 = vsel %vm970, %v1022, 0.0
  %v1052 = vadd.f32 %v1050, %v1051
  %v1053 = vsel %vm970, %v1023, 0.0
  %v1054 = vadd.f32 %v1052, %v1053
  %v1055 = vrot.slane %v1054, 4
  %v1056 = vadd.f32 %v1054, %v1055
  %v1057 = vrot.slane %v1056, 2
  %v1058 = vadd.f32 %v1056, %v1057
  %v1059 = vrot.slane %v1058, 1
  %v1060 = vadd.f32 %v1058, %v1059
  %v1062 = vsel %vm970, %v1007, 0
  %1064 = vmatprep.subr.mxu0 0.0
  %1065 = vmatpush1.msra.mxu0 %v960
  %1066 = vmatprep.subr.mxu0 0.0
  %1067 = vmatpush1.msra.mxu0 %v961
  %1068 = vmatprep.subr.mxu0 0.0
  %1069 = vmatpush1.msra.mxu0 %v962
  %1070 = vmatprep.subr.mxu0 0.0
  %1071 = vmatpush1.msra.mxu0 %v963
  %1072 = vmatprep.subr.mxu0 0.0
  %1073 = vmatpush1.msra.mxu0 %v964
  %1074 = vmatprep.subr.mxu0 0.0
  %1075 = vmatpush1.msra.mxu0 %v965
  %1076 = vmatprep.subr.mxu0 0.0
  %1077 = vmatpush1.msra.mxu0 %v966
  %1078 = vmatprep.subr.mxu0 0.0
  %1079 = vmatpush1.msra.mxu0 %v967
  %1080 = vmatprep.subr.mxu0 0.0
  %1081 = vmatpush1.msra.mxu0 0.0
  %1082 = vmatprep.subr.mxu0 0.0
  %1083 = vmatpush1.msra.mxu0 0.0
  %1084 = vmatprep.subr.mxu0 0.0
  %1085 = vmatpush1.msra.mxu0 0.0
  %1086 = vmatprep.subr.mxu0 0.0
  %1087 = vmatpush1.msra.mxu0 0.0
  %1088 = vmatprep.subr.mxu0 0.0
  %1089 = vmatpush1.msra.mxu0 0.0
  %1090 = vmatprep.subr.mxu0 0.0
  %1091 = vmatpush1.msra.mxu0 0.0
  %1092 = vmatprep.subr.mxu0 0.0
  %1093 = vmatpush1.msra.mxu0 0.0
  %1094 = vmatprep.subr.mxu0 0.0
  %1095 = vmatpush1.msra.mxu0 0.0
  %1096 = vmatprep.subr.mxu0 0.0
  %1097 = vmatpush1.msra.mxu0 0.0
  %1098 = vmatprep.subr.mxu0 0.0
  %1099 = vmatpush1.msra.mxu0 0.0
  %1100 = vmatprep.subr.mxu0 0.0
  %1101 = vmatpush1.msra.mxu0 0.0
  %1102 = vmatprep.subr.mxu0 0.0
  %1103 = vmatpush1.msra.mxu0 0.0
  %1104 = vmatprep.subr.mxu0 0.0
  %1105 = vmatpush1.msra.mxu0 0.0
  %1106 = vmatprep.subr.mxu0 0.0
  %1107 = vmatpush1.msra.mxu0 0.0
  %1108 = vmatprep.subr.mxu0 0.0
  %1109 = vmatpush1.msra.mxu0 0.0
  %1110 = vmatprep.subr.mxu0 0.0
  %1111 = vmatpush1.msra.mxu0 0.0
  %1112 = vmatprep.subr.mxu0 0.0
  %1113 = vmatpush1.msra.mxu0 0.0
  %1114 = vmatprep.subr.mxu0 0.0
  %1115 = vmatpush1.msra.mxu0 0.0
  %1116 = vmatprep.subr.mxu0 0.0
  %1117 = vmatpush1.msra.mxu0 0.0
  %1118 = vmatprep.subr.mxu0 0.0
  %1119 = vmatpush1.msra.mxu0 0.0
  %1120 = vmatprep.subr.mxu0 0.0
  %1121 = vmatpush1.msra.mxu0 0.0
  %1122 = vmatprep.subr.mxu0 0.0
  %1123 = vmatpush1.msra.mxu0 0.0
  %1124 = vmatprep.subr.mxu0 0.0
  %1125 = vmatpush1.msra.mxu0 0.0
  %1126 = vmatprep.subr.mxu0 0.0
  %1127 = vmatpush1.msra.mxu0 0.0
  %1128 = vmatprep.mubr.f32.mxu0 0.0
  %1129 = vmatmul.mubr.f32.gmra.mrb[0].mxu0 %v1062
  %v1130 = vpop.f32.mrb[0].mxu0
  %v1131 = vadd.f32 0.0, %v1130
  %v1132 = vpop.f32.mrb[0].mxu0
  %1133 = vdwg.mxu0
  %v1135 = vsel %vm970, %v1060, 0
  %1137 = vmatprep.subr.mxu0 0.0
  %1138 = vmatpush1.msra.mxu0 %v960
  %1139 = vmatprep.subr.mxu0 0.0
  %1140 = vmatpush1.msra.mxu0 %v961
  %1141 = vmatprep.subr.mxu0 0.0
  %1142 = vmatpush1.msra.mxu0 %v962
  %1143 = vmatprep.subr.mxu0 0.0
  %1144 = vmatpush1.msra.mxu0 %v963
  %1145 = vmatprep.subr.mxu0 0.0
  %1146 = vmatpush1.msra.mxu0 %v964
  %1147 = vmatprep.subr.mxu0 0.0
  %1148 = vmatpush1.msra.mxu0 %v965
  %1149 = vmatprep.subr.mxu0 0.0
  %1150 = vmatpush1.msra.mxu0 %v966
  %1151 = vmatprep.subr.mxu0 0.0
  %1152 = vmatpush1.msra.mxu0 %v967
  %1153 = vmatprep.subr.mxu0 0.0
  %1154 = vmatpush1.msra.mxu0 0.0
  %1155 = vmatprep.subr.mxu0 0.0
  %1156 = vmatpush1.msra.mxu0 0.0
  %1157 = vmatprep.subr.mxu0 0.0
  %1158 = vmatpush1.msra.mxu0 0.0
  %1159 = vmatprep.subr.mxu0 0.0
  %1160 = vmatpush1.msra.mxu0 0.0
  %1161 = vmatprep.subr.mxu0 0.0
  %1162 = vmatpush1.msra.mxu0 0.0
  %1163 = vmatprep.subr.mxu0 0.0
  %1164 = vmatpush1.msra.mxu0 0.0
  %1165 = vmatprep.subr.mxu0 0.0
  %1166 = vmatpush1.msra.mxu0 0.0
  %1167 = vmatprep.subr.mxu0 0.0
  %1168 = vmatpush1.msra.mxu0 0.0
  %1169 = vmatprep.subr.mxu0 0.0
  %1170 = vmatpush1.msra.mxu0 0.0
  %1171 = vmatprep.subr.mxu0 0.0
  %1172 = vmatpush1.msra.mxu0 0.0
  %1173 = vmatprep.subr.mxu0 0.0
  %1174 = vmatpush1.msra.mxu0 0.0
  %1175 = vmatprep.subr.mxu0 0.0
  %1176 = vmatpush1.msra.mxu0 0.0
  %1177 = vmatprep.subr.mxu0 0.0
  %1178 = vmatpush1.msra.mxu0 0.0
  %1179 = vmatprep.subr.mxu0 0.0
  %1180 = vmatpush1.msra.mxu0 0.0
  %1181 = vmatprep.subr.mxu0 0.0
  %1182 = vmatpush1.msra.mxu0 0.0
  %1183 = vmatprep.subr.mxu0 0.0
  %1184 = vmatpush1.msra.mxu0 0.0
  %1185 = vmatprep.subr.mxu0 0.0
  %1186 = vmatpush1.msra.mxu0 0.0
  %1187 = vmatprep.subr.mxu0 0.0
  %1188 = vmatpush1.msra.mxu0 0.0
  %1189 = vmatprep.subr.mxu0 0.0
  %1190 = vmatpush1.msra.mxu0 0.0
  %1191 = vmatprep.subr.mxu0 0.0
  %1192 = vmatpush1.msra.mxu0 0.0
  %1193 = vmatprep.subr.mxu0 0.0
  %1194 = vmatpush1.msra.mxu0 0.0
  %1195 = vmatprep.subr.mxu0 0.0
  %1196 = vmatpush1.msra.mxu0 0.0
  %1197 = vmatprep.subr.mxu0 0.0
  %1198 = vmatpush1.msra.mxu0 0.0
  %1199 = vmatprep.subr.mxu0 0.0
  %1200 = vmatpush1.msra.mxu0 0.0
  %1201 = vmatprep.mubr.f32.mxu0 0.0
  %1202 = vmatmul.mubr.f32.gmra.mrb[0].mxu0 %v1135
  %v1203 = vpop.f32.mrb[0].mxu0
  %v1204 = vadd.f32 0.0, %v1203
  %v1205 = vpop.f32.mrb[0].mxu0
  %1206 = vdwg.mxu0
  %v1207 = vmul.f32 %v1131, 0.0009765625
  %v1208 = vmul.f32 %v1204, 0.0009765625
  %v1209 = vmul.f32 %v1207, %v1207
  %v1210 = vsub.f32 %v1208, %v1209
  %v1211 = vmax.f32 %v1210, 0.0
  %v1212 = vadd.f32 %v1211, 1e-05
  %v1213 = vrsqrt.pop %v1212
  %v1214 = vmul.f32 %v968, %v1213
  %v1215 = vmul.f32 %v1207, %v1214
  %v1216 = vsub.f32 %v969, %v1215
  %v1218 = vlaneseq
  %v1219 = vshrl.u32 %v1218, 7
  %v1220 = vsub.s32 0, %v1219
  %v1221 = vrot.slane %v1214, %v1220
  %v1223 = vmul.f32 %v898, %v1221
  %v1224 = vmul.f32 %v901, %v1221
  %v1225 = vmul.f32 %v906, %v1221
  %v1226 = vmul.f32 %v909, %v1221
  %v1227 = vmul.f32 %v914, %v1221
  %v1228 = vmul.f32 %v917, %v1221
  %v1229 = vmul.f32 %v922, %v1221
  %v1230 = vmul.f32 %v925, %v1221
  %v1231 = vmul.f32 %v930, %v1221
  %v1232 = vmul.f32 %v933, %v1221
  %v1233 = vmul.f32 %v938, %v1221
  %v1234 = vmul.f32 %v941, %v1221
  %v1235 = vmul.f32 %v946, %v1221
  %v1236 = vmul.f32 %v949, %v1221
  %v1237 = vmul.f32 %v954, %v1221
  %v1238 = vmul.f32 %v957, %v1221
  %v1240 = vlaneseq
  %v1241 = vshrl.u32 %v1240, 7
  %v1242 = vsub.s32 0, %v1241
  %v1243 = vrot.slane %v1216, %v1242
  %v1245 = vadd.f32 %v1223, %v1243
  %v1246 = vadd.f32 %v1224, %v1243
  %v1247 = vadd.f32 %v1225, %v1243
  %v1248 = vadd.f32 %v1226, %v1243
  %v1249 = vadd.f32 %v1227, %v1243
  %v1250 = vadd.f32 %v1228, %v1243
  %v1251 = vadd.f32 %v1229, %v1243
  %v1252 = vadd.f32 %v1230, %v1243
  %v1253 = vadd.f32 %v1231, %v1243
  %v1254 = vadd.f32 %v1232, %v1243
  %v1255 = vadd.f32 %v1233, %v1243
  %v1256 = vadd.f32 %v1234, %v1243
  %v1257 = vadd.f32 %v1235, %v1243
  %v1258 = vadd.f32 %v1236, %v1243
  %v1259 = vadd.f32 %v1237, %v1243
  %v1260 = vadd.f32 %v1238, %v1243
  %v1261 = vmax.f32 %v1245, 0.0
  %v1262 = vmax.f32 %v1246, 0.0
  %v1263 = vmax.f32 %v1247, 0.0
  %v1264 = vmax.f32 %v1248, 0.0
  %v1265 = vmax.f32 %v1249, 0.0
  %v1266 = vmax.f32 %v1250, 0.0
  %v1267 = vmax.f32 %v1251, 0.0
  %v1268 = vmax.f32 %v1252, 0.0
  %v1269 = vmax.f32 %v1253, 0.0
  %v1270 = vmax.f32 %v1254, 0.0
  %v1271 = vmax.f32 %v1255, 0.0
  %v1272 = vmax.f32 %v1256, 0.0
  %v1273 = vmax.f32 %v1257, 0.0
  %v1274 = vmax.f32 %v1258, 0.0
  %v1275 = vmax.f32 %v1259, 0.0
  %v1276 = vmax.f32 %v1260, 0.0
  %v1277 = vpack.c.bf16 %v1262, %v1261
  %v1278 = vpack.c.bf16 %v1264, %v1263
  %v1279 = vpack.c.bf16 %v1266, %v1265
  %v1280 = vpack.c.bf16 %v1268, %v1267
  %v1281 = vpack.c.bf16 %v1270, %v1269
  %v1282 = vpack.c.bf16 %v1272, %v1271
  %v1283 = vpack.c.bf16 %v1274, %v1273
  %v1284 = vpack.c.bf16 %v1276, %v1275
  %v1285 = vld [vmem:[%s5] sm:$0xf]
  %v1286 = vld [vmem:[%s5 + $0x4] sm:$0xf]
  %v1287 = vld [vmem:[%s5 + $0x8] sm:$0xf]
  %v1288 = vld [vmem:[%s5 + $0xc] sm:$0xf]
  %v1289 = vld [vmem:[%s5 + $0x10] sm:$0xf]
  %v1290 = vld [vmem:[%s5 + $0x14] sm:$0xf]
  %v1291 = vld [vmem:[%s5 + $0x18] sm:$0xf]
  %v1292 = vld [vmem:[%s5 + $0x1c] sm:$0xf]
  %v1293 = vld [vmem:[%s5 + $0x20] sm:$0xf]
  %v1294 = vld [vmem:[%s5 + $0x24] sm:$0xf]
  %v1295 = vld [vmem:[%s5 + $0x28] sm:$0xf]
  %v1296 = vld [vmem:[%s5 + $0x2c] sm:$0xf]
  %v1297 = vld [vmem:[%s5 + $0x30] sm:$0xf]
  %v1298 = vld [vmem:[%s5 + $0x34] sm:$0xf]
  %v1299 = vld [vmem:[%s5 + $0x38] sm:$0xf]
  %v1300 = vld [vmem:[%s5 + $0x3c] sm:$0xf]
  %v1301 = vld [vmem:[%s5 + $0x40] sm:$0xf]
  %v1302 = vld [vmem:[%s5 + $0x44] sm:$0xf]
  %v1303 = vld [vmem:[%s5 + $0x48] sm:$0xf]
  %v1304 = vld [vmem:[%s5 + $0x4c] sm:$0xf]
  %v1305 = vld [vmem:[%s5 + $0x50] sm:$0xf]
  %v1306 = vld [vmem:[%s5 + $0x54] sm:$0xf]
  %v1307 = vld [vmem:[%s5 + $0x58] sm:$0xf]
  %v1308 = vld [vmem:[%s5 + $0x5c] sm:$0xf]
  %v1309 = vld [vmem:[%s5 + $0x60] sm:$0xf]
  %v1310 = vld [vmem:[%s5 + $0x64] sm:$0xf]
  %v1311 = vld [vmem:[%s5 + $0x68] sm:$0xf]
  %v1312 = vld [vmem:[%s5 + $0x6c] sm:$0xf]
  %v1313 = vld [vmem:[%s5 + $0x70] sm:$0xf]
  %v1314 = vld [vmem:[%s5 + $0x74] sm:$0xf]
  %v1315 = vld [vmem:[%s5 + $0x78] sm:$0xf]
  %v1316 = vld [vmem:[%s5 + $0x7c] sm:$0xf]
  %v1317 = vld [vmem:[%s5 + $0x80] sm:$0xf]
  %v1318 = vld [vmem:[%s5 + $0x84] sm:$0xf]
  %v1319 = vld [vmem:[%s5 + $0x88] sm:$0xf]
  %v1320 = vld [vmem:[%s5 + $0x8c] sm:$0xf]
  %v1321 = vld [vmem:[%s5 + $0x90] sm:$0xf]
  %v1322 = vld [vmem:[%s5 + $0x94] sm:$0xf]
  %v1323 = vld [vmem:[%s5 + $0x98] sm:$0xf]
  %v1324 = vld [vmem:[%s5 + $0x9c] sm:$0xf]
  %v1325 = vld [vmem:[%s5 + $0xa0] sm:$0xf]
  %v1326 = vld [vmem:[%s5 + $0xa4] sm:$0xf]
  %v1327 = vld [vmem:[%s5 + $0xa8] sm:$0xf]
  %v1328 = vld [vmem:[%s5 + $0xac] sm:$0xf]
  %v1329 = vld [vmem:[%s5 + $0xb0] sm:$0xf]
  %v1330 = vld [vmem:[%s5 + $0xb4] sm:$0xf]
  %v1331 = vld [vmem:[%s5 + $0xb8] sm:$0xf]
  %v1332 = vld [vmem:[%s5 + $0xbc] sm:$0xf]
  %v1333 = vld [vmem:[%s5 + $0xc0] sm:$0xf]
  %v1334 = vld [vmem:[%s5 + $0xc4] sm:$0xf]
  %v1335 = vld [vmem:[%s5 + $0xc8] sm:$0xf]
  %v1336 = vld [vmem:[%s5 + $0xcc] sm:$0xf]
  %v1337 = vld [vmem:[%s5 + $0xd0] sm:$0xf]
  %v1338 = vld [vmem:[%s5 + $0xd4] sm:$0xf]
  %v1339 = vld [vmem:[%s5 + $0xd8] sm:$0xf]
  %v1340 = vld [vmem:[%s5 + $0xdc] sm:$0xf]
  %v1341 = vld [vmem:[%s5 + $0xe0] sm:$0xf]
  %v1342 = vld [vmem:[%s5 + $0xe4] sm:$0xf]
  %v1343 = vld [vmem:[%s5 + $0xe8] sm:$0xf]
  %v1344 = vld [vmem:[%s5 + $0xec] sm:$0xf]
  %v1345 = vld [vmem:[%s5 + $0xf0] sm:$0xf]
  %v1346 = vld [vmem:[%s5 + $0xf4] sm:$0xf]
  %v1347 = vld [vmem:[%s5 + $0xf8] sm:$0xf]
  %v1348 = vld [vmem:[%s5 + $0xfc] sm:$0xf]
  %v1349 = vld [vmem:[%s5 + $0x100] sm:$0xf]
  %v1350 = vld [vmem:[%s5 + $0x104] sm:$0xf]
  %v1351 = vld [vmem:[%s5 + $0x108] sm:$0xf]
  %v1352 = vld [vmem:[%s5 + $0x10c] sm:$0xf]
  %v1353 = vld [vmem:[%s5 + $0x110] sm:$0xf]
  %v1354 = vld [vmem:[%s5 + $0x114] sm:$0xf]
  %v1355 = vld [vmem:[%s5 + $0x118] sm:$0xf]
  %v1356 = vld [vmem:[%s5 + $0x11c] sm:$0xf]
  %v1357 = vld [vmem:[%s5 + $0x120] sm:$0xf]
  %v1358 = vld [vmem:[%s5 + $0x124] sm:$0xf]
  %v1359 = vld [vmem:[%s5 + $0x128] sm:$0xf]
  %v1360 = vld [vmem:[%s5 + $0x12c] sm:$0xf]
  %v1361 = vld [vmem:[%s5 + $0x130] sm:$0xf]
  %v1362 = vld [vmem:[%s5 + $0x134] sm:$0xf]
  %v1363 = vld [vmem:[%s5 + $0x138] sm:$0xf]
  %v1364 = vld [vmem:[%s5 + $0x13c] sm:$0xf]
  %v1365 = vld [vmem:[%s5 + $0x140] sm:$0xf]
  %v1366 = vld [vmem:[%s5 + $0x144] sm:$0xf]
  %v1367 = vld [vmem:[%s5 + $0x148] sm:$0xf]
  %v1368 = vld [vmem:[%s5 + $0x14c] sm:$0xf]
  %v1369 = vld [vmem:[%s5 + $0x150] sm:$0xf]
  %v1370 = vld [vmem:[%s5 + $0x154] sm:$0xf]
  %v1371 = vld [vmem:[%s5 + $0x158] sm:$0xf]
  %v1372 = vld [vmem:[%s5 + $0x15c] sm:$0xf]
  %v1373 = vld [vmem:[%s5 + $0x160] sm:$0xf]
  %v1374 = vld [vmem:[%s5 + $0x164] sm:$0xf]
  %v1375 = vld [vmem:[%s5 + $0x168] sm:$0xf]
  %v1376 = vld [vmem:[%s5 + $0x16c] sm:$0xf]
  %v1377 = vld [vmem:[%s5 + $0x170] sm:$0xf]
  %v1378 = vld [vmem:[%s5 + $0x174] sm:$0xf]
  %v1379 = vld [vmem:[%s5 + $0x178] sm:$0xf]
  %v1380 = vld [vmem:[%s5 + $0x17c] sm:$0xf]
  %v1381 = vld [vmem:[%s5 + $0x180] sm:$0xf]
  %v1382 = vld [vmem:[%s5 + $0x184] sm:$0xf]
  %v1383 = vld [vmem:[%s5 + $0x188] sm:$0xf]
  %v1384 = vld [vmem:[%s5 + $0x18c] sm:$0xf]
  %v1385 = vld [vmem:[%s5 + $0x190] sm:$0xf]
  %v1386 = vld [vmem:[%s5 + $0x194] sm:$0xf]
  %v1387 = vld [vmem:[%s5 + $0x198] sm:$0xf]
  %v1388 = vld [vmem:[%s5 + $0x19c] sm:$0xf]
  %v1389 = vld [vmem:[%s5 + $0x1a0] sm:$0xf]
  %v1390 = vld [vmem:[%s5 + $0x1a4] sm:$0xf]
  %v1391 = vld [vmem:[%s5 + $0x1a8] sm:$0xf]
  %v1392 = vld [vmem:[%s5 + $0x1ac] sm:$0xf]
  %v1393 = vld [vmem:[%s5 + $0x1b0] sm:$0xf]
  %v1394 = vld [vmem:[%s5 + $0x1b4] sm:$0xf]
  %v1395 = vld [vmem:[%s5 + $0x1b8] sm:$0xf]
  %v1396 = vld [vmem:[%s5 + $0x1bc] sm:$0xf]
  %v1397 = vld [vmem:[%s5 + $0x1c0] sm:$0xf]
  %v1398 = vld [vmem:[%s5 + $0x1c4] sm:$0xf]
  %v1399 = vld [vmem:[%s5 + $0x1c8] sm:$0xf]
  %v1400 = vld [vmem:[%s5 + $0x1cc] sm:$0xf]
  %v1401 = vld [vmem:[%s5 + $0x1d0] sm:$0xf]
  %v1402 = vld [vmem:[%s5 + $0x1d4] sm:$0xf]
  %v1403 = vld [vmem:[%s5 + $0x1d8] sm:$0xf]
  %v1404 = vld [vmem:[%s5 + $0x1dc] sm:$0xf]
  %v1405 = vld [vmem:[%s5 + $0x1e0] sm:$0xf]
  %v1406 = vld [vmem:[%s5 + $0x1e4] sm:$0xf]
  %v1407 = vld [vmem:[%s5 + $0x1e8] sm:$0xf]
  %v1408 = vld [vmem:[%s5 + $0x1ec] sm:$0xf]
  %v1409 = vld [vmem:[%s5 + $0x1f0] sm:$0xf]
  %v1410 = vld [vmem:[%s5 + $0x1f4] sm:$0xf]
  %v1411 = vld [vmem:[%s5 + $0x1f8] sm:$0xf]
  %v1412 = vld [vmem:[%s5 + $0x1fc] sm:$0xf]
  %v1413 = vld [vmem:[%s5 + $0x200] sm:$0xf]
  %v1414 = vld [vmem:[%s5 + $0x204] sm:$0xf]
  %v1415 = vld [vmem:[%s5 + $0x208] sm:$0xf]
  %v1416 = vld [vmem:[%s5 + $0x20c] sm:$0xf]
  %v1417 = vld [vmem:[%s5 + $0x210] sm:$0xf]
  %v1418 = vld [vmem:[%s5 + $0x214] sm:$0xf]
  %v1419 = vld [vmem:[%s5 + $0x218] sm:$0xf]
  %v1420 = vld [vmem:[%s5 + $0x21c] sm:$0xf]
  %v1421 = vld [vmem:[%s5 + $0x220] sm:$0xf]
  %v1422 = vld [vmem:[%s5 + $0x224] sm:$0xf]
  %v1423 = vld [vmem:[%s5 + $0x228] sm:$0xf]
  %v1424 = vld [vmem:[%s5 + $0x22c] sm:$0xf]
  %v1425 = vld [vmem:[%s5 + $0x230] sm:$0xf]
  %v1426 = vld [vmem:[%s5 + $0x234] sm:$0xf]
  %v1427 = vld [vmem:[%s5 + $0x238] sm:$0xf]
  %v1428 = vld [vmem:[%s5 + $0x23c] sm:$0xf]
  %v1573 = vunpack.c.l.b16 %v1285
  %v1574 = vunpack.c.l.b16 %v1286
  %v1575 = vunpack.c.l.b16 %v1287
  %v1576 = vunpack.c.l.b16 %v1288
  %v1577 = vunpack.c.l.b16 %v1289
  %v1578 = vunpack.c.l.b16 %v1290
  %v1579 = vunpack.c.l.b16 %v1291
  %v1580 = vunpack.c.l.b16 %v1292
  %v1581 = vunpack.c.l.b16 %v1293
  %v1582 = vunpack.c.l.b16 %v1294
  %v1583 = vunpack.c.l.b16 %v1295
  %v1584 = vunpack.c.l.b16 %v1296
  %v1585 = vunpack.c.l.b16 %v1297
  %v1586 = vunpack.c.l.b16 %v1298
  %v1587 = vunpack.c.l.b16 %v1299
  %v1588 = vunpack.c.l.b16 %v1300
  %v1589 = vunpack.c.l.b16 %v1301
  %v1590 = vunpack.c.l.b16 %v1302
  %v1591 = vunpack.c.l.b16 %v1303
  %v1592 = vunpack.c.l.b16 %v1304
  %v1593 = vunpack.c.l.b16 %v1305
  %v1594 = vunpack.c.l.b16 %v1306
  %v1595 = vunpack.c.l.b16 %v1307
  %v1596 = vunpack.c.l.b16 %v1308
  %v1597 = vunpack.c.l.b16 %v1309
  %v1598 = vunpack.c.l.b16 %v1310
  %v1599 = vunpack.c.l.b16 %v1311
  %v1600 = vunpack.c.l.b16 %v1312
  %v1601 = vunpack.c.l.b16 %v1313
  %v1602 = vunpack.c.l.b16 %v1314
  %v1603 = vunpack.c.l.b16 %v1315
  %v1604 = vunpack.c.l.b16 %v1316
  %v1605 = vunpack.c.l.b16 %v1317
  %v1606 = vunpack.c.l.b16 %v1318
  %v1607 = vunpack.c.l.b16 %v1319
  %v1608 = vunpack.c.l.b16 %v1320
  %v1609 = vunpack.c.l.b16 %v1321
  %v1610 = vunpack.c.l.b16 %v1322
  %v1611 = vunpack.c.l.b16 %v1323
  %v1612 = vunpack.c.l.b16 %v1324
  %v1613 = vunpack.c.l.b16 %v1325
  %v1614 = vunpack.c.l.b16 %v1326
  %v1615 = vunpack.c.l.b16 %v1327
  %v1616 = vunpack.c.l.b16 %v1328
  %v1617 = vunpack.c.l.b16 %v1329
  %v1618 = vunpack.c.l.b16 %v1330
  %v1619 = vunpack.c.l.b16 %v1331
  %v1620 = vunpack.c.l.b16 %v1332
  %v1621 = vunpack.c.l.b16 %v1333
  %v1622 = vunpack.c.l.b16 %v1334
  %v1623 = vunpack.c.l.b16 %v1335
  %v1624 = vunpack.c.l.b16 %v1336
  %v1625 = vunpack.c.l.b16 %v1337
  %v1626 = vunpack.c.l.b16 %v1338
  %v1627 = vunpack.c.l.b16 %v1339
  %v1628 = vunpack.c.l.b16 %v1340
  %v1629 = vunpack.c.l.b16 %v1341
  %v1630 = vunpack.c.l.b16 %v1342
  %v1631 = vunpack.c.l.b16 %v1343
  %v1632 = vunpack.c.l.b16 %v1344
  %v1633 = vunpack.c.l.b16 %v1345
  %v1634 = vunpack.c.l.b16 %v1346
  %v1635 = vunpack.c.l.b16 %v1347
  %v1636 = vunpack.c.l.b16 %v1348
  %v1637 = vunpack.c.l.b16 %v1349
  %v1638 = vunpack.c.l.b16 %v1350
  %v1639 = vunpack.c.l.b16 %v1351
  %v1640 = vunpack.c.l.b16 %v1352
  %v1641 = vunpack.c.l.b16 %v1353
  %v1642 = vunpack.c.l.b16 %v1354
  %v1643 = vunpack.c.l.b16 %v1355
  %v1644 = vunpack.c.l.b16 %v1356
  %v1645 = vunpack.c.l.b16 %v1357
  %v1646 = vunpack.c.l.b16 %v1358
  %v1647 = vunpack.c.l.b16 %v1359
  %v1648 = vunpack.c.l.b16 %v1360
  %v1649 = vunpack.c.l.b16 %v1361
  %v1650 = vunpack.c.l.b16 %v1362
  %v1651 = vunpack.c.l.b16 %v1363
  %v1652 = vunpack.c.l.b16 %v1364
  %v1653 = vunpack.c.l.b16 %v1365
  %v1654 = vunpack.c.l.b16 %v1366
  %v1655 = vunpack.c.l.b16 %v1367
  %v1656 = vunpack.c.l.b16 %v1368
  %v1657 = vunpack.c.l.b16 %v1369
  %v1658 = vunpack.c.l.b16 %v1370
  %v1659 = vunpack.c.l.b16 %v1371
  %v1660 = vunpack.c.l.b16 %v1372
  %v1661 = vunpack.c.l.b16 %v1373
  %v1662 = vunpack.c.l.b16 %v1374
  %v1663 = vunpack.c.l.b16 %v1375
  %v1664 = vunpack.c.l.b16 %v1376
  %v1665 = vunpack.c.l.b16 %v1377
  %v1666 = vunpack.c.l.b16 %v1378
  %v1667 = vunpack.c.l.b16 %v1379
  %v1668 = vunpack.c.l.b16 %v1380
  %v1669 = vunpack.c.l.b16 %v1381
  %v1670 = vunpack.c.l.b16 %v1382
  %v1671 = vunpack.c.l.b16 %v1383
  %v1672 = vunpack.c.l.b16 %v1384
  %v1673 = vunpack.c.l.b16 %v1385
  %v1674 = vunpack.c.l.b16 %v1386
  %v1675 = vunpack.c.l.b16 %v1387
  %v1676 = vunpack.c.l.b16 %v1388
  %v1677 = vunpack.c.l.b16 %v1389
  %v1678 = vunpack.c.l.b16 %v1390
  %v1679 = vunpack.c.l.b16 %v1391
  %v1680 = vunpack.c.l.b16 %v1392
  %v1681 = vunpack.c.l.b16 %v1393
  %v1682 = vunpack.c.l.b16 %v1394
  %v1683 = vunpack.c.l.b16 %v1395
  %v1684 = vunpack.c.l.b16 %v1396
  %v1685 = vunpack.c.l.b16 %v1397
  %v1686 = vunpack.c.l.b16 %v1398
  %v1687 = vunpack.c.l.b16 %v1399
  %v1688 = vunpack.c.l.b16 %v1400
  %v1689 = vunpack.c.l.b16 %v1401
  %v1690 = vunpack.c.l.b16 %v1402
  %v1691 = vunpack.c.l.b16 %v1403
  %v1692 = vunpack.c.l.b16 %v1404
  %v1693 = vunpack.c.l.b16 %v1405
  %v1694 = vunpack.c.l.b16 %v1406
  %v1695 = vunpack.c.l.b16 %v1407
  %v1696 = vunpack.c.l.b16 %v1408
  %v1697 = vunpack.c.l.b16 %v1409
  %v1698 = vunpack.c.l.b16 %v1410
  %v1699 = vunpack.c.l.b16 %v1411
  %v1700 = vunpack.c.l.b16 %v1412
  %v1701 = vunpack.c.l.b16 %v1413
  %v1702 = vunpack.c.l.b16 %v1414
  %v1703 = vunpack.c.l.b16 %v1415
  %v1704 = vunpack.c.l.b16 %v1416
  %v1705 = vunpack.c.l.b16 %v1417
  %v1706 = vunpack.c.l.b16 %v1418
  %v1707 = vunpack.c.l.b16 %v1419
  %v1708 = vunpack.c.l.b16 %v1420
  %v1709 = vunpack.c.l.b16 %v1421
  %v1710 = vunpack.c.l.b16 %v1422
  %v1711 = vunpack.c.l.b16 %v1423
  %v1712 = vunpack.c.l.b16 %v1424
  %v1713 = vunpack.c.l.b16 %v1425
  %v1714 = vunpack.c.l.b16 %v1426
  %v1715 = vunpack.c.l.b16 %v1427
  %v1716 = vunpack.c.l.b16 %v1428
  %v1717 = vpack.c.b16 %v1574, %v1573
  %v1718 = vpack.c.b16 %v1576, %v1575
  %v1719 = vpack.c.b16 %v1578, %v1577
  %v1720 = vpack.c.b16 %v1580, %v1579
  %v1721 = vpack.c.b16 %v1582, %v1581
  %v1722 = vpack.c.b16 %v1584, %v1583
  %v1723 = vpack.c.b16 %v1586, %v1585
  %v1724 = vpack.c.b16 %v1588, %v1587
  %v1725 = vpack.c.b16 %v1590, %v1589
  %v1726 = vpack.c.b16 %v1592, %v1591
  %v1727 = vpack.c.b16 %v1594, %v1593
  %v1728 = vpack.c.b16 %v1596, %v1595
  %v1729 = vpack.c.b16 %v1598, %v1597
  %v1730 = vpack.c.b16 %v1600, %v1599
  %v1731 = vpack.c.b16 %v1602, %v1601
  %v1732 = vpack.c.b16 %v1604, %v1603
  %v1733 = vpack.c.b16 %v1606, %v1605
  %v1734 = vpack.c.b16 %v1608, %v1607
  %v1735 = vpack.c.b16 %v1610, %v1609
  %v1736 = vpack.c.b16 %v1612, %v1611
  %v1737 = vpack.c.b16 %v1614, %v1613
  %v1738 = vpack.c.b16 %v1616, %v1615
  %v1739 = vpack.c.b16 %v1618, %v1617
  %v1740 = vpack.c.b16 %v1620, %v1619
  %v1741 = vpack.c.b16 %v1622, %v1621
  %v1742 = vpack.c.b16 %v1624, %v1623
  %v1743 = vpack.c.b16 %v1626, %v1625
  %v1744 = vpack.c.b16 %v1628, %v1627
  %v1745 = vpack.c.b16 %v1630, %v1629
  %v1746 = vpack.c.b16 %v1632, %v1631
  %v1747 = vpack.c.b16 %v1634, %v1633
  %v1748 = vpack.c.b16 %v1636, %v1635
  %v1749 = vpack.c.b16 %v1638, %v1637
  %v1750 = vpack.c.b16 %v1640, %v1639
  %v1751 = vpack.c.b16 %v1642, %v1641
  %v1752 = vpack.c.b16 %v1644, %v1643
  %v1753 = vpack.c.b16 %v1646, %v1645
  %v1754 = vpack.c.b16 %v1648, %v1647
  %v1755 = vpack.c.b16 %v1650, %v1649
  %v1756 = vpack.c.b16 %v1652, %v1651
  %v1757 = vpack.c.b16 %v1654, %v1653
  %v1758 = vpack.c.b16 %v1656, %v1655
  %v1759 = vpack.c.b16 %v1658, %v1657
  %v1760 = vpack.c.b16 %v1660, %v1659
  %v1761 = vpack.c.b16 %v1662, %v1661
  %v1762 = vpack.c.b16 %v1664, %v1663
  %v1763 = vpack.c.b16 %v1666, %v1665
  %v1764 = vpack.c.b16 %v1668, %v1667
  %v1765 = vpack.c.b16 %v1670, %v1669
  %v1766 = vpack.c.b16 %v1672, %v1671
  %v1767 = vpack.c.b16 %v1674, %v1673
  %v1768 = vpack.c.b16 %v1676, %v1675
  %v1769 = vpack.c.b16 %v1678, %v1677
  %v1770 = vpack.c.b16 %v1680, %v1679
  %v1771 = vpack.c.b16 %v1682, %v1681
  %v1772 = vpack.c.b16 %v1684, %v1683
  %v1773 = vpack.c.b16 %v1686, %v1685
  %v1774 = vpack.c.b16 %v1688, %v1687
  %v1775 = vpack.c.b16 %v1690, %v1689
  %v1776 = vpack.c.b16 %v1692, %v1691
  %v1777 = vpack.c.b16 %v1694, %v1693
  %v1778 = vpack.c.b16 %v1696, %v1695
  %v1779 = vpack.c.b16 %v1698, %v1697
  %v1780 = vpack.c.b16 %v1700, %v1699
  %v1781 = vpack.c.b16 %v1702, %v1701
  %v1782 = vpack.c.b16 %v1704, %v1703
  %v1783 = vpack.c.b16 %v1706, %v1705
  %v1784 = vpack.c.b16 %v1708, %v1707
  %v1785 = vpack.c.b16 %v1710, %v1709
  %v1786 = vpack.c.b16 %v1712, %v1711
  %v1787 = vpack.c.b16 %v1714, %v1713
  %v1788 = vpack.c.b16 %v1716, %v1715
  %1861 = vmatprep.subr.bf16.mxu0 0
  %1862 = vmatpush1.bf16.msra.mxu0 %v1277
  %1863 = vmatprep.subr.bf16.mxu0 0
  %1864 = vmatpush1.bf16.msra.mxu0 %v1278
  %1865 = vmatprep.subr.bf16.mxu0 0
  %1866 = vmatpush1.bf16.msra.mxu0 %v1279
  %1867 = vmatprep.subr.bf16.mxu0 0
  %1868 = vmatpush1.bf16.msra.mxu0 %v1280
  %1869 = vmatprep.subr.bf16.mxu0 0
  %1870 = vmatpush1.bf16.msra.mxu0 %v1281
  %1871 = vmatprep.subr.bf16.mxu0 0
  %1872 = vmatpush1.bf16.msra.mxu0 %v1282
  %1873 = vmatprep.subr.bf16.mxu0 0
  %1874 = vmatpush1.bf16.msra.mxu0 %v1283
  %1875 = vmatprep.subr.bf16.mxu0 0
  %1876 = vmatpush1.bf16.msra.mxu0 %v1284
  %1877 = vmatprep.subr.bf16.mxu0 0
  %1878 = vmatpush1.bf16.msra.mxu0 0
  %1879 = vmatprep.subr.bf16.mxu0 0
  %1880 = vmatpush1.bf16.msra.mxu0 0
  %1881 = vmatprep.subr.bf16.mxu0 0
  %1882 = vmatpush1.bf16.msra.mxu0 0
  %1883 = vmatprep.subr.bf16.mxu0 0
  %1884 = vmatpush1.bf16.msra.mxu0 0
  %1885 = vmatprep.subr.bf16.mxu0 0
  %1886 = vmatpush1.bf16.msra.mxu0 0
  %1887 = vmatprep.subr.bf16.mxu0 0
  %1888 = vmatpush1.bf16.msra.mxu0 0
  %1889 = vmatprep.subr.bf16.mxu0 0
  %1890 = vmatpush1.bf16.msra.mxu0 0
  %1891 = vmatprep.subr.bf16.mxu0 0
  %1892 = vmatpush1.bf16.msra.mxu0 0
  %1893 = vmatprep.mubr.bf16.mxu0 0
  %1894 = vmatmul.mubr.bf16.gmra.mrb[0].mxu0 %v1717
  %v1895 = vpop.f32.mrb[0].mxu0
  %v1896 = vadd.f32 0.0, %v1895
  %v1897 = vpop.f32.mrb[0].mxu0
  %v1898 = vpop.f32.mrb[0].mxu0
  %v1899 = vadd.f32 0.0, %v1898
  %v1900 = vpop.f32.mrb[0].mxu0
  %1901 = vmatprep.mubr.bf16.mxu0 0
  %1902 = vmatmul.mubr.bf16.gmra.mrb[0].mxu0 %v1718
  %v1903 = vpop.f32.mrb[0].mxu0
  %v1904 = vadd.f32 0.0, %v1903
  %v1905 = vpop.f32.mrb[0].mxu0
  %v1906 = vpop.f32.mrb[0].mxu0
  %v1907 = vadd.f32 0.0, %v1906
  %v1908 = vpop.f32.mrb[0].mxu0
  %1909 = vmatprep.mubr.bf16.mxu0 0
  %1910 = vmatmul.mubr.bf16.gmra.mrb[0].mxu0 %v1719
  %v1911 = vpop.f32.mrb[0].mxu0
  %v1912 = vadd.f32 0.0, %v1911
  %v1913 = vpop.f32.mrb[0].mxu0
  %v1914 = vpop.f32.mrb[0].mxu0
  %v1915 = vadd.f32 0.0, %v1914
  %v1916 = vpop.f32.mrb[0].mxu0
  %1917 = vmatprep.mubr.bf16.mxu0 0
  %1918 = vmatmul.mubr.bf16.gmra.mrb[0].mxu0 %v1720
  %v1919 = vpop.f32.mrb[0].mxu0
  %v1920 = vadd.f32 0.0, %v1919
  %v1921 = vpop.f32.mrb[0].mxu0
  %v1922 = vpop.f32.mrb[0].mxu0
  %v1923 = vadd.f32 0.0, %v1922
  %v1924 = vpop.f32.mrb[0].mxu0
  %1925 = vmatprep.mubr.bf16.mxu0 0
  %1926 = vmatmul.mubr.bf16.gmra.mrb[0].mxu0 %v1721
  %v1927 = vpop.f32.mrb[0].mxu0
  %v1928 = vadd.f32 0.0, %v1927
  %v1929 = vpop.f32.mrb[0].mxu0
  %v1930 = vpop.f32.mrb[0].mxu0
  %v1931 = vadd.f32 0.0, %v1930
  %v1932 = vpop.f32.mrb[0].mxu0
  %1933 = vmatprep.mubr.bf16.mxu0 0
  %1934 = vmatmul.mubr.bf16.gmra.mrb[0].mxu0 %v1722
  %v1935 = vpop.f32.mrb[0].mxu0
  %v1936 = vadd.f32 0.0, %v1935
  %v1937 = vpop.f32.mrb[0].mxu0
  %v1938 = vpop.f32.mrb[0].mxu0
  %v1939 = vadd.f32 0.0, %v1938
  %v1940 = vpop.f32.mrb[0].mxu0
  %1941 = vmatprep.mubr.bf16.mxu0 0
  %1942 = vmatmul.mubr.bf16.gmra.mrb[0].mxu0 %v1723
  %v1943 = vpop.f32.mrb[0].mxu0
  %v1944 = vadd.f32 0.0, %v1943
  %v1945 = vpop.f32.mrb[0].mxu0
  %v1946 = vpop.f32.mrb[0].mxu0
  %v1947 = vadd.f32 0.0, %v1946
  %v1948 = vpop.f32.mrb[0].mxu0
  %1949 = vmatprep.mubr.bf16.mxu0 0
  %1950 = vmatmul.mubr.bf16.gmra.mrb[0].mxu0 %v1724
  %v1951 = vpop.f32.mrb[0].mxu0
  %v1952 = vadd.f32 0.0, %v1951
  %v1953 = vpop.f32.mrb[0].mxu0
  %v1954 = vpop.f32.mrb[0].mxu0
  %v1955 = vadd.f32 0.0, %v1954
  %v1956 = vpop.f32.mrb[0].mxu0
  %1957 = vmatprep.mubr.bf16.mxu0 0
  %1958 = vmatmul.mubr.bf16.gmra.mrb[0].mxu0 %v1725
  %v1959 = vpop.f32.mrb[0].mxu0
  %v1960 = vadd.f32 0.0, %v1959
  %v1961 = vpop.f32.mrb[0].mxu0
  %v1962 = vpop.f32.mrb[0].mxu0
  %v1963 = vadd.f32 0.0, %v1962
  %v1964 = vpop.f32.mrb[0].mxu0
  %1965 = vmatprep.mubr.bf16.mxu0 0
  %1966 = vmatmul.mubr.bf16.gmra.mrb[0].mxu0 %v1726
  %v1967 = vpop.f32.mrb[0].mxu0
  %v1968 = vadd.f32 0.0, %v1967
  %v1969 = vpop.f32.mrb[0].mxu0
  %v1970 = vpop.f32.mrb[0].mxu0
  %v1971 = vadd.f32 0.0, %v1970
  %v1972 = vpop.f32.mrb[0].mxu0
  %1973 = vmatprep.mubr.bf16.mxu0 0
  %1974 = vmatmul.mubr.bf16.gmra.mrb[0].mxu0 %v1727
  %v1975 = vpop.f32.mrb[0].mxu0
  %v1976 = vadd.f32 0.0, %v1975
  %v1977 = vpop.f32.mrb[0].mxu0
  %v1978 = vpop.f32.mrb[0].mxu0
  %v1979 = vadd.f32 0.0, %v1978
  %v1980 = vpop.f32.mrb[0].mxu0
  %1981 = vmatprep.mubr.bf16.mxu0 0
  %1982 = vmatmul.mubr.bf16.gmra.mrb[0].mxu0 %v1728
  %v1983 = vpop.f32.mrb[0].mxu0
  %v1984 = vadd.f32 0.0, %v1983
  %v1985 = vpop.f32.mrb[0].mxu0
  %v1986 = vpop.f32.mrb[0].mxu0
  %v1987 = vadd.f32 0.0, %v1986
  %v1988 = vpop.f32.mrb[0].mxu0
  %1989 = vmatprep.mubr.bf16.mxu0 0
  %1990 = vmatmul.mubr.bf16.gmra.mrb[0].mxu0 %v1729
  %v1991 = vpop.f32.mrb[0].mxu0
  %v1992 = vadd.f32 0.0, %v1991
  %v1993 = vpop.f32.mrb[0].mxu0
  %v1994 = vpop.f32.mrb[0].mxu0
  %v1995 = vadd.f32 0.0, %v1994
  %v1996 = vpop.f32.mrb[0].mxu0
  %1997 = vmatprep.mubr.bf16.mxu0 0
  %1998 = vmatmul.mubr.bf16.gmra.mrb[0].mxu0 %v1730
  %v1999 = vpop.f32.mrb[0].mxu0
  %v2000 = vadd.f32 0.0, %v1999
  %v2001 = vpop.f32.mrb[0].mxu0
  %v2002 = vpop.f32.mrb[0].mxu0
  %v2003 = vadd.f32 0.0, %v2002
  %v2004 = vpop.f32.mrb[0].mxu0
  %2005 = vmatprep.mubr.bf16.mxu0 0
  %2006 = vmatmul.mubr.bf16.gmra.mrb[0].mxu0 %v1731
  %v2007 = vpop.f32.mrb[0].mxu0
  %v2008 = vadd.f32 0.0, %v2007
  %v2009 = vpop.f32.mrb[0].mxu0
  %v2010 = vpop.f32.mrb[0].mxu0
  %v2011 = vadd.f32 0.0, %v2010
  %v2012 = vpop.f32.mrb[0].mxu0
  %2013 = vmatprep.mubr.bf16.mxu0 0
  %2014 = vmatmul.mubr.bf16.gmra.mrb[0].mxu0 %v1732
  %v2015 = vpop.f32.mrb[0].mxu0
  %v2016 = vadd.f32 0.0, %v2015
  %v2017 = vpop.f32.mrb[0].mxu0
  %v2018 = vpop.f32.mrb[0].mxu0
  %v2019 = vadd.f32 0.0, %v2018
  %v2020 = vpop.f32.mrb[0].mxu0
  %2021 = vmatprep.mubr.bf16.mxu0 0
  %2022 = vmatmul.mubr.bf16.gmra.mrb[0].mxu0 %v1733
  %v2023 = vpop.f32.mrb[0].mxu0
  %v2024 = vadd.f32 0.0, %v2023
  %v2025 = vpop.f32.mrb[0].mxu0
  %v2026 = vpop.f32.mrb[0].mxu0
  %v2027 = vadd.f32 0.0, %v2026
  %v2028 = vpop.f32.mrb[0].mxu0
  %2029 = vmatprep.mubr.bf16.mxu0 0
  %2030 = vmatmul.mubr.bf16.gmra.mrb[0].mxu0 %v1734
  %v2031 = vpop.f32.mrb[0].mxu0
  %v2032 = vadd.f32 0.0, %v2031
  %v2033 = vpop.f32.mrb[0].mxu0
  %v2034 = vpop.f32.mrb[0].mxu0
  %v2035 = vadd.f32 0.0, %v2034
  %v2036 = vpop.f32.mrb[0].mxu0
  %2037 = vmatprep.mubr.bf16.mxu0 0
  %2038 = vmatmul.mubr.bf16.gmra.mrb[0].mxu0 %v1735
  %v2039 = vpop.f32.mrb[0].mxu0
  %v2040 = vadd.f32 0.0, %v2039
  %v2041 = vpop.f32.mrb[0].mxu0
  %v2042 = vpop.f32.mrb[0].mxu0
  %v2043 = vadd.f32 0.0, %v2042
  %v2044 = vpop.f32.mrb[0].mxu0
  %2045 = vmatprep.mubr.bf16.mxu0 0
  %2046 = vmatmul.mubr.bf16.gmra.mrb[0].mxu0 %v1736
  %v2047 = vpop.f32.mrb[0].mxu0
  %v2048 = vadd.f32 0.0, %v2047
  %v2049 = vpop.f32.mrb[0].mxu0
  %v2050 = vpop.f32.mrb[0].mxu0
  %v2051 = vadd.f32 0.0, %v2050
  %v2052 = vpop.f32.mrb[0].mxu0
  %2053 = vmatprep.mubr.bf16.mxu0 0
  %2054 = vmatmul.mubr.bf16.gmra.mrb[0].mxu0 %v1737
  %v2055 = vpop.f32.mrb[0].mxu0
  %v2056 = vadd.f32 0.0, %v2055
  %v2057 = vpop.f32.mrb[0].mxu0
  %v2058 = vpop.f32.mrb[0].mxu0
  %v2059 = vadd.f32 0.0, %v2058
  %v2060 = vpop.f32.mrb[0].mxu0
  %2061 = vmatprep.mubr.bf16.mxu0 0
  %2062 = vmatmul.mubr.bf16.gmra.mrb[0].mxu0 %v1738
  %v2063 = vpop.f32.mrb[0].mxu0
  %v2064 = vadd.f32 0.0, %v2063
  %v2065 = vpop.f32.mrb[0].mxu0
  %v2066 = vpop.f32.mrb[0].mxu0
  %v2067 = vadd.f32 0.0, %v2066
  %v2068 = vpop.f32.mrb[0].mxu0
  %2069 = vmatprep.mubr.bf16.mxu0 0
  %2070 = vmatmul.mubr.bf16.gmra.mrb[0].mxu0 %v1739
  %v2071 = vpop.f32.mrb[0].mxu0
  %v2072 = vadd.f32 0.0, %v2071
  %v2073 = vpop.f32.mrb[0].mxu0
  %v2074 = vpop.f32.mrb[0].mxu0
  %v2075 = vadd.f32 0.0, %v2074
  %v2076 = vpop.f32.mrb[0].mxu0
  %2077 = vmatprep.mubr.bf16.mxu0 0
  %2078 = vmatmul.mubr.bf16.gmra.mrb[0].mxu0 %v1740
  %v2079 = vpop.f32.mrb[0].mxu0
  %v2080 = vadd.f32 0.0, %v2079
  %v2081 = vpop.f32.mrb[0].mxu0
  %v2082 = vpop.f32.mrb[0].mxu0
  %v2083 = vadd.f32 0.0, %v2082
  %v2084 = vpop.f32.mrb[0].mxu0
  %2085 = vmatprep.mubr.bf16.mxu0 0
  %2086 = vmatmul.mubr.bf16.gmra.mrb[0].mxu0 %v1741
  %v2087 = vpop.f32.mrb[0].mxu0
  %v2088 = vadd.f32 0.0, %v2087
  %v2089 = vpop.f32.mrb[0].mxu0
  %v2090 = vpop.f32.mrb[0].mxu0
  %v2091 = vadd.f32 0.0, %v2090
  %v2092 = vpop.f32.mrb[0].mxu0
  %2093 = vmatprep.mubr.bf16.mxu0 0
  %2094 = vmatmul.mubr.bf16.gmra.mrb[0].mxu0 %v1742
  %v2095 = vpop.f32.mrb[0].mxu0
  %v2096 = vadd.f32 0.0, %v2095
  %v2097 = vpop.f32.mrb[0].mxu0
  %v2098 = vpop.f32.mrb[0].mxu0
  %v2099 = vadd.f32 0.0, %v2098
  %v2100 = vpop.f32.mrb[0].mxu0
  %2101 = vmatprep.mubr.bf16.mxu0 0
  %2102 = vmatmul.mubr.bf16.gmra.mrb[0].mxu0 %v1743
  %v2103 = vpop.f32.mrb[0].mxu0
  %v2104 = vadd.f32 0.0, %v2103
  %v2105 = vpop.f32.mrb[0].mxu0
  %v2106 = vpop.f32.mrb[0].mxu0
  %v2107 = vadd.f32 0.0, %v2106
  %v2108 = vpop.f32.mrb[0].mxu0
  %2109 = vmatprep.mubr.bf16.mxu0 0
  %2110 = vmatmul.mubr.bf16.gmra.mrb[0].mxu0 %v1744
  %v2111 = vpop.f32.mrb[0].mxu0
  %v2112 = vadd.f32 0.0, %v2111
  %v2113 = vpop.f32.mrb[0].mxu0
  %v2114 = vpop.f32.mrb[0].mxu0
  %v2115 = vadd.f32 0.0, %v2114
  %v2116 = vpop.f32.mrb[0].mxu0
  %2117 = vmatprep.mubr.bf16.mxu0 0
  %2118 = vmatmul.mubr.bf16.gmra.mrb[0].mxu0 %v1745
  %v2119 = vpop.f32.mrb[0].mxu0
  %v2120 = vadd.f32 0.0, %v2119
  %v2121 = vpop.f32.mrb[0].mxu0
  %v2122 = vpop.f32.mrb[0].mxu0
  %v2123 = vadd.f32 0.0, %v2122
  %v2124 = vpop.f32.mrb[0].mxu0
  %2125 = vmatprep.mubr.bf16.mxu0 0
  %2126 = vmatmul.mubr.bf16.gmra.mrb[0].mxu0 %v1746
  %v2127 = vpop.f32.mrb[0].mxu0
  %v2128 = vadd.f32 0.0, %v2127
  %v2129 = vpop.f32.mrb[0].mxu0
  %v2130 = vpop.f32.mrb[0].mxu0
  %v2131 = vadd.f32 0.0, %v2130
  %v2132 = vpop.f32.mrb[0].mxu0
  %2133 = vmatprep.mubr.bf16.mxu0 0
  %2134 = vmatmul.mubr.bf16.gmra.mrb[0].mxu0 %v1747
  %v2135 = vpop.f32.mrb[0].mxu0
  %v2136 = vadd.f32 0.0, %v2135
  %v2137 = vpop.f32.mrb[0].mxu0
  %v2138 = vpop.f32.mrb[0].mxu0
  %v2139 = vadd.f32 0.0, %v2138
  %v2140 = vpop.f32.mrb[0].mxu0
  %2141 = vmatprep.mubr.bf16.mxu0 0
  %2142 = vmatmul.mubr.bf16.gmra.mrb[0].mxu0 %v1748
  %v2143 = vpop.f32.mrb[0].mxu0
  %v2144 = vadd.f32 0.0, %v2143
  %v2145 = vpop.f32.mrb[0].mxu0
  %v2146 = vpop.f32.mrb[0].mxu0
  %v2147 = vadd.f32 0.0, %v2146
  %v2148 = vpop.f32.mrb[0].mxu0
  %2149 = vmatprep.mubr.bf16.mxu0 0
  %2150 = vmatmul.mubr.bf16.gmra.mrb[0].mxu0 %v1749
  %v2151 = vpop.f32.mrb[0].mxu0
  %v2152 = vadd.f32 0.0, %v2151
  %v2153 = vpop.f32.mrb[0].mxu0
  %v2154 = vpop.f32.mrb[0].mxu0
  %v2155 = vadd.f32 0.0, %v2154
  %v2156 = vpop.f32.mrb[0].mxu0
  %2157 = vmatprep.mubr.bf16.mxu0 0
  %2158 = vmatmul.mubr.bf16.gmra.mrb[0].mxu0 %v1750
  %v2159 = vpop.f32.mrb[0].mxu0
  %v2160 = vadd.f32 0.0, %v2159
  %v2161 = vpop.f32.mrb[0].mxu0
  %v2162 = vpop.f32.mrb[0].mxu0
  %v2163 = vadd.f32 0.0, %v2162
  %v2164 = vpop.f32.mrb[0].mxu0
  %2165 = vmatprep.mubr.bf16.mxu0 0
  %2166 = vmatmul.mubr.bf16.gmra.mrb[0].mxu0 %v1751
  %v2167 = vpop.f32.mrb[0].mxu0
  %v2168 = vadd.f32 0.0, %v2167
  %v2169 = vpop.f32.mrb[0].mxu0
  %v2170 = vpop.f32.mrb[0].mxu0
  %v2171 = vadd.f32 0.0, %v2170
  %v2172 = vpop.f32.mrb[0].mxu0
  %2173 = vmatprep.mubr.bf16.mxu0 0
  %2174 = vmatmul.mubr.bf16.gmra.mrb[0].mxu0 %v1752
  %v2175 = vpop.f32.mrb[0].mxu0
  %v2176 = vadd.f32 0.0, %v2175
  %v2177 = vpop.f32.mrb[0].mxu0
  %v2178 = vpop.f32.mrb[0].mxu0
  %v2179 = vadd.f32 0.0, %v2178
  %v2180 = vpop.f32.mrb[0].mxu0
  %2181 = vmatprep.mubr.bf16.mxu0 0
  %2182 = vmatmul.mubr.bf16.gmra.mrb[0].mxu0 %v1753
  %v2183 = vpop.f32.mrb[0].mxu0
  %v2184 = vadd.f32 0.0, %v2183
  %v2185 = vpop.f32.mrb[0].mxu0
  %v2186 = vpop.f32.mrb[0].mxu0
  %v2187 = vadd.f32 0.0, %v2186
  %v2188 = vpop.f32.mrb[0].mxu0
  %2189 = vmatprep.mubr.bf16.mxu0 0
  %2190 = vmatmul.mubr.bf16.gmra.mrb[0].mxu0 %v1754
  %v2191 = vpop.f32.mrb[0].mxu0
  %v2192 = vadd.f32 0.0, %v2191
  %v2193 = vpop.f32.mrb[0].mxu0
  %v2194 = vpop.f32.mrb[0].mxu0
  %v2195 = vadd.f32 0.0, %v2194
  %v2196 = vpop.f32.mrb[0].mxu0
  %2197 = vmatprep.mubr.bf16.mxu0 0
  %2198 = vmatmul.mubr.bf16.gmra.mrb[0].mxu0 %v1755
  %v2199 = vpop.f32.mrb[0].mxu0
  %v2200 = vadd.f32 0.0, %v2199
  %v2201 = vpop.f32.mrb[0].mxu0
  %v2202 = vpop.f32.mrb[0].mxu0
  %v2203 = vadd.f32 0.0, %v2202
  %v2204 = vpop.f32.mrb[0].mxu0
  %2205 = vmatprep.mubr.bf16.mxu0 0
  %2206 = vmatmul.mubr.bf16.gmra.mrb[0].mxu0 %v1756
  %v2207 = vpop.f32.mrb[0].mxu0
  %v2208 = vadd.f32 0.0, %v2207
  %v2209 = vpop.f32.mrb[0].mxu0
  %v2210 = vpop.f32.mrb[0].mxu0
  %v2211 = vadd.f32 0.0, %v2210
  %v2212 = vpop.f32.mrb[0].mxu0
  %2213 = vmatprep.mubr.bf16.mxu0 0
  %2214 = vmatmul.mubr.bf16.gmra.mrb[0].mxu0 %v1757
  %v2215 = vpop.f32.mrb[0].mxu0
  %v2216 = vadd.f32 0.0, %v2215
  %v2217 = vpop.f32.mrb[0].mxu0
  %v2218 = vpop.f32.mrb[0].mxu0
  %v2219 = vadd.f32 0.0, %v2218
  %v2220 = vpop.f32.mrb[0].mxu0
  %2221 = vmatprep.mubr.bf16.mxu0 0
  %2222 = vmatmul.mubr.bf16.gmra.mrb[0].mxu0 %v1758
  %v2223 = vpop.f32.mrb[0].mxu0
  %v2224 = vadd.f32 0.0, %v2223
  %v2225 = vpop.f32.mrb[0].mxu0
  %v2226 = vpop.f32.mrb[0].mxu0
  %v2227 = vadd.f32 0.0, %v2226
  %v2228 = vpop.f32.mrb[0].mxu0
  %2229 = vmatprep.mubr.bf16.mxu0 0
  %2230 = vmatmul.mubr.bf16.gmra.mrb[0].mxu0 %v1759
  %v2231 = vpop.f32.mrb[0].mxu0
  %v2232 = vadd.f32 0.0, %v2231
  %v2233 = vpop.f32.mrb[0].mxu0
  %v2234 = vpop.f32.mrb[0].mxu0
  %v2235 = vadd.f32 0.0, %v2234
  %v2236 = vpop.f32.mrb[0].mxu0
  %2237 = vmatprep.mubr.bf16.mxu0 0
  %2238 = vmatmul.mubr.bf16.gmra.mrb[0].mxu0 %v1760
  %v2239 = vpop.f32.mrb[0].mxu0
  %v2240 = vadd.f32 0.0, %v2239
  %v2241 = vpop.f32.mrb[0].mxu0
  %v2242 = vpop.f32.mrb[0].mxu0
  %v2243 = vadd.f32 0.0, %v2242
  %v2244 = vpop.f32.mrb[0].mxu0
  %2245 = vmatprep.mubr.bf16.mxu0 0
  %2246 = vmatmul.mubr.bf16.gmra.mrb[0].mxu0 %v1761
  %v2247 = vpop.f32.mrb[0].mxu0
  %v2248 = vadd.f32 0.0, %v2247
  %v2249 = vpop.f32.mrb[0].mxu0
  %v2250 = vpop.f32.mrb[0].mxu0
  %v2251 = vadd.f32 0.0, %v2250
  %v2252 = vpop.f32.mrb[0].mxu0
  %2253 = vmatprep.mubr.bf16.mxu0 0
  %2254 = vmatmul.mubr.bf16.gmra.mrb[0].mxu0 %v1762
  %v2255 = vpop.f32.mrb[0].mxu0
  %v2256 = vadd.f32 0.0, %v2255
  %v2257 = vpop.f32.mrb[0].mxu0
  %v2258 = vpop.f32.mrb[0].mxu0
  %v2259 = vadd.f32 0.0, %v2258
  %v2260 = vpop.f32.mrb[0].mxu0
  %2261 = vmatprep.mubr.bf16.mxu0 0
  %2262 = vmatmul.mubr.bf16.gmra.mrb[0].mxu0 %v1763
  %v2263 = vpop.f32.mrb[0].mxu0
  %v2264 = vadd.f32 0.0, %v2263
  %v2265 = vpop.f32.mrb[0].mxu0
  %v2266 = vpop.f32.mrb[0].mxu0
  %v2267 = vadd.f32 0.0, %v2266
  %v2268 = vpop.f32.mrb[0].mxu0
  %2269 = vmatprep.mubr.bf16.mxu0 0
  %2270 = vmatmul.mubr.bf16.gmra.mrb[0].mxu0 %v1764
  %v2271 = vpop.f32.mrb[0].mxu0
  %v2272 = vadd.f32 0.0, %v2271
  %v2273 = vpop.f32.mrb[0].mxu0
  %v2274 = vpop.f32.mrb[0].mxu0
  %v2275 = vadd.f32 0.0, %v2274
  %v2276 = vpop.f32.mrb[0].mxu0
  %2277 = vmatprep.mubr.bf16.mxu0 0
  %2278 = vmatmul.mubr.bf16.gmra.mrb[0].mxu0 %v1765
  %v2279 = vpop.f32.mrb[0].mxu0
  %v2280 = vadd.f32 0.0, %v2279
  %v2281 = vpop.f32.mrb[0].mxu0
  %v2282 = vpop.f32.mrb[0].mxu0
  %v2283 = vadd.f32 0.0, %v2282
  %v2284 = vpop.f32.mrb[0].mxu0
  %2285 = vmatprep.mubr.bf16.mxu0 0
  %2286 = vmatmul.mubr.bf16.gmra.mrb[0].mxu0 %v1766
  %v2287 = vpop.f32.mrb[0].mxu0
  %v2288 = vadd.f32 0.0, %v2287
  %v2289 = vpop.f32.mrb[0].mxu0
  %v2290 = vpop.f32.mrb[0].mxu0
  %v2291 = vadd.f32 0.0, %v2290
  %v2292 = vpop.f32.mrb[0].mxu0
  %2293 = vmatprep.mubr.bf16.mxu0 0
  %2294 = vmatmul.mubr.bf16.gmra.mrb[0].mxu0 %v1767
  %v2295 = vpop.f32.mrb[0].mxu0
  %v2296 = vadd.f32 0.0, %v2295
  %v2297 = vpop.f32.mrb[0].mxu0
  %v2298 = vpop.f32.mrb[0].mxu0
  %v2299 = vadd.f32 0.0, %v2298
  %v2300 = vpop.f32.mrb[0].mxu0
  %2301 = vmatprep.mubr.bf16.mxu0 0
  %2302 = vmatmul.mubr.bf16.gmra.mrb[0].mxu0 %v1768
  %v2303 = vpop.f32.mrb[0].mxu0
  %v2304 = vadd.f32 0.0, %v2303
  %v2305 = vpop.f32.mrb[0].mxu0
  %v2306 = vpop.f32.mrb[0].mxu0
  %v2307 = vadd.f32 0.0, %v2306
  %v2308 = vpop.f32.mrb[0].mxu0
  %2309 = vmatprep.mubr.bf16.mxu0 0
  %2310 = vmatmul.mubr.bf16.gmra.mrb[0].mxu0 %v1769
  %v2311 = vpop.f32.mrb[0].mxu0
  %v2312 = vadd.f32 0.0, %v2311
  %v2313 = vpop.f32.mrb[0].mxu0
  %v2314 = vpop.f32.mrb[0].mxu0
  %v2315 = vadd.f32 0.0, %v2314
  %v2316 = vpop.f32.mrb[0].mxu0
  %2317 = vmatprep.mubr.bf16.mxu0 0
  %2318 = vmatmul.mubr.bf16.gmra.mrb[0].mxu0 %v1770
  %v2319 = vpop.f32.mrb[0].mxu0
  %v2320 = vadd.f32 0.0, %v2319
  %v2321 = vpop.f32.mrb[0].mxu0
  %v2322 = vpop.f32.mrb[0].mxu0
  %v2323 = vadd.f32 0.0, %v2322
  %v2324 = vpop.f32.mrb[0].mxu0
  %2325 = vmatprep.mubr.bf16.mxu0 0
  %2326 = vmatmul.mubr.bf16.gmra.mrb[0].mxu0 %v1771
  %v2327 = vpop.f32.mrb[0].mxu0
  %v2328 = vadd.f32 0.0, %v2327
  %v2329 = vpop.f32.mrb[0].mxu0
  %v2330 = vpop.f32.mrb[0].mxu0
  %v2331 = vadd.f32 0.0, %v2330
  %v2332 = vpop.f32.mrb[0].mxu0
  %2333 = vmatprep.mubr.bf16.mxu0 0
  %2334 = vmatmul.mubr.bf16.gmra.mrb[0].mxu0 %v1772
  %v2335 = vpop.f32.mrb[0].mxu0
  %v2336 = vadd.f32 0.0, %v2335
  %v2337 = vpop.f32.mrb[0].mxu0
  %v2338 = vpop.f32.mrb[0].mxu0
  %v2339 = vadd.f32 0.0, %v2338
  %v2340 = vpop.f32.mrb[0].mxu0
  %2341 = vmatprep.mubr.bf16.mxu0 0
  %2342 = vmatmul.mubr.bf16.gmra.mrb[0].mxu0 %v1773
  %v2343 = vpop.f32.mrb[0].mxu0
  %v2344 = vadd.f32 0.0, %v2343
  %v2345 = vpop.f32.mrb[0].mxu0
  %v2346 = vpop.f32.mrb[0].mxu0
  %v2347 = vadd.f32 0.0, %v2346
  %v2348 = vpop.f32.mrb[0].mxu0
  %2349 = vmatprep.mubr.bf16.mxu0 0
  %2350 = vmatmul.mubr.bf16.gmra.mrb[0].mxu0 %v1774
  %v2351 = vpop.f32.mrb[0].mxu0
  %v2352 = vadd.f32 0.0, %v2351
  %v2353 = vpop.f32.mrb[0].mxu0
  %v2354 = vpop.f32.mrb[0].mxu0
  %v2355 = vadd.f32 0.0, %v2354
  %v2356 = vpop.f32.mrb[0].mxu0
  %2357 = vmatprep.mubr.bf16.mxu0 0
  %2358 = vmatmul.mubr.bf16.gmra.mrb[0].mxu0 %v1775
  %v2359 = vpop.f32.mrb[0].mxu0
  %v2360 = vadd.f32 0.0, %v2359
  %v2361 = vpop.f32.mrb[0].mxu0
  %v2362 = vpop.f32.mrb[0].mxu0
  %v2363 = vadd.f32 0.0, %v2362
  %v2364 = vpop.f32.mrb[0].mxu0
  %2365 = vmatprep.mubr.bf16.mxu0 0
  %2366 = vmatmul.mubr.bf16.gmra.mrb[0].mxu0 %v1776
  %v2367 = vpop.f32.mrb[0].mxu0
  %v2368 = vadd.f32 0.0, %v2367
  %v2369 = vpop.f32.mrb[0].mxu0
  %v2370 = vpop.f32.mrb[0].mxu0
  %v2371 = vadd.f32 0.0, %v2370
  %v2372 = vpop.f32.mrb[0].mxu0
  %2373 = vmatprep.mubr.bf16.mxu0 0
  %2374 = vmatmul.mubr.bf16.gmra.mrb[0].mxu0 %v1777
  %v2375 = vpop.f32.mrb[0].mxu0
  %v2376 = vadd.f32 0.0, %v2375
  %v2377 = vpop.f32.mrb[0].mxu0
  %v2378 = vpop.f32.mrb[0].mxu0
  %v2379 = vadd.f32 0.0, %v2378
  %v2380 = vpop.f32.mrb[0].mxu0
  %2381 = vmatprep.mubr.bf16.mxu0 0
  %2382 = vmatmul.mubr.bf16.gmra.mrb[0].mxu0 %v1778
  %v2383 = vpop.f32.mrb[0].mxu0
  %v2384 = vadd.f32 0.0, %v2383
  %v2385 = vpop.f32.mrb[0].mxu0
  %v2386 = vpop.f32.mrb[0].mxu0
  %v2387 = vadd.f32 0.0, %v2386
  %v2388 = vpop.f32.mrb[0].mxu0
  %2389 = vmatprep.mubr.bf16.mxu0 0
  %2390 = vmatmul.mubr.bf16.gmra.mrb[0].mxu0 %v1779
  %v2391 = vpop.f32.mrb[0].mxu0
  %v2392 = vadd.f32 0.0, %v2391
  %v2393 = vpop.f32.mrb[0].mxu0
  %v2394 = vpop.f32.mrb[0].mxu0
  %v2395 = vadd.f32 0.0, %v2394
  %v2396 = vpop.f32.mrb[0].mxu0
  %2397 = vmatprep.mubr.bf16.mxu0 0
  %2398 = vmatmul.mubr.bf16.gmra.mrb[0].mxu0 %v1780
  %v2399 = vpop.f32.mrb[0].mxu0
  %v2400 = vadd.f32 0.0, %v2399
  %v2401 = vpop.f32.mrb[0].mxu0
  %v2402 = vpop.f32.mrb[0].mxu0
  %v2403 = vadd.f32 0.0, %v2402
  %v2404 = vpop.f32.mrb[0].mxu0
  %2405 = vmatprep.mubr.bf16.mxu0 0
  %2406 = vmatmul.mubr.bf16.gmra.mrb[0].mxu0 %v1781
  %v2407 = vpop.f32.mrb[0].mxu0
  %v2408 = vadd.f32 0.0, %v2407
  %v2409 = vpop.f32.mrb[0].mxu0
  %v2410 = vpop.f32.mrb[0].mxu0
  %v2411 = vadd.f32 0.0, %v2410
  %v2412 = vpop.f32.mrb[0].mxu0
  %2413 = vmatprep.mubr.bf16.mxu0 0
  %2414 = vmatmul.mubr.bf16.gmra.mrb[0].mxu0 %v1782
  %v2415 = vpop.f32.mrb[0].mxu0
  %v2416 = vadd.f32 0.0, %v2415
  %v2417 = vpop.f32.mrb[0].mxu0
  %v2418 = vpop.f32.mrb[0].mxu0
  %v2419 = vadd.f32 0.0, %v2418
  %v2420 = vpop.f32.mrb[0].mxu0
  %2421 = vmatprep.mubr.bf16.mxu0 0
  %2422 = vmatmul.mubr.bf16.gmra.mrb[0].mxu0 %v1783
  %v2423 = vpop.f32.mrb[0].mxu0
  %v2424 = vadd.f32 0.0, %v2423
  %v2425 = vpop.f32.mrb[0].mxu0
  %v2426 = vpop.f32.mrb[0].mxu0
  %v2427 = vadd.f32 0.0, %v2426
  %v2428 = vpop.f32.mrb[0].mxu0
  %2429 = vmatprep.mubr.bf16.mxu0 0
  %2430 = vmatmul.mubr.bf16.gmra.mrb[0].mxu0 %v1784
  %v2431 = vpop.f32.mrb[0].mxu0
  %v2432 = vadd.f32 0.0, %v2431
  %v2433 = vpop.f32.mrb[0].mxu0
  %v2434 = vpop.f32.mrb[0].mxu0
  %v2435 = vadd.f32 0.0, %v2434
  %v2436 = vpop.f32.mrb[0].mxu0
  %2437 = vmatprep.mubr.bf16.mxu0 0
  %2438 = vmatmul.mubr.bf16.gmra.mrb[0].mxu0 %v1785
  %v2439 = vpop.f32.mrb[0].mxu0
  %v2440 = vadd.f32 0.0, %v2439
  %v2441 = vpop.f32.mrb[0].mxu0
  %v2442 = vpop.f32.mrb[0].mxu0
  %v2443 = vadd.f32 0.0, %v2442
  %v2444 = vpop.f32.mrb[0].mxu0
  %2445 = vmatprep.mubr.bf16.mxu0 0
  %2446 = vmatmul.mubr.bf16.gmra.mrb[0].mxu0 %v1786
  %v2447 = vpop.f32.mrb[0].mxu0
  %v2448 = vadd.f32 0.0, %v2447
  %v2449 = vpop.f32.mrb[0].mxu0
  %v2450 = vpop.f32.mrb[0].mxu0
  %v2451 = vadd.f32 0.0, %v2450
  %v2452 = vpop.f32.mrb[0].mxu0
  %2453 = vmatprep.mubr.bf16.mxu0 0
  %2454 = vmatmul.mubr.bf16.gmra.mrb[0].mxu0 %v1787
  %v2455 = vpop.f32.mrb[0].mxu0
  %v2456 = vadd.f32 0.0, %v2455
  %v2457 = vpop.f32.mrb[0].mxu0
  %v2458 = vpop.f32.mrb[0].mxu0
  %v2459 = vadd.f32 0.0, %v2458
  %v2460 = vpop.f32.mrb[0].mxu0
  %2461 = vmatprep.mubr.bf16.mxu0 0
  %2462 = vmatmul.mubr.bf16.gmra.mrb[0].mxu0 %v1788
  %v2463 = vpop.f32.mrb[0].mxu0
  %v2464 = vadd.f32 0.0, %v2463
  %v2465 = vpop.f32.mrb[0].mxu0
  %v2466 = vpop.f32.mrb[0].mxu0
  %v2467 = vadd.f32 0.0, %v2466
  %v2468 = vpop.f32.mrb[0].mxu0
  %2469 = vdwg.mxu0
  %v2470 = vpack.c.bf16 %v1899, %v1896
  %v2471 = vpack.c.bf16 %v1907, %v1904
  %v2472 = vpack.c.bf16 %v1915, %v1912
  %v2473 = vpack.c.bf16 %v1923, %v1920
  %v2474 = vpack.c.bf16 %v1931, %v1928
  %v2475 = vpack.c.bf16 %v1939, %v1936
  %v2476 = vpack.c.bf16 %v1947, %v1944
  %v2477 = vpack.c.bf16 %v1955, %v1952
  %v2478 = vpack.c.bf16 %v1963, %v1960
  %v2479 = vpack.c.bf16 %v1971, %v1968
  %v2480 = vpack.c.bf16 %v1979, %v1976
  %v2481 = vpack.c.bf16 %v1987, %v1984
  %v2482 = vpack.c.bf16 %v1995, %v1992
  %v2483 = vpack.c.bf16 %v2003, %v2000
  %v2484 = vpack.c.bf16 %v2011, %v2008
  %v2485 = vpack.c.bf16 %v2019, %v2016
  %v2486 = vpack.c.bf16 %v2027, %v2024
  %v2487 = vpack.c.bf16 %v2035, %v2032
  %v2488 = vpack.c.bf16 %v2043, %v2040
  %v2489 = vpack.c.bf16 %v2051, %v2048
  %v2490 = vpack.c.bf16 %v2059, %v2056
  %v2491 = vpack.c.bf16 %v2067, %v2064
  %v2492 = vpack.c.bf16 %v2075, %v2072
  %v2493 = vpack.c.bf16 %v2083, %v2080
  %v2494 = vpack.c.bf16 %v2091, %v2088
  %v2495 = vpack.c.bf16 %v2099, %v2096
  %v2496 = vpack.c.bf16 %v2107, %v2104
  %v2497 = vpack.c.bf16 %v2115, %v2112
  %v2498 = vpack.c.bf16 %v2123, %v2120
  %v2499 = vpack.c.bf16 %v2131, %v2128
  %v2500 = vpack.c.bf16 %v2139, %v2136
  %v2501 = vpack.c.bf16 %v2147, %v2144
  %v2502 = vpack.c.bf16 %v2155, %v2152
  %v2503 = vpack.c.bf16 %v2163, %v2160
  %v2504 = vpack.c.bf16 %v2171, %v2168
  %v2505 = vpack.c.bf16 %v2179, %v2176
  %v2506 = vpack.c.bf16 %v2187, %v2184
  %v2507 = vpack.c.bf16 %v2195, %v2192
  %v2508 = vpack.c.bf16 %v2203, %v2200
  %v2509 = vpack.c.bf16 %v2211, %v2208
  %v2510 = vpack.c.bf16 %v2219, %v2216
  %v2511 = vpack.c.bf16 %v2227, %v2224
  %v2512 = vpack.c.bf16 %v2235, %v2232
  %v2513 = vpack.c.bf16 %v2243, %v2240
  %v2514 = vpack.c.bf16 %v2251, %v2248
  %v2515 = vpack.c.bf16 %v2259, %v2256
  %v2516 = vpack.c.bf16 %v2267, %v2264
  %v2517 = vpack.c.bf16 %v2275, %v2272
  %v2518 = vpack.c.bf16 %v2283, %v2280
  %v2519 = vpack.c.bf16 %v2291, %v2288
  %v2520 = vpack.c.bf16 %v2299, %v2296
  %v2521 = vpack.c.bf16 %v2307, %v2304
  %v2522 = vpack.c.bf16 %v2315, %v2312
  %v2523 = vpack.c.bf16 %v2323, %v2320
  %v2524 = vpack.c.bf16 %v2331, %v2328
  %v2525 = vpack.c.bf16 %v2339, %v2336
  %v2526 = vpack.c.bf16 %v2347, %v2344
  %v2527 = vpack.c.bf16 %v2355, %v2352
  %v2528 = vpack.c.bf16 %v2363, %v2360
  %v2529 = vpack.c.bf16 %v2371, %v2368
  %v2530 = vpack.c.bf16 %v2379, %v2376
  %v2531 = vpack.c.bf16 %v2387, %v2384
  %v2532 = vpack.c.bf16 %v2395, %v2392
  %v2533 = vpack.c.bf16 %v2403, %v2400
  %v2534 = vpack.c.bf16 %v2411, %v2408
  %v2535 = vpack.c.bf16 %v2419, %v2416
  %v2536 = vpack.c.bf16 %v2427, %v2424
  %v2537 = vpack.c.bf16 %v2435, %v2432
  %v2538 = vpack.c.bf16 %v2443, %v2440
  %v2539 = vpack.c.bf16 %v2451, %v2448
  %v2540 = vpack.c.bf16 %v2459, %v2456
  %v2541 = vpack.c.bf16 %v2467, %v2464
  %v2542 = vld [vmem:[%s6] sm:$0xf]
  %v2543 = vld [vmem:[%s6 + $0x4] sm:$0xf]
  %v2544 = vld [vmem:[%s6 + $0x8] sm:$0xf]
  %v2545 = vld [vmem:[%s6 + $0xc] sm:$0xf]
  %v2546 = vld [vmem:[%s6 + $0x10] sm:$0xf]
  %v2547 = vld [vmem:[%s6 + $0x14] sm:$0xf]
  %v2548 = vld [vmem:[%s6 + $0x18] sm:$0xf]
  %v2549 = vld [vmem:[%s6 + $0x1c] sm:$0xf]
  %s2550 = scalar_lea.vmem %s6, 32
  %v2551 = vld [vmem:[%s2550] sm:$0xf]
  %v2552 = vld [vmem:[%s2550 + $0x4] sm:$0xf]
  %v2553 = vld [vmem:[%s2550 + $0x8] sm:$0xf]
  %v2554 = vld [vmem:[%s2550 + $0xc] sm:$0xf]
  %v2555 = vld [vmem:[%s2550 + $0x10] sm:$0xf]
  %v2556 = vld [vmem:[%s2550 + $0x14] sm:$0xf]
  %v2557 = vld [vmem:[%s2550 + $0x18] sm:$0xf]
  %v2558 = vld [vmem:[%s2550 + $0x1c] sm:$0xf]
  %v2567 = vunpack.c.l.b16 %v2551
  %v2568 = vunpack.c.l.b16 %v2552
  %v2569 = vunpack.c.l.b16 %v2553
  %v2570 = vunpack.c.l.b16 %v2554
  %v2571 = vunpack.c.l.b16 %v2555
  %v2572 = vunpack.c.l.b16 %v2556
  %v2573 = vunpack.c.l.b16 %v2557
  %v2574 = vunpack.c.l.b16 %v2558
  %v2575 = vpack.c.b16 %v2568, %v2567
  %v2576 = vpack.c.b16 %v2570, %v2569
  %v2577 = vpack.c.b16 %v2572, %v2571
  %v2578 = vpack.c.b16 %v2574, %v2573
  %v2584 = vsel %vm970, %v2478, 0
  %v2587 = vsel %vm970, %v2479, 0
  %v2590 = vsel %vm970, %v2480, 0
  %v2593 = vsel %vm970, %v2481, 0
  %v2596 = vsel %vm970, %v2482, 0
  %v2599 = vsel %vm970, %v2483, 0
  %v2602 = vsel %vm970, %v2484, 0
  %v2605 = vsel %vm970, %v2485, 0
  %2607 = vmatprep.subr.bf16.mxu0 0
  %2608 = vmatpush1.bf16.msra.mxu0 %v2575
  %2609 = vmatprep.subr.bf16.mxu0 0
  %2610 = vmatpush1.bf16.msra.mxu0 %v2576
  %2611 = vmatprep.subr.bf16.mxu0 0
  %2612 = vmatpush1.bf16.msra.mxu0 %v2577
  %2613 = vmatprep.subr.bf16.mxu0 0
  %2614 = vmatpush1.bf16.msra.mxu0 %v2578
  %2615 = vmatprep.subr.bf16.mxu0 0
  %2616 = vmatpush1.bf16.msra.mxu0 0
  %2617 = vmatprep.subr.bf16.mxu0 0
  %2618 = vmatpush1.bf16.msra.mxu0 0
  %2619 = vmatprep.subr.bf16.mxu0 0
  %2620 = vmatpush1.bf16.msra.mxu0 0
  %2621 = vmatprep.subr.bf16.mxu0 0
  %2622 = vmatpush1.bf16.msra.mxu0 0
  %2623 = vmatprep.subr.bf16.mxu0 0
  %2624 = vmatpush1.bf16.msra.mxu0 0
  %2625 = vmatprep.subr.bf16.mxu0 0
  %2626 = vmatpush1.bf16.msra.mxu0 0
  %2627 = vmatprep.subr.bf16.mxu0 0
  %2628 = vmatpush1.bf16.msra.mxu0 0
  %2629 = vmatprep.subr.bf16.mxu0 0
  %2630 = vmatpush1.bf16.msra.mxu0 0
  %2631 = vmatprep.subr.bf16.mxu0 0
  %2632 = vmatpush1.bf16.msra.mxu0 0
  %2633 = vmatprep.subr.bf16.mxu0 0
  %2634 = vmatpush1.bf16.msra.mxu0 0
  %2635 = vmatprep.subr.bf16.mxu0 0
  %2636 = vmatpush1.bf16.msra.mxu0 0
  %2637 = vmatprep.subr.bf16.mxu0 0
  %2638 = vmatpush1.bf16.msra.mxu0 0
  %2639 = vmatprep.mubr.bf16.mxu0 0
  %2640 = vmatmul.mubr.bf16.gmra.mrb[0].mxu0 %v2584
  %v2641 = vpop.f32.mrb[0].mxu0
  %v2642 = vadd.f32 0.0, %v2641
  %v2643 = vpop.f32.mrb[0].mxu0
  %v2644 = vpop.f32.mrb[0].mxu0
  %v2645 = vadd.f32 0.0, %v2644
  %v2646 = vpop.f32.mrb[0].mxu0
  %2647 = vmatprep.mubr.bf16.mxu0 0
  %2648 = vmatmul.mubr.bf16.gmra.mrb[0].mxu0 %v2587
  %v2649 = vpop.f32.mrb[0].mxu0
  %v2650 = vadd.f32 0.0, %v2649
  %v2651 = vpop.f32.mrb[0].mxu0
  %v2652 = vpop.f32.mrb[0].mxu0
  %v2653 = vadd.f32 0.0, %v2652
  %v2654 = vpop.f32.mrb[0].mxu0
  %2655 = vmatprep.mubr.bf16.mxu0 0
  %2656 = vmatmul.mubr.bf16.gmra.mrb[0].mxu0 %v2590
  %v2657 = vpop.f32.mrb[0].mxu0
  %v2658 = vadd.f32 0.0, %v2657
  %v2659 = vpop.f32.mrb[0].mxu0
  %v2660 = vpop.f32.mrb[0].mxu0
  %v2661 = vadd.f32 0.0, %v2660
  %v2662 = vpop.f32.mrb[0].mxu0
  %2663 = vmatprep.mubr.bf16.mxu0 0
  %2664 = vmatmul.mubr.bf16.gmra.mrb[0].mxu0 %v2593
  %v2665 = vpop.f32.mrb[0].mxu0
  %v2666 = vadd.f32 0.0, %v2665
  %v2667 = vpop.f32.mrb[0].mxu0
  %v2668 = vpop.f32.mrb[0].mxu0
  %v2669 = vadd.f32 0.0, %v2668
  %v2670 = vpop.f32.mrb[0].mxu0
  %2671 = vmatprep.mubr.bf16.mxu0 0
  %2672 = vmatmul.mubr.bf16.gmra.mrb[0].mxu0 %v2596
  %v2673 = vpop.f32.mrb[0].mxu0
  %v2674 = vadd.f32 0.0, %v2673
  %v2675 = vpop.f32.mrb[0].mxu0
  %v2676 = vpop.f32.mrb[0].mxu0
  %v2677 = vadd.f32 0.0, %v2676
  %v2678 = vpop.f32.mrb[0].mxu0
  %2679 = vmatprep.mubr.bf16.mxu0 0
  %2680 = vmatmul.mubr.bf16.gmra.mrb[0].mxu0 %v2599
  %v2681 = vpop.f32.mrb[0].mxu0
  %v2682 = vadd.f32 0.0, %v2681
  %v2683 = vpop.f32.mrb[0].mxu0
  %v2684 = vpop.f32.mrb[0].mxu0
  %v2685 = vadd.f32 0.0, %v2684
  %v2686 = vpop.f32.mrb[0].mxu0
  %2687 = vmatprep.mubr.bf16.mxu0 0
  %2688 = vmatmul.mubr.bf16.gmra.mrb[0].mxu0 %v2602
  %v2689 = vpop.f32.mrb[0].mxu0
  %v2690 = vadd.f32 0.0, %v2689
  %v2691 = vpop.f32.mrb[0].mxu0
  %v2692 = vpop.f32.mrb[0].mxu0
  %v2693 = vadd.f32 0.0, %v2692
  %v2694 = vpop.f32.mrb[0].mxu0
  %2695 = vmatprep.mubr.bf16.mxu0 0
  %2696 = vmatmul.mubr.bf16.gmra.mrb[0].mxu0 %v2605
  %v2697 = vpop.f32.mrb[0].mxu0
  %v2698 = vadd.f32 0.0, %v2697
  %v2699 = vpop.f32.mrb[0].mxu0
  %v2700 = vpop.f32.mrb[0].mxu0
  %v2701 = vadd.f32 0.0, %v2700
  %v2702 = vpop.f32.mrb[0].mxu0
  %2703 = vdwg.mxu0
  %v2712 = vunpack.c.l.b16 %v2542
  %v2713 = vunpack.c.l.b16 %v2543
  %v2714 = vunpack.c.l.b16 %v2544
  %v2715 = vunpack.c.l.b16 %v2545
  %v2716 = vunpack.c.l.b16 %v2546
  %v2717 = vunpack.c.l.b16 %v2547
  %v2718 = vunpack.c.l.b16 %v2548
  %v2719 = vunpack.c.l.b16 %v2549
  %v2720 = vpack.c.b16 %v2713, %v2712
  %v2721 = vpack.c.b16 %v2715, %v2714
  %v2722 = vpack.c.b16 %v2717, %v2716
  %v2723 = vpack.c.b16 %v2719, %v2718
  %v2729 = vsel %vm970, %v2470, 0
  %v2732 = vsel %vm970, %v2471, 0
  %v2735 = vsel %vm970, %v2472, 0
  %v2738 = vsel %vm970, %v2473, 0
  %v2741 = vsel %vm970, %v2474, 0
  %v2744 = vsel %vm970, %v2475, 0
  %v2747 = vsel %vm970, %v2476, 0
  %v2750 = vsel %vm970, %v2477, 0
  %2752 = vmatprep.subr.bf16.mxu0 0
  %2753 = vmatpush1.bf16.msra.mxu0 %v2720
  %2754 = vmatprep.subr.bf16.mxu0 0
  %2755 = vmatpush1.bf16.msra.mxu0 %v2721
  %2756 = vmatprep.subr.bf16.mxu0 0
  %2757 = vmatpush1.bf16.msra.mxu0 %v2722
  %2758 = vmatprep.subr.bf16.mxu0 0
  %2759 = vmatpush1.bf16.msra.mxu0 %v2723
  %2760 = vmatprep.subr.bf16.mxu0 0
  %2761 = vmatpush1.bf16.msra.mxu0 0
  %2762 = vmatprep.subr.bf16.mxu0 0
  %2763 = vmatpush1.bf16.msra.mxu0 0
  %2764 = vmatprep.subr.bf16.mxu0 0
  %2765 = vmatpush1.bf16.msra.mxu0 0
  %2766 = vmatprep.subr.bf16.mxu0 0
  %2767 = vmatpush1.bf16.msra.mxu0 0
  %2768 = vmatprep.subr.bf16.mxu0 0
  %2769 = vmatpush1.bf16.msra.mxu0 0
  %2770 = vmatprep.subr.bf16.mxu0 0
  %2771 = vmatpush1.bf16.msra.mxu0 0
  %2772 = vmatprep.subr.bf16.mxu0 0
  %2773 = vmatpush1.bf16.msra.mxu0 0
  %2774 = vmatprep.subr.bf16.mxu0 0
  %2775 = vmatpush1.bf16.msra.mxu0 0
  %2776 = vmatprep.subr.bf16.mxu0 0
  %2777 = vmatpush1.bf16.msra.mxu0 0
  %2778 = vmatprep.subr.bf16.mxu0 0
  %2779 = vmatpush1.bf16.msra.mxu0 0
  %2780 = vmatprep.subr.bf16.mxu0 0
  %2781 = vmatpush1.bf16.msra.mxu0 0
  %2782 = vmatprep.subr.bf16.mxu0 0
  %2783 = vmatpush1.bf16.msra.mxu0 0
  %2784 = vmatprep.mubr.bf16.mxu0 0
  %2785 = vmatmul.mubr.bf16.gmra.mrb[0].mxu0 %v2729
  %v2786 = vpop.f32.mrb[0].mxu0
  %v2787 = vadd.f32 %v2642, %v2786
  %v2788 = vpop.f32.mrb[0].mxu0
  %v2789 = vpop.f32.mrb[0].mxu0
  %v2790 = vadd.f32 %v2645, %v2789
  %v2791 = vpop.f32.mrb[0].mxu0
  %2792 = vmatprep.mubr.bf16.mxu0 0
  %2793 = vmatmul.mubr.bf16.gmra.mrb[0].mxu0 %v2732
  %v2794 = vpop.f32.mrb[0].mxu0
  %v2795 = vadd.f32 %v2650, %v2794
  %v2796 = vpop.f32.mrb[0].mxu0
  %v2797 = vpop.f32.mrb[0].mxu0
  %v2798 = vadd.f32 %v2653, %v2797
  %v2799 = vpop.f32.mrb[0].mxu0
  %2800 = vmatprep.mubr.bf16.mxu0 0
  %2801 = vmatmul.mubr.bf16.gmra.mrb[0].mxu0 %v2735
  %v2802 = vpop.f32.mrb[0].mxu0
  %v2803 = vadd.f32 %v2658, %v2802
  %v2804 = vpop.f32.mrb[0].mxu0
  %v2805 = vpop.f32.mrb[0].mxu0
  %v2806 = vadd.f32 %v2661, %v2805
  %v2807 = vpop.f32.mrb[0].mxu0
  %2808 = vmatprep.mubr.bf16.mxu0 0
  %2809 = vmatmul.mubr.bf16.gmra.mrb[0].mxu0 %v2738
  %v2810 = vpop.f32.mrb[0].mxu0
  %v2811 = vadd.f32 %v2666, %v2810
  %v2812 = vpop.f32.mrb[0].mxu0
  %v2813 = vpop.f32.mrb[0].mxu0
  %v2814 = vadd.f32 %v2669, %v2813
  %v2815 = vpop.f32.mrb[0].mxu0
  %2816 = vmatprep.mubr.bf16.mxu0 0
  %2817 = vmatmul.mubr.bf16.gmra.mrb[0].mxu0 %v2741
  %v2818 = vpop.f32.mrb[0].mxu0
  %v2819 = vadd.f32 %v2674, %v2818
  %v2820 = vpop.f32.mrb[0].mxu0
  %v2821 = vpop.f32.mrb[0].mxu0
  %v2822 = vadd.f32 %v2677, %v2821
  %v2823 = vpop.f32.mrb[0].mxu0
  %2824 = vmatprep.mubr.bf16.mxu0 0
  %2825 = vmatmul.mubr.bf16.gmra.mrb[0].mxu0 %v2744
  %v2826 = vpop.f32.mrb[0].mxu0
  %v2827 = vadd.f32 %v2682, %v2826
  %v2828 = vpop.f32.mrb[0].mxu0
  %v2829 = vpop.f32.mrb[0].mxu0
  %v2830 = vadd.f32 %v2685, %v2829
  %v2831 = vpop.f32.mrb[0].mxu0
  %2832 = vmatprep.mubr.bf16.mxu0 0
  %2833 = vmatmul.mubr.bf16.gmra.mrb[0].mxu0 %v2747
  %v2834 = vpop.f32.mrb[0].mxu0
  %v2835 = vadd.f32 %v2690, %v2834
  %v2836 = vpop.f32.mrb[0].mxu0
  %v2837 = vpop.f32.mrb[0].mxu0
  %v2838 = vadd.f32 %v2693, %v2837
  %v2839 = vpop.f32.mrb[0].mxu0
  %2840 = vmatprep.mubr.bf16.mxu0 0
  %2841 = vmatmul.mubr.bf16.gmra.mrb[0].mxu0 %v2750
  %v2842 = vpop.f32.mrb[0].mxu0
  %v2843 = vadd.f32 %v2698, %v2842
  %v2844 = vpop.f32.mrb[0].mxu0
  %v2845 = vpop.f32.mrb[0].mxu0
  %v2846 = vadd.f32 %v2701, %v2845
  %v2847 = vpop.f32.mrb[0].mxu0
  %2848 = vdwg.mxu0
  %s2849 = scalar_lea.vmem %s6, 64
  %v2850 = vld [vmem:[%s2849] sm:$0xf]
  %v2851 = vld [vmem:[%s2849 + $0x4] sm:$0xf]
  %v2852 = vld [vmem:[%s2849 + $0x8] sm:$0xf]
  %v2853 = vld [vmem:[%s2849 + $0xc] sm:$0xf]
  %v2854 = vld [vmem:[%s2849 + $0x10] sm:$0xf]
  %v2855 = vld [vmem:[%s2849 + $0x14] sm:$0xf]
  %v2856 = vld [vmem:[%s2849 + $0x18] sm:$0xf]
  %v2857 = vld [vmem:[%s2849 + $0x1c] sm:$0xf]
  %v2866 = vunpack.c.l.b16 %v2850
  %v2867 = vunpack.c.l.b16 %v2851
  %v2868 = vunpack.c.l.b16 %v2852
  %v2869 = vunpack.c.l.b16 %v2853
  %v2870 = vunpack.c.l.b16 %v2854
  %v2871 = vunpack.c.l.b16 %v2855
  %v2872 = vunpack.c.l.b16 %v2856
  %v2873 = vunpack.c.l.b16 %v2857
  %v2874 = vpack.c.b16 %v2867, %v2866
  %v2875 = vpack.c.b16 %v2869, %v2868
  %v2876 = vpack.c.b16 %v2871, %v2870
  %v2877 = vpack.c.b16 %v2873, %v2872
  %v2883 = vsel %vm970, %v2486, 0
  %v2886 = vsel %vm970, %v2487, 0
  %v2889 = vsel %vm970, %v2488, 0
  %v2892 = vsel %vm970, %v2489, 0
  %v2895 = vsel %vm970, %v2490, 0
  %v2898 = vsel %vm970, %v2491, 0
  %v2901 = vsel %vm970, %v2492, 0
  %v2904 = vsel %vm970, %v2493, 0
  %2906 = vmatprep.subr.bf16.mxu0 0
  %2907 = vmatpush1.bf16.msra.mxu0 %v2874
  %2908 = vmatprep.subr.bf16.mxu0 0
  %2909 = vmatpush1.bf16.msra.mxu0 %v2875
  %2910 = vmatprep.subr.bf16.mxu0 0
  %2911 = vmatpush1.bf16.msra.mxu0 %v2876
  %2912 = vmatprep.subr.bf16.mxu0 0
  %2913 = vmatpush1.bf16.msra.mxu0 %v2877
  %2914 = vmatprep.subr.bf16.mxu0 0
  %2915 = vmatpush1.bf16.msra.mxu0 0
  %2916 = vmatprep.subr.bf16.mxu0 0
  %2917 = vmatpush1.bf16.msra.mxu0 0
  %2918 = vmatprep.subr.bf16.mxu0 0
  %2919 = vmatpush1.bf16.msra.mxu0 0
  %2920 = vmatprep.subr.bf16.mxu0 0
  %2921 = vmatpush1.bf16.msra.mxu0 0
  %2922 = vmatprep.subr.bf16.mxu0 0
  %2923 = vmatpush1.bf16.msra.mxu0 0
  %2924 = vmatprep.subr.bf16.mxu0 0
  %2925 = vmatpush1.bf16.msra.mxu0 0
  %2926 = vmatprep.subr.bf16.mxu0 0
  %2927 = vmatpush1.bf16.msra.mxu0 0
  %2928 = vmatprep.subr.bf16.mxu0 0
  %2929 = vmatpush1.bf16.msra.mxu0 0
  %2930 = vmatprep.subr.bf16.mxu0 0
  %2931 = vmatpush1.bf16.msra.mxu0 0
  %2932 = vmatprep.subr.bf16.mxu0 0
  %2933 = vmatpush1.bf16.msra.mxu0 0
  %2934 = vmatprep.subr.bf16.mxu0 0
  %2935 = vmatpush1.bf16.msra.mxu0 0
  %2936 = vmatprep.subr.bf16.mxu0 0
  %2937 = vmatpush1.bf16.msra.mxu0 0
  %2938 = vmatprep.mubr.bf16.mxu0 0
  %2939 = vmatmul.mubr.bf16.gmra.mrb[0].mxu0 %v2883
  %v2940 = vpop.f32.mrb[0].mxu0
  %v2941 = vadd.f32 0.0, %v2940
  %v2942 = vpop.f32.mrb[0].mxu0
  %v2943 = vpop.f32.mrb[0].mxu0
  %v2944 = vadd.f32 0.0, %v2943
  %v2945 = vpop.f32.mrb[0].mxu0
  %2946 = vmatprep.mubr.bf16.mxu0 0
  %2947 = vmatmul.mubr.bf16.gmra.mrb[0].mxu0 %v2886
  %v2948 = vpop.f32.mrb[0].mxu0
  %v2949 = vadd.f32 0.0, %v2948
  %v2950 = vpop.f32.mrb[0].mxu0
  %v2951 = vpop.f32.mrb[0].mxu0
  %v2952 = vadd.f32 0.0, %v2951
  %v2953 = vpop.f32.mrb[0].mxu0
  %2954 = vmatprep.mubr.bf16.mxu0 0
  %2955 = vmatmul.mubr.bf16.gmra.mrb[0].mxu0 %v2889
  %v2956 = vpop.f32.mrb[0].mxu0
  %v2957 = vadd.f32 0.0, %v2956
  %v2958 = vpop.f32.mrb[0].mxu0
  %v2959 = vpop.f32.mrb[0].mxu0
  %v2960 = vadd.f32 0.0, %v2959
  %v2961 = vpop.f32.mrb[0].mxu0
  %2962 = vmatprep.mubr.bf16.mxu0 0
  %2963 = vmatmul.mubr.bf16.gmra.mrb[0].mxu0 %v2892
  %v2964 = vpop.f32.mrb[0].mxu0
  %v2965 = vadd.f32 0.0, %v2964
  %v2966 = vpop.f32.mrb[0].mxu0
  %v2967 = vpop.f32.mrb[0].mxu0
  %v2968 = vadd.f32 0.0, %v2967
  %v2969 = vpop.f32.mrb[0].mxu0
  %2970 = vmatprep.mubr.bf16.mxu0 0
  %2971 = vmatmul.mubr.bf16.gmra.mrb[0].mxu0 %v2895
  %v2972 = vpop.f32.mrb[0].mxu0
  %v2973 = vadd.f32 0.0, %v2972
  %v2974 = vpop.f32.mrb[0].mxu0
  %v2975 = vpop.f32.mrb[0].mxu0
  %v2976 = vadd.f32 0.0, %v2975
  %v2977 = vpop.f32.mrb[0].mxu0
  %2978 = vmatprep.mubr.bf16.mxu0 0
  %2979 = vmatmul.mubr.bf16.gmra.mrb[0].mxu0 %v2898
  %v2980 = vpop.f32.mrb[0].mxu0
  %v2981 = vadd.f32 0.0, %v2980
  %v2982 = vpop.f32.mrb[0].mxu0
  %v2983 = vpop.f32.mrb[0].mxu0
  %v2984 = vadd.f32 0.0, %v2983
  %v2985 = vpop.f32.mrb[0].mxu0
  %2986 = vmatprep.mubr.bf16.mxu0 0
  %2987 = vmatmul.mubr.bf16.gmra.mrb[0].mxu0 %v2901
  %v2988 = vpop.f32.mrb[0].mxu0
  %v2989 = vadd.f32 0.0, %v2988
  %v2990 = vpop.f32.mrb[0].mxu0
  %v2991 = vpop.f32.mrb[0].mxu0
  %v2992 = vadd.f32 0.0, %v2991
  %v2993 = vpop.f32.mrb[0].mxu0
  %2994 = vmatprep.mubr.bf16.mxu0 0
  %2995 = vmatmul.mubr.bf16.gmra.mrb[0].mxu0 %v2904
  %v2996 = vpop.f32.mrb[0].mxu0
  %v2997 = vadd.f32 0.0, %v2996
  %v2998 = vpop.f32.mrb[0].mxu0
  %v2999 = vpop.f32.mrb[0].mxu0
  %v3000 = vadd.f32 0.0, %v2999
  %v3001 = vpop.f32.mrb[0].mxu0
  %3002 = vdwg.mxu0
  %v3003 = vadd.f32 %v2787, %v2941
  %v3004 = vadd.f32 %v2790, %v2944
  %v3005 = vadd.f32 %v2795, %v2949
  %v3006 = vadd.f32 %v2798, %v2952
  %v3007 = vadd.f32 %v2803, %v2957
  %v3008 = vadd.f32 %v2806, %v2960
  %v3009 = vadd.f32 %v2811, %v2965
  %v3010 = vadd.f32 %v2814, %v2968
  %v3011 = vadd.f32 %v2819, %v2973
  %v3012 = vadd.f32 %v2822, %v2976
  %v3013 = vadd.f32 %v2827, %v2981
  %v3014 = vadd.f32 %v2830, %v2984
  %v3015 = vadd.f32 %v2835, %v2989
  %v3016 = vadd.f32 %v2838, %v2992
  %v3017 = vadd.f32 %v2843, %v2997
  %v3018 = vadd.f32 %v2846, %v3000
  %s3019 = scalar_lea.vmem %s6, 96
  %v3020 = vld [vmem:[%s3019] sm:$0xf]
  %v3021 = vld [vmem:[%s3019 + $0x4] sm:$0xf]
  %v3022 = vld [vmem:[%s3019 + $0x8] sm:$0xf]
  %v3023 = vld [vmem:[%s3019 + $0xc] sm:$0xf]
  %v3024 = vld [vmem:[%s3019 + $0x10] sm:$0xf]
  %v3025 = vld [vmem:[%s3019 + $0x14] sm:$0xf]
  %v3026 = vld [vmem:[%s3019 + $0x18] sm:$0xf]
  %v3027 = vld [vmem:[%s3019 + $0x1c] sm:$0xf]
  %v3036 = vunpack.c.l.b16 %v3020
  %v3037 = vunpack.c.l.b16 %v3021
  %v3038 = vunpack.c.l.b16 %v3022
  %v3039 = vunpack.c.l.b16 %v3023
  %v3040 = vunpack.c.l.b16 %v3024
  %v3041 = vunpack.c.l.b16 %v3025
  %v3042 = vunpack.c.l.b16 %v3026
  %v3043 = vunpack.c.l.b16 %v3027
  %v3044 = vpack.c.b16 %v3037, %v3036
  %v3045 = vpack.c.b16 %v3039, %v3038
  %v3046 = vpack.c.b16 %v3041, %v3040
  %v3047 = vpack.c.b16 %v3043, %v3042
  %v3053 = vsel %vm970, %v2494, 0
  %v3056 = vsel %vm970, %v2495, 0
  %v3059 = vsel %vm970, %v2496, 0
  %v3062 = vsel %vm970, %v2497, 0
  %v3065 = vsel %vm970, %v2498, 0
  %v3068 = vsel %vm970, %v2499, 0
  %v3071 = vsel %vm970, %v2500, 0
  %v3074 = vsel %vm970, %v2501, 0
  %3076 = vmatprep.subr.bf16.mxu0 0
  %3077 = vmatpush1.bf16.msra.mxu0 %v3044
  %3078 = vmatprep.subr.bf16.mxu0 0
  %3079 = vmatpush1.bf16.msra.mxu0 %v3045
  %3080 = vmatprep.subr.bf16.mxu0 0
  %3081 = vmatpush1.bf16.msra.mxu0 %v3046
  %3082 = vmatprep.subr.bf16.mxu0 0
  %3083 = vmatpush1.bf16.msra.mxu0 %v3047
  %3084 = vmatprep.subr.bf16.mxu0 0
  %3085 = vmatpush1.bf16.msra.mxu0 0
  %3086 = vmatprep.subr.bf16.mxu0 0
  %3087 = vmatpush1.bf16.msra.mxu0 0
  %3088 = vmatprep.subr.bf16.mxu0 0
  %3089 = vmatpush1.bf16.msra.mxu0 0
  %3090 = vmatprep.subr.bf16.mxu0 0
  %3091 = vmatpush1.bf16.msra.mxu0 0
  %3092 = vmatprep.subr.bf16.mxu0 0
  %3093 = vmatpush1.bf16.msra.mxu0 0
  %3094 = vmatprep.subr.bf16.mxu0 0
  %3095 = vmatpush1.bf16.msra.mxu0 0
  %3096 = vmatprep.subr.bf16.mxu0 0
  %3097 = vmatpush1.bf16.msra.mxu0 0
  %3098 = vmatprep.subr.bf16.mxu0 0
  %3099 = vmatpush1.bf16.msra.mxu0 0
  %3100 = vmatprep.subr.bf16.mxu0 0
  %3101 = vmatpush1.bf16.msra.mxu0 0
  %3102 = vmatprep.subr.bf16.mxu0 0
  %3103 = vmatpush1.bf16.msra.mxu0 0
  %3104 = vmatprep.subr.bf16.mxu0 0
  %3105 = vmatpush1.bf16.msra.mxu0 0
  %3106 = vmatprep.subr.bf16.mxu0 0
  %3107 = vmatpush1.bf16.msra.mxu0 0
  %3108 = vmatprep.mubr.bf16.mxu0 0
  %3109 = vmatmul.mubr.bf16.gmra.mrb[0].mxu0 %v3053
  %v3110 = vpop.f32.mrb[0].mxu0
  %v3111 = vadd.f32 0.0, %v3110
  %v3112 = vpop.f32.mrb[0].mxu0
  %v3113 = vpop.f32.mrb[0].mxu0
  %v3114 = vadd.f32 0.0, %v3113
  %v3115 = vpop.f32.mrb[0].mxu0
  %3116 = vmatprep.mubr.bf16.mxu0 0
  %3117 = vmatmul.mubr.bf16.gmra.mrb[0].mxu0 %v3056
  %v3118 = vpop.f32.mrb[0].mxu0
  %v3119 = vadd.f32 0.0, %v3118
  %v3120 = vpop.f32.mrb[0].mxu0
  %v3121 = vpop.f32.mrb[0].mxu0
  %v3122 = vadd.f32 0.0, %v3121
  %v3123 = vpop.f32.mrb[0].mxu0
  %3124 = vmatprep.mubr.bf16.mxu0 0
  %3125 = vmatmul.mubr.bf16.gmra.mrb[0].mxu0 %v3059
  %v3126 = vpop.f32.mrb[0].mxu0
  %v3127 = vadd.f32 0.0, %v3126
  %v3128 = vpop.f32.mrb[0].mxu0
  %v3129 = vpop.f32.mrb[0].mxu0
  %v3130 = vadd.f32 0.0, %v3129
  %v3131 = vpop.f32.mrb[0].mxu0
  %3132 = vmatprep.mubr.bf16.mxu0 0
  %3133 = vmatmul.mubr.bf16.gmra.mrb[0].mxu0 %v3062
  %v3134 = vpop.f32.mrb[0].mxu0
  %v3135 = vadd.f32 0.0, %v3134
  %v3136 = vpop.f32.mrb[0].mxu0
  %v3137 = vpop.f32.mrb[0].mxu0
  %v3138 = vadd.f32 0.0, %v3137
  %v3139 = vpop.f32.mrb[0].mxu0
  %3140 = vmatprep.mubr.bf16.mxu0 0
  %3141 = vmatmul.mubr.bf16.gmra.mrb[0].mxu0 %v3065
  %v3142 = vpop.f32.mrb[0].mxu0
  %v3143 = vadd.f32 0.0, %v3142
  %v3144 = vpop.f32.mrb[0].mxu0
  %v3145 = vpop.f32.mrb[0].mxu0
  %v3146 = vadd.f32 0.0, %v3145
  %v3147 = vpop.f32.mrb[0].mxu0
  %3148 = vmatprep.mubr.bf16.mxu0 0
  %3149 = vmatmul.mubr.bf16.gmra.mrb[0].mxu0 %v3068
  %v3150 = vpop.f32.mrb[0].mxu0
  %v3151 = vadd.f32 0.0, %v3150
  %v3152 = vpop.f32.mrb[0].mxu0
  %v3153 = vpop.f32.mrb[0].mxu0
  %v3154 = vadd.f32 0.0, %v3153
  %v3155 = vpop.f32.mrb[0].mxu0
  %3156 = vmatprep.mubr.bf16.mxu0 0
  %3157 = vmatmul.mubr.bf16.gmra.mrb[0].mxu0 %v3071
  %v3158 = vpop.f32.mrb[0].mxu0
  %v3159 = vadd.f32 0.0, %v3158
  %v3160 = vpop.f32.mrb[0].mxu0
  %v3161 = vpop.f32.mrb[0].mxu0
  %v3162 = vadd.f32 0.0, %v3161
  %v3163 = vpop.f32.mrb[0].mxu0
  %3164 = vmatprep.mubr.bf16.mxu0 0
  %3165 = vmatmul.mubr.bf16.gmra.mrb[0].mxu0 %v3074
  %v3166 = vpop.f32.mrb[0].mxu0
  %v3167 = vadd.f32 0.0, %v3166
  %v3168 = vpop.f32.mrb[0].mxu0
  %v3169 = vpop.f32.mrb[0].mxu0
  %v3170 = vadd.f32 0.0, %v3169
  %v3171 = vpop.f32.mrb[0].mxu0
  %3172 = vdwg.mxu0
  %v3173 = vadd.f32 %v3003, %v3111
  %v3174 = vadd.f32 %v3004, %v3114
  %v3175 = vadd.f32 %v3005, %v3119
  %v3176 = vadd.f32 %v3006, %v3122
  %v3177 = vadd.f32 %v3007, %v3127
  %v3178 = vadd.f32 %v3008, %v3130
  %v3179 = vadd.f32 %v3009, %v3135
  %v3180 = vadd.f32 %v3010, %v3138
  %v3181 = vadd.f32 %v3011, %v3143
  %v3182 = vadd.f32 %v3012, %v3146
  %v3183 = vadd.f32 %v3013, %v3151
  %v3184 = vadd.f32 %v3014, %v3154
  %v3185 = vadd.f32 %v3015, %v3159
  %v3186 = vadd.f32 %v3016, %v3162
  %v3187 = vadd.f32 %v3017, %v3167
  %v3188 = vadd.f32 %v3018, %v3170
  %s3189 = scalar_lea.vmem %s6, 128
  %v3190 = vld [vmem:[%s3189] sm:$0xf]
  %v3191 = vld [vmem:[%s3189 + $0x4] sm:$0xf]
  %v3192 = vld [vmem:[%s3189 + $0x8] sm:$0xf]
  %v3193 = vld [vmem:[%s3189 + $0xc] sm:$0xf]
  %v3194 = vld [vmem:[%s3189 + $0x10] sm:$0xf]
  %v3195 = vld [vmem:[%s3189 + $0x14] sm:$0xf]
  %v3196 = vld [vmem:[%s3189 + $0x18] sm:$0xf]
  %v3197 = vld [vmem:[%s3189 + $0x1c] sm:$0xf]
  %v3206 = vunpack.c.l.b16 %v3190
  %v3207 = vunpack.c.l.b16 %v3191
  %v3208 = vunpack.c.l.b16 %v3192
  %v3209 = vunpack.c.l.b16 %v3193
  %v3210 = vunpack.c.l.b16 %v3194
  %v3211 = vunpack.c.l.b16 %v3195
  %v3212 = vunpack.c.l.b16 %v3196
  %v3213 = vunpack.c.l.b16 %v3197
  %v3214 = vpack.c.b16 %v3207, %v3206
  %v3215 = vpack.c.b16 %v3209, %v3208
  %v3216 = vpack.c.b16 %v3211, %v3210
  %v3217 = vpack.c.b16 %v3213, %v3212
  %v3223 = vsel %vm970, %v2502, 0
  %v3226 = vsel %vm970, %v2503, 0
  %v3229 = vsel %vm970, %v2504, 0
  %v3232 = vsel %vm970, %v2505, 0
  %v3235 = vsel %vm970, %v2506, 0
  %v3238 = vsel %vm970, %v2507, 0
  %v3241 = vsel %vm970, %v2508, 0
  %v3244 = vsel %vm970, %v2509, 0
  %3246 = vmatprep.subr.bf16.mxu0 0
  %3247 = vmatpush1.bf16.msra.mxu0 %v3214
  %3248 = vmatprep.subr.bf16.mxu0 0
  %3249 = vmatpush1.bf16.msra.mxu0 %v3215
  %3250 = vmatprep.subr.bf16.mxu0 0
  %3251 = vmatpush1.bf16.msra.mxu0 %v3216
  %3252 = vmatprep.subr.bf16.mxu0 0
  %3253 = vmatpush1.bf16.msra.mxu0 %v3217
  %3254 = vmatprep.subr.bf16.mxu0 0
  %3255 = vmatpush1.bf16.msra.mxu0 0
  %3256 = vmatprep.subr.bf16.mxu0 0
  %3257 = vmatpush1.bf16.msra.mxu0 0
  %3258 = vmatprep.subr.bf16.mxu0 0
  %3259 = vmatpush1.bf16.msra.mxu0 0
  %3260 = vmatprep.subr.bf16.mxu0 0
  %3261 = vmatpush1.bf16.msra.mxu0 0
  %3262 = vmatprep.subr.bf16.mxu0 0
  %3263 = vmatpush1.bf16.msra.mxu0 0
  %3264 = vmatprep.subr.bf16.mxu0 0
  %3265 = vmatpush1.bf16.msra.mxu0 0
  %3266 = vmatprep.subr.bf16.mxu0 0
  %3267 = vmatpush1.bf16.msra.mxu0 0
  %3268 = vmatprep.subr.bf16.mxu0 0
  %3269 = vmatpush1.bf16.msra.mxu0 0
  %3270 = vmatprep.subr.bf16.mxu0 0
  %3271 = vmatpush1.bf16.msra.mxu0 0
  %3272 = vmatprep.subr.bf16.mxu0 0
  %3273 = vmatpush1.bf16.msra.mxu0 0
  %3274 = vmatprep.subr.bf16.mxu0 0
  %3275 = vmatpush1.bf16.msra.mxu0 0
  %3276 = vmatprep.subr.bf16.mxu0 0
  %3277 = vmatpush1.bf16.msra.mxu0 0
  %3278 = vmatprep.mubr.bf16.mxu0 0
  %3279 = vmatmul.mubr.bf16.gmra.mrb[0].mxu0 %v3223
  %v3280 = vpop.f32.mrb[0].mxu0
  %v3281 = vadd.f32 0.0, %v3280
  %v3282 = vpop.f32.mrb[0].mxu0
  %v3283 = vpop.f32.mrb[0].mxu0
  %v3284 = vadd.f32 0.0, %v3283
  %v3285 = vpop.f32.mrb[0].mxu0
  %3286 = vmatprep.mubr.bf16.mxu0 0
  %3287 = vmatmul.mubr.bf16.gmra.mrb[0].mxu0 %v3226
  %v3288 = vpop.f32.mrb[0].mxu0
  %v3289 = vadd.f32 0.0, %v3288
  %v3290 = vpop.f32.mrb[0].mxu0
  %v3291 = vpop.f32.mrb[0].mxu0
  %v3292 = vadd.f32 0.0, %v3291
  %v3293 = vpop.f32.mrb[0].mxu0
  %3294 = vmatprep.mubr.bf16.mxu0 0
  %3295 = vmatmul.mubr.bf16.gmra.mrb[0].mxu0 %v3229
  %v3296 = vpop.f32.mrb[0].mxu0
  %v3297 = vadd.f32 0.0, %v3296
  %v3298 = vpop.f32.mrb[0].mxu0
  %v3299 = vpop.f32.mrb[0].mxu0
  %v3300 = vadd.f32 0.0, %v3299
  %v3301 = vpop.f32.mrb[0].mxu0
  %3302 = vmatprep.mubr.bf16.mxu0 0
  %3303 = vmatmul.mubr.bf16.gmra.mrb[0].mxu0 %v3232
  %v3304 = vpop.f32.mrb[0].mxu0
  %v3305 = vadd.f32 0.0, %v3304
  %v3306 = vpop.f32.mrb[0].mxu0
  %v3307 = vpop.f32.mrb[0].mxu0
  %v3308 = vadd.f32 0.0, %v3307
  %v3309 = vpop.f32.mrb[0].mxu0
  %3310 = vmatprep.mubr.bf16.mxu0 0
  %3311 = vmatmul.mubr.bf16.gmra.mrb[0].mxu0 %v3235
  %v3312 = vpop.f32.mrb[0].mxu0
  %v3313 = vadd.f32 0.0, %v3312
  %v3314 = vpop.f32.mrb[0].mxu0
  %v3315 = vpop.f32.mrb[0].mxu0
  %v3316 = vadd.f32 0.0, %v3315
  %v3317 = vpop.f32.mrb[0].mxu0
  %3318 = vmatprep.mubr.bf16.mxu0 0
  %3319 = vmatmul.mubr.bf16.gmra.mrb[0].mxu0 %v3238
  %v3320 = vpop.f32.mrb[0].mxu0
  %v3321 = vadd.f32 0.0, %v3320
  %v3322 = vpop.f32.mrb[0].mxu0
  %v3323 = vpop.f32.mrb[0].mxu0
  %v3324 = vadd.f32 0.0, %v3323
  %v3325 = vpop.f32.mrb[0].mxu0
  %3326 = vmatprep.mubr.bf16.mxu0 0
  %3327 = vmatmul.mubr.bf16.gmra.mrb[0].mxu0 %v3241
  %v3328 = vpop.f32.mrb[0].mxu0
  %v3329 = vadd.f32 0.0, %v3328
  %v3330 = vpop.f32.mrb[0].mxu0
  %v3331 = vpop.f32.mrb[0].mxu0
  %v3332 = vadd.f32 0.0, %v3331
  %v3333 = vpop.f32.mrb[0].mxu0
  %3334 = vmatprep.mubr.bf16.mxu0 0
  %3335 = vmatmul.mubr.bf16.gmra.mrb[0].mxu0 %v3244
  %v3336 = vpop.f32.mrb[0].mxu0
  %v3337 = vadd.f32 0.0, %v3336
  %v3338 = vpop.f32.mrb[0].mxu0
  %v3339 = vpop.f32.mrb[0].mxu0
  %v3340 = vadd.f32 0.0, %v3339
  %v3341 = vpop.f32.mrb[0].mxu0
  %3342 = vdwg.mxu0
  %v3343 = vadd.f32 %v3173, %v3281
  %v3344 = vadd.f32 %v3174, %v3284
  %v3345 = vadd.f32 %v3175, %v3289
  %v3346 = vadd.f32 %v3176, %v3292
  %v3347 = vadd.f32 %v3177, %v3297
  %v3348 = vadd.f32 %v3178, %v3300
  %v3349 = vadd.f32 %v3179, %v3305
  %v3350 = vadd.f32 %v3180, %v3308
  %v3351 = vadd.f32 %v3181, %v3313
  %v3352 = vadd.f32 %v3182, %v3316
  %v3353 = vadd.f32 %v3183, %v3321
  %v3354 = vadd.f32 %v3184, %v3324
  %v3355 = vadd.f32 %v3185, %v3329
  %v3356 = vadd.f32 %v3186, %v3332
  %v3357 = vadd.f32 %v3187, %v3337
  %v3358 = vadd.f32 %v3188, %v3340
  %s3359 = scalar_lea.vmem %s6, 160
  %v3360 = vld [vmem:[%s3359] sm:$0xf]
  %v3361 = vld [vmem:[%s3359 + $0x4] sm:$0xf]
  %v3362 = vld [vmem:[%s3359 + $0x8] sm:$0xf]
  %v3363 = vld [vmem:[%s3359 + $0xc] sm:$0xf]
  %v3364 = vld [vmem:[%s3359 + $0x10] sm:$0xf]
  %v3365 = vld [vmem:[%s3359 + $0x14] sm:$0xf]
  %v3366 = vld [vmem:[%s3359 + $0x18] sm:$0xf]
  %v3367 = vld [vmem:[%s3359 + $0x1c] sm:$0xf]
  %v3376 = vunpack.c.l.b16 %v3360
  %v3377 = vunpack.c.l.b16 %v3361
  %v3378 = vunpack.c.l.b16 %v3362
  %v3379 = vunpack.c.l.b16 %v3363
  %v3380 = vunpack.c.l.b16 %v3364
  %v3381 = vunpack.c.l.b16 %v3365
  %v3382 = vunpack.c.l.b16 %v3366
  %v3383 = vunpack.c.l.b16 %v3367
  %v3384 = vpack.c.b16 %v3377, %v3376
  %v3385 = vpack.c.b16 %v3379, %v3378
  %v3386 = vpack.c.b16 %v3381, %v3380
  %v3387 = vpack.c.b16 %v3383, %v3382
  %v3393 = vsel %vm970, %v2510, 0
  %v3396 = vsel %vm970, %v2511, 0
  %v3399 = vsel %vm970, %v2512, 0
  %v3402 = vsel %vm970, %v2513, 0
  %v3405 = vsel %vm970, %v2514, 0
  %v3408 = vsel %vm970, %v2515, 0
  %v3411 = vsel %vm970, %v2516, 0
  %v3414 = vsel %vm970, %v2517, 0
  %3416 = vmatprep.subr.bf16.mxu0 0
  %3417 = vmatpush1.bf16.msra.mxu0 %v3384
  %3418 = vmatprep.subr.bf16.mxu0 0
  %3419 = vmatpush1.bf16.msra.mxu0 %v3385
  %3420 = vmatprep.subr.bf16.mxu0 0
  %3421 = vmatpush1.bf16.msra.mxu0 %v3386
  %3422 = vmatprep.subr.bf16.mxu0 0
  %3423 = vmatpush1.bf16.msra.mxu0 %v3387
  %3424 = vmatprep.subr.bf16.mxu0 0
  %3425 = vmatpush1.bf16.msra.mxu0 0
  %3426 = vmatprep.subr.bf16.mxu0 0
  %3427 = vmatpush1.bf16.msra.mxu0 0
  %3428 = vmatprep.subr.bf16.mxu0 0
  %3429 = vmatpush1.bf16.msra.mxu0 0
  %3430 = vmatprep.subr.bf16.mxu0 0
  %3431 = vmatpush1.bf16.msra.mxu0 0
  %3432 = vmatprep.subr.bf16.mxu0 0
  %3433 = vmatpush1.bf16.msra.mxu0 0
  %3434 = vmatprep.subr.bf16.mxu0 0
  %3435 = vmatpush1.bf16.msra.mxu0 0
  %3436 = vmatprep.subr.bf16.mxu0 0
  %3437 = vmatpush1.bf16.msra.mxu0 0
  %3438 = vmatprep.subr.bf16.mxu0 0
  %3439 = vmatpush1.bf16.msra.mxu0 0
  %3440 = vmatprep.subr.bf16.mxu0 0
  %3441 = vmatpush1.bf16.msra.mxu0 0
  %3442 = vmatprep.subr.bf16.mxu0 0
  %3443 = vmatpush1.bf16.msra.mxu0 0
  %3444 = vmatprep.subr.bf16.mxu0 0
  %3445 = vmatpush1.bf16.msra.mxu0 0
  %3446 = vmatprep.subr.bf16.mxu0 0
  %3447 = vmatpush1.bf16.msra.mxu0 0
  %3448 = vmatprep.mubr.bf16.mxu0 0
  %3449 = vmatmul.mubr.bf16.gmra.mrb[0].mxu0 %v3393
  %v3450 = vpop.f32.mrb[0].mxu0
  %v3451 = vadd.f32 0.0, %v3450
  %v3452 = vpop.f32.mrb[0].mxu0
  %v3453 = vpop.f32.mrb[0].mxu0
  %v3454 = vadd.f32 0.0, %v3453
  %v3455 = vpop.f32.mrb[0].mxu0
  %3456 = vmatprep.mubr.bf16.mxu0 0
  %3457 = vmatmul.mubr.bf16.gmra.mrb[0].mxu0 %v3396
  %v3458 = vpop.f32.mrb[0].mxu0
  %v3459 = vadd.f32 0.0, %v3458
  %v3460 = vpop.f32.mrb[0].mxu0
  %v3461 = vpop.f32.mrb[0].mxu0
  %v3462 = vadd.f32 0.0, %v3461
  %v3463 = vpop.f32.mrb[0].mxu0
  %3464 = vmatprep.mubr.bf16.mxu0 0
  %3465 = vmatmul.mubr.bf16.gmra.mrb[0].mxu0 %v3399
  %v3466 = vpop.f32.mrb[0].mxu0
  %v3467 = vadd.f32 0.0, %v3466
  %v3468 = vpop.f32.mrb[0].mxu0
  %v3469 = vpop.f32.mrb[0].mxu0
  %v3470 = vadd.f32 0.0, %v3469
  %v3471 = vpop.f32.mrb[0].mxu0
  %3472 = vmatprep.mubr.bf16.mxu0 0
  %3473 = vmatmul.mubr.bf16.gmra.mrb[0].mxu0 %v3402
  %v3474 = vpop.f32.mrb[0].mxu0
  %v3475 = vadd.f32 0.0, %v3474
  %v3476 = vpop.f32.mrb[0].mxu0
  %v3477 = vpop.f32.mrb[0].mxu0
  %v3478 = vadd.f32 0.0, %v3477
  %v3479 = vpop.f32.mrb[0].mxu0
  %3480 = vmatprep.mubr.bf16.mxu0 0
  %3481 = vmatmul.mubr.bf16.gmra.mrb[0].mxu0 %v3405
  %v3482 = vpop.f32.mrb[0].mxu0
  %v3483 = vadd.f32 0.0, %v3482
  %v3484 = vpop.f32.mrb[0].mxu0
  %v3485 = vpop.f32.mrb[0].mxu0
  %v3486 = vadd.f32 0.0, %v3485
  %v3487 = vpop.f32.mrb[0].mxu0
  %3488 = vmatprep.mubr.bf16.mxu0 0
  %3489 = vmatmul.mubr.bf16.gmra.mrb[0].mxu0 %v3408
  %v3490 = vpop.f32.mrb[0].mxu0
  %v3491 = vadd.f32 0.0, %v3490
  %v3492 = vpop.f32.mrb[0].mxu0
  %v3493 = vpop.f32.mrb[0].mxu0
  %v3494 = vadd.f32 0.0, %v3493
  %v3495 = vpop.f32.mrb[0].mxu0
  %3496 = vmatprep.mubr.bf16.mxu0 0
  %3497 = vmatmul.mubr.bf16.gmra.mrb[0].mxu0 %v3411
  %v3498 = vpop.f32.mrb[0].mxu0
  %v3499 = vadd.f32 0.0, %v3498
  %v3500 = vpop.f32.mrb[0].mxu0
  %v3501 = vpop.f32.mrb[0].mxu0
  %v3502 = vadd.f32 0.0, %v3501
  %v3503 = vpop.f32.mrb[0].mxu0
  %3504 = vmatprep.mubr.bf16.mxu0 0
  %3505 = vmatmul.mubr.bf16.gmra.mrb[0].mxu0 %v3414
  %v3506 = vpop.f32.mrb[0].mxu0
  %v3507 = vadd.f32 0.0, %v3506
  %v3508 = vpop.f32.mrb[0].mxu0
  %v3509 = vpop.f32.mrb[0].mxu0
  %v3510 = vadd.f32 0.0, %v3509
  %v3511 = vpop.f32.mrb[0].mxu0
  %3512 = vdwg.mxu0
  %v3513 = vadd.f32 %v3343, %v3451
  %v3514 = vadd.f32 %v3344, %v3454
  %v3515 = vadd.f32 %v3345, %v3459
  %v3516 = vadd.f32 %v3346, %v3462
  %v3517 = vadd.f32 %v3347, %v3467
  %v3518 = vadd.f32 %v3348, %v3470
  %v3519 = vadd.f32 %v3349, %v3475
  %v3520 = vadd.f32 %v3350, %v3478
  %v3521 = vadd.f32 %v3351, %v3483
  %v3522 = vadd.f32 %v3352, %v3486
  %v3523 = vadd.f32 %v3353, %v3491
  %v3524 = vadd.f32 %v3354, %v3494
  %v3525 = vadd.f32 %v3355, %v3499
  %v3526 = vadd.f32 %v3356, %v3502
  %v3527 = vadd.f32 %v3357, %v3507
  %v3528 = vadd.f32 %v3358, %v3510
  %s3529 = scalar_lea.vmem %s6, 192
  %v3530 = vld [vmem:[%s3529] sm:$0xf]
  %v3531 = vld [vmem:[%s3529 + $0x4] sm:$0xf]
  %v3532 = vld [vmem:[%s3529 + $0x8] sm:$0xf]
  %v3533 = vld [vmem:[%s3529 + $0xc] sm:$0xf]
  %v3534 = vld [vmem:[%s3529 + $0x10] sm:$0xf]
  %v3535 = vld [vmem:[%s3529 + $0x14] sm:$0xf]
  %v3536 = vld [vmem:[%s3529 + $0x18] sm:$0xf]
  %v3537 = vld [vmem:[%s3529 + $0x1c] sm:$0xf]
  %v3546 = vunpack.c.l.b16 %v3530
  %v3547 = vunpack.c.l.b16 %v3531
  %v3548 = vunpack.c.l.b16 %v3532
  %v3549 = vunpack.c.l.b16 %v3533
  %v3550 = vunpack.c.l.b16 %v3534
  %v3551 = vunpack.c.l.b16 %v3535
  %v3552 = vunpack.c.l.b16 %v3536
  %v3553 = vunpack.c.l.b16 %v3537
  %v3554 = vpack.c.b16 %v3547, %v3546
  %v3555 = vpack.c.b16 %v3549, %v3548
  %v3556 = vpack.c.b16 %v3551, %v3550
  %v3557 = vpack.c.b16 %v3553, %v3552
  %v3563 = vsel %vm970, %v2518, 0
  %v3566 = vsel %vm970, %v2519, 0
  %v3569 = vsel %vm970, %v2520, 0
  %v3572 = vsel %vm970, %v2521, 0
  %v3575 = vsel %vm970, %v2522, 0
  %v3578 = vsel %vm970, %v2523, 0
  %v3581 = vsel %vm970, %v2524, 0
  %v3584 = vsel %vm970, %v2525, 0
  %3586 = vmatprep.subr.bf16.mxu0 0
  %3587 = vmatpush1.bf16.msra.mxu0 %v3554
  %3588 = vmatprep.subr.bf16.mxu0 0
  %3589 = vmatpush1.bf16.msra.mxu0 %v3555
  %3590 = vmatprep.subr.bf16.mxu0 0
  %3591 = vmatpush1.bf16.msra.mxu0 %v3556
  %3592 = vmatprep.subr.bf16.mxu0 0
  %3593 = vmatpush1.bf16.msra.mxu0 %v3557
  %3594 = vmatprep.subr.bf16.mxu0 0
  %3595 = vmatpush1.bf16.msra.mxu0 0
  %3596 = vmatprep.subr.bf16.mxu0 0
  %3597 = vmatpush1.bf16.msra.mxu0 0
  %3598 = vmatprep.subr.bf16.mxu0 0
  %3599 = vmatpush1.bf16.msra.mxu0 0
  %3600 = vmatprep.subr.bf16.mxu0 0
  %3601 = vmatpush1.bf16.msra.mxu0 0
  %3602 = vmatprep.subr.bf16.mxu0 0
  %3603 = vmatpush1.bf16.msra.mxu0 0
  %3604 = vmatprep.subr.bf16.mxu0 0
  %3605 = vmatpush1.bf16.msra.mxu0 0
  %3606 = vmatprep.subr.bf16.mxu0 0
  %3607 = vmatpush1.bf16.msra.mxu0 0
  %3608 = vmatprep.subr.bf16.mxu0 0
  %3609 = vmatpush1.bf16.msra.mxu0 0
  %3610 = vmatprep.subr.bf16.mxu0 0
  %3611 = vmatpush1.bf16.msra.mxu0 0
  %3612 = vmatprep.subr.bf16.mxu0 0
  %3613 = vmatpush1.bf16.msra.mxu0 0
  %3614 = vmatprep.subr.bf16.mxu0 0
  %3615 = vmatpush1.bf16.msra.mxu0 0
  %3616 = vmatprep.subr.bf16.mxu0 0
  %3617 = vmatpush1.bf16.msra.mxu0 0
  %3618 = vmatprep.mubr.bf16.mxu0 0
  %3619 = vmatmul.mubr.bf16.gmra.mrb[0].mxu0 %v3563
  %v3620 = vpop.f32.mrb[0].mxu0
  %v3621 = vadd.f32 0.0, %v3620
  %v3622 = vpop.f32.mrb[0].mxu0
  %v3623 = vpop.f32.mrb[0].mxu0
  %v3624 = vadd.f32 0.0, %v3623
  %v3625 = vpop.f32.mrb[0].mxu0
  %3626 = vmatprep.mubr.bf16.mxu0 0
  %3627 = vmatmul.mubr.bf16.gmra.mrb[0].mxu0 %v3566
  %v3628 = vpop.f32.mrb[0].mxu0
  %v3629 = vadd.f32 0.0, %v3628
  %v3630 = vpop.f32.mrb[0].mxu0
  %v3631 = vpop.f32.mrb[0].mxu0
  %v3632 = vadd.f32 0.0, %v3631
  %v3633 = vpop.f32.mrb[0].mxu0
  %3634 = vmatprep.mubr.bf16.mxu0 0
  %3635 = vmatmul.mubr.bf16.gmra.mrb[0].mxu0 %v3569
  %v3636 = vpop.f32.mrb[0].mxu0
  %v3637 = vadd.f32 0.0, %v3636
  %v3638 = vpop.f32.mrb[0].mxu0
  %v3639 = vpop.f32.mrb[0].mxu0
  %v3640 = vadd.f32 0.0, %v3639
  %v3641 = vpop.f32.mrb[0].mxu0
  %3642 = vmatprep.mubr.bf16.mxu0 0
  %3643 = vmatmul.mubr.bf16.gmra.mrb[0].mxu0 %v3572
  %v3644 = vpop.f32.mrb[0].mxu0
  %v3645 = vadd.f32 0.0, %v3644
  %v3646 = vpop.f32.mrb[0].mxu0
  %v3647 = vpop.f32.mrb[0].mxu0
  %v3648 = vadd.f32 0.0, %v3647
  %v3649 = vpop.f32.mrb[0].mxu0
  %3650 = vmatprep.mubr.bf16.mxu0 0
  %3651 = vmatmul.mubr.bf16.gmra.mrb[0].mxu0 %v3575
  %v3652 = vpop.f32.mrb[0].mxu0
  %v3653 = vadd.f32 0.0, %v3652
  %v3654 = vpop.f32.mrb[0].mxu0
  %v3655 = vpop.f32.mrb[0].mxu0
  %v3656 = vadd.f32 0.0, %v3655
  %v3657 = vpop.f32.mrb[0].mxu0
  %3658 = vmatprep.mubr.bf16.mxu0 0
  %3659 = vmatmul.mubr.bf16.gmra.mrb[0].mxu0 %v3578
  %v3660 = vpop.f32.mrb[0].mxu0
  %v3661 = vadd.f32 0.0, %v3660
  %v3662 = vpop.f32.mrb[0].mxu0
  %v3663 = vpop.f32.mrb[0].mxu0
  %v3664 = vadd.f32 0.0, %v3663
  %v3665 = vpop.f32.mrb[0].mxu0
  %3666 = vmatprep.mubr.bf16.mxu0 0
  %3667 = vmatmul.mubr.bf16.gmra.mrb[0].mxu0 %v3581
  %v3668 = vpop.f32.mrb[0].mxu0
  %v3669 = vadd.f32 0.0, %v3668
  %v3670 = vpop.f32.mrb[0].mxu0
  %v3671 = vpop.f32.mrb[0].mxu0
  %v3672 = vadd.f32 0.0, %v3671
  %v3673 = vpop.f32.mrb[0].mxu0
  %3674 = vmatprep.mubr.bf16.mxu0 0
  %3675 = vmatmul.mubr.bf16.gmra.mrb[0].mxu0 %v3584
  %v3676 = vpop.f32.mrb[0].mxu0
  %v3677 = vadd.f32 0.0, %v3676
  %v3678 = vpop.f32.mrb[0].mxu0
  %v3679 = vpop.f32.mrb[0].mxu0
  %v3680 = vadd.f32 0.0, %v3679
  %v3681 = vpop.f32.mrb[0].mxu0
  %3682 = vdwg.mxu0
  %v3683 = vadd.f32 %v3513, %v3621
  %v3684 = vadd.f32 %v3514, %v3624
  %v3685 = vadd.f32 %v3515, %v3629
  %v3686 = vadd.f32 %v3516, %v3632
  %v3687 = vadd.f32 %v3517, %v3637
  %v3688 = vadd.f32 %v3518, %v3640
  %v3689 = vadd.f32 %v3519, %v3645
  %v3690 = vadd.f32 %v3520, %v3648
  %v3691 = vadd.f32 %v3521, %v3653
  %v3692 = vadd.f32 %v3522, %v3656
  %v3693 = vadd.f32 %v3523, %v3661
  %v3694 = vadd.f32 %v3524, %v3664
  %v3695 = vadd.f32 %v3525, %v3669
  %v3696 = vadd.f32 %v3526, %v3672
  %v3697 = vadd.f32 %v3527, %v3677
  %v3698 = vadd.f32 %v3528, %v3680
  %s3699 = scalar_lea.vmem %s6, 224
  %v3700 = vld [vmem:[%s3699] sm:$0xf]
  %v3701 = vld [vmem:[%s3699 + $0x4] sm:$0xf]
  %v3702 = vld [vmem:[%s3699 + $0x8] sm:$0xf]
  %v3703 = vld [vmem:[%s3699 + $0xc] sm:$0xf]
  %v3704 = vld [vmem:[%s3699 + $0x10] sm:$0xf]
  %v3705 = vld [vmem:[%s3699 + $0x14] sm:$0xf]
  %v3706 = vld [vmem:[%s3699 + $0x18] sm:$0xf]
  %v3707 = vld [vmem:[%s3699 + $0x1c] sm:$0xf]
  %v3716 = vunpack.c.l.b16 %v3700
  %v3717 = vunpack.c.l.b16 %v3701
  %v3718 = vunpack.c.l.b16 %v3702
  %v3719 = vunpack.c.l.b16 %v3703
  %v3720 = vunpack.c.l.b16 %v3704
  %v3721 = vunpack.c.l.b16 %v3705
  %v3722 = vunpack.c.l.b16 %v3706
  %v3723 = vunpack.c.l.b16 %v3707
  %v3724 = vpack.c.b16 %v3717, %v3716
  %v3725 = vpack.c.b16 %v3719, %v3718
  %v3726 = vpack.c.b16 %v3721, %v3720
  %v3727 = vpack.c.b16 %v3723, %v3722
  %v3733 = vsel %vm970, %v2526, 0
  %v3736 = vsel %vm970, %v2527, 0
  %v3739 = vsel %vm970, %v2528, 0
  %v3742 = vsel %vm970, %v2529, 0
  %v3745 = vsel %vm970, %v2530, 0
  %v3748 = vsel %vm970, %v2531, 0
  %v3751 = vsel %vm970, %v2532, 0
  %v3754 = vsel %vm970, %v2533, 0
  %3756 = vmatprep.subr.bf16.mxu0 0
  %3757 = vmatpush1.bf16.msra.mxu0 %v3724
  %3758 = vmatprep.subr.bf16.mxu0 0
  %3759 = vmatpush1.bf16.msra.mxu0 %v3725
  %3760 = vmatprep.subr.bf16.mxu0 0
  %3761 = vmatpush1.bf16.msra.mxu0 %v3726
  %3762 = vmatprep.subr.bf16.mxu0 0
  %3763 = vmatpush1.bf16.msra.mxu0 %v3727
  %3764 = vmatprep.subr.bf16.mxu0 0
  %3765 = vmatpush1.bf16.msra.mxu0 0
  %3766 = vmatprep.subr.bf16.mxu0 0
  %3767 = vmatpush1.bf16.msra.mxu0 0
  %3768 = vmatprep.subr.bf16.mxu0 0
  %3769 = vmatpush1.bf16.msra.mxu0 0
  %3770 = vmatprep.subr.bf16.mxu0 0
  %3771 = vmatpush1.bf16.msra.mxu0 0
  %3772 = vmatprep.subr.bf16.mxu0 0
  %3773 = vmatpush1.bf16.msra.mxu0 0
  %3774 = vmatprep.subr.bf16.mxu0 0
  %3775 = vmatpush1.bf16.msra.mxu0 0
  %3776 = vmatprep.subr.bf16.mxu0 0
  %3777 = vmatpush1.bf16.msra.mxu0 0
  %3778 = vmatprep.subr.bf16.mxu0 0
  %3779 = vmatpush1.bf16.msra.mxu0 0
  %3780 = vmatprep.subr.bf16.mxu0 0
  %3781 = vmatpush1.bf16.msra.mxu0 0
  %3782 = vmatprep.subr.bf16.mxu0 0
  %3783 = vmatpush1.bf16.msra.mxu0 0
  %3784 = vmatprep.subr.bf16.mxu0 0
  %3785 = vmatpush1.bf16.msra.mxu0 0
  %3786 = vmatprep.subr.bf16.mxu0 0
  %3787 = vmatpush1.bf16.msra.mxu0 0
  %3788 = vmatprep.mubr.bf16.mxu0 0
  %3789 = vmatmul.mubr.bf16.gmra.mrb[0].mxu0 %v3733
  %v3790 = vpop.f32.mrb[0].mxu0
  %v3791 = vadd.f32 0.0, %v3790
  %v3792 = vpop.f32.mrb[0].mxu0
  %v3793 = vpop.f32.mrb[0].mxu0
  %v3794 = vadd.f32 0.0, %v3793
  %v3795 = vpop.f32.mrb[0].mxu0
  %3796 = vmatprep.mubr.bf16.mxu0 0
  %3797 = vmatmul.mubr.bf16.gmra.mrb[0].mxu0 %v3736
  %v3798 = vpop.f32.mrb[0].mxu0
  %v3799 = vadd.f32 0.0, %v3798
  %v3800 = vpop.f32.mrb[0].mxu0
  %v3801 = vpop.f32.mrb[0].mxu0
  %v3802 = vadd.f32 0.0, %v3801
  %v3803 = vpop.f32.mrb[0].mxu0
  %3804 = vmatprep.mubr.bf16.mxu0 0
  %3805 = vmatmul.mubr.bf16.gmra.mrb[0].mxu0 %v3739
  %v3806 = vpop.f32.mrb[0].mxu0
  %v3807 = vadd.f32 0.0, %v3806
  %v3808 = vpop.f32.mrb[0].mxu0
  %v3809 = vpop.f32.mrb[0].mxu0
  %v3810 = vadd.f32 0.0, %v3809
  %v3811 = vpop.f32.mrb[0].mxu0
  %3812 = vmatprep.mubr.bf16.mxu0 0
  %3813 = vmatmul.mubr.bf16.gmra.mrb[0].mxu0 %v3742
  %v3814 = vpop.f32.mrb[0].mxu0
  %v3815 = vadd.f32 0.0, %v3814
  %v3816 = vpop.f32.mrb[0].mxu0
  %v3817 = vpop.f32.mrb[0].mxu0
  %v3818 = vadd.f32 0.0, %v3817
  %v3819 = vpop.f32.mrb[0].mxu0
  %3820 = vmatprep.mubr.bf16.mxu0 0
  %3821 = vmatmul.mubr.bf16.gmra.mrb[0].mxu0 %v3745
  %v3822 = vpop.f32.mrb[0].mxu0
  %v3823 = vadd.f32 0.0, %v3822
  %v3824 = vpop.f32.mrb[0].mxu0
  %v3825 = vpop.f32.mrb[0].mxu0
  %v3826 = vadd.f32 0.0, %v3825
  %v3827 = vpop.f32.mrb[0].mxu0
  %3828 = vmatprep.mubr.bf16.mxu0 0
  %3829 = vmatmul.mubr.bf16.gmra.mrb[0].mxu0 %v3748
  %v3830 = vpop.f32.mrb[0].mxu0
  %v3831 = vadd.f32 0.0, %v3830
  %v3832 = vpop.f32.mrb[0].mxu0
  %v3833 = vpop.f32.mrb[0].mxu0
  %v3834 = vadd.f32 0.0, %v3833
  %v3835 = vpop.f32.mrb[0].mxu0
  %3836 = vmatprep.mubr.bf16.mxu0 0
  %3837 = vmatmul.mubr.bf16.gmra.mrb[0].mxu0 %v3751
  %v3838 = vpop.f32.mrb[0].mxu0
  %v3839 = vadd.f32 0.0, %v3838
  %v3840 = vpop.f32.mrb[0].mxu0
  %v3841 = vpop.f32.mrb[0].mxu0
  %v3842 = vadd.f32 0.0, %v3841
  %v3843 = vpop.f32.mrb[0].mxu0
  %3844 = vmatprep.mubr.bf16.mxu0 0
  %3845 = vmatmul.mubr.bf16.gmra.mrb[0].mxu0 %v3754
  %v3846 = vpop.f32.mrb[0].mxu0
  %v3847 = vadd.f32 0.0, %v3846
  %v3848 = vpop.f32.mrb[0].mxu0
  %v3849 = vpop.f32.mrb[0].mxu0
  %v3850 = vadd.f32 0.0, %v3849
  %v3851 = vpop.f32.mrb[0].mxu0
  %3852 = vdwg.mxu0
  %v3853 = vadd.f32 %v3683, %v3791
  %v3854 = vadd.f32 %v3684, %v3794
  %v3855 = vadd.f32 %v3685, %v3799
  %v3856 = vadd.f32 %v3686, %v3802
  %v3857 = vadd.f32 %v3687, %v3807
  %v3858 = vadd.f32 %v3688, %v3810
  %v3859 = vadd.f32 %v3689, %v3815
  %v3860 = vadd.f32 %v3690, %v3818
  %v3861 = vadd.f32 %v3691, %v3823
  %v3862 = vadd.f32 %v3692, %v3826
  %v3863 = vadd.f32 %v3693, %v3831
  %v3864 = vadd.f32 %v3694, %v3834
  %v3865 = vadd.f32 %v3695, %v3839
  %v3866 = vadd.f32 %v3696, %v3842
  %v3867 = vadd.f32 %v3697, %v3847
  %v3868 = vadd.f32 %v3698, %v3850
  %s3869 = scalar_lea.vmem %s6, 256
  %v3870 = vld [vmem:[%s3869] sm:$0xf]
  %v3871 = vld [vmem:[%s3869 + $0x4] sm:$0xf]
  %v3872 = vld [vmem:[%s3869 + $0x8] sm:$0xf]
  %v3873 = vld [vmem:[%s3869 + $0xc] sm:$0xf]
  %v3874 = vld [vmem:[%s3869 + $0x10] sm:$0xf]
  %v3875 = vld [vmem:[%s3869 + $0x14] sm:$0xf]
  %v3876 = vld [vmem:[%s3869 + $0x18] sm:$0xf]
  %v3877 = vld [vmem:[%s3869 + $0x1c] sm:$0xf]
  %v3886 = vunpack.c.l.b16 %v3870
  %v3887 = vunpack.c.l.b16 %v3871
  %v3888 = vunpack.c.l.b16 %v3872
  %v3889 = vunpack.c.l.b16 %v3873
  %v3890 = vunpack.c.l.b16 %v3874
  %v3891 = vunpack.c.l.b16 %v3875
  %v3892 = vunpack.c.l.b16 %v3876
  %v3893 = vunpack.c.l.b16 %v3877
  %v3894 = vpack.c.b16 %v3887, %v3886
  %v3895 = vpack.c.b16 %v3889, %v3888
  %v3896 = vpack.c.b16 %v3891, %v3890
  %v3897 = vpack.c.b16 %v3893, %v3892
  %v3903 = vsel %vm970, %v2534, 0
  %v3906 = vsel %vm970, %v2535, 0
  %v3909 = vsel %vm970, %v2536, 0
  %v3912 = vsel %vm970, %v2537, 0
  %v3915 = vsel %vm970, %v2538, 0
  %v3918 = vsel %vm970, %v2539, 0
  %v3921 = vsel %vm970, %v2540, 0
  %v3924 = vsel %vm970, %v2541, 0
  %3926 = vmatprep.subr.bf16.mxu0 0
  %3927 = vmatpush1.bf16.msra.mxu0 %v3894
  %3928 = vmatprep.subr.bf16.mxu0 0
  %3929 = vmatpush1.bf16.msra.mxu0 %v3895
  %3930 = vmatprep.subr.bf16.mxu0 0
  %3931 = vmatpush1.bf16.msra.mxu0 %v3896
  %3932 = vmatprep.subr.bf16.mxu0 0
  %3933 = vmatpush1.bf16.msra.mxu0 %v3897
  %3934 = vmatprep.subr.bf16.mxu0 0
  %3935 = vmatpush1.bf16.msra.mxu0 0
  %3936 = vmatprep.subr.bf16.mxu0 0
  %3937 = vmatpush1.bf16.msra.mxu0 0
  %3938 = vmatprep.subr.bf16.mxu0 0
  %3939 = vmatpush1.bf16.msra.mxu0 0
  %3940 = vmatprep.subr.bf16.mxu0 0
  %3941 = vmatpush1.bf16.msra.mxu0 0
  %3942 = vmatprep.subr.bf16.mxu0 0
  %3943 = vmatpush1.bf16.msra.mxu0 0
  %3944 = vmatprep.subr.bf16.mxu0 0
  %3945 = vmatpush1.bf16.msra.mxu0 0
  %3946 = vmatprep.subr.bf16.mxu0 0
  %3947 = vmatpush1.bf16.msra.mxu0 0
  %3948 = vmatprep.subr.bf16.mxu0 0
  %3949 = vmatpush1.bf16.msra.mxu0 0
  %3950 = vmatprep.subr.bf16.mxu0 0
  %3951 = vmatpush1.bf16.msra.mxu0 0
  %3952 = vmatprep.subr.bf16.mxu0 0
  %3953 = vmatpush1.bf16.msra.mxu0 0
  %3954 = vmatprep.subr.bf16.mxu0 0
  %3955 = vmatpush1.bf16.msra.mxu0 0
  %3956 = vmatprep.subr.bf16.mxu0 0
  %3957 = vmatpush1.bf16.msra.mxu0 0
  %3958 = vmatprep.mubr.bf16.mxu0 0
  %3959 = vmatmul.mubr.bf16.gmra.mrb[0].mxu0 %v3903
  %v3960 = vpop.f32.mrb[0].mxu0
  %v3961 = vadd.f32 0.0, %v3960
  %v3962 = vpop.f32.mrb[0].mxu0
  %v3963 = vpop.f32.mrb[0].mxu0
  %v3964 = vadd.f32 0.0, %v3963
  %v3965 = vpop.f32.mrb[0].mxu0
  %3966 = vmatprep.mubr.bf16.mxu0 0
  %3967 = vmatmul.mubr.bf16.gmra.mrb[0].mxu0 %v3906
  %v3968 = vpop.f32.mrb[0].mxu0
  %v3969 = vadd.f32 0.0, %v3968
  %v3970 = vpop.f32.mrb[0].mxu0
  %v3971 = vpop.f32.mrb[0].mxu0
  %v3972 = vadd.f32 0.0, %v3971
  %v3973 = vpop.f32.mrb[0].mxu0
  %3974 = vmatprep.mubr.bf16.mxu0 0
  %3975 = vmatmul.mubr.bf16.gmra.mrb[0].mxu0 %v3909
  %v3976 = vpop.f32.mrb[0].mxu0
  %v3977 = vadd.f32 0.0, %v3976
  %v3978 = vpop.f32.mrb[0].mxu0
  %v3979 = vpop.f32.mrb[0].mxu0
  %v3980 = vadd.f32 0.0, %v3979
  %v3981 = vpop.f32.mrb[0].mxu0
  %3982 = vmatprep.mubr.bf16.mxu0 0
  %3983 = vmatmul.mubr.bf16.gmra.mrb[0].mxu0 %v3912
  %v3984 = vpop.f32.mrb[0].mxu0
  %v3985 = vadd.f32 0.0, %v3984
  %v3986 = vpop.f32.mrb[0].mxu0
  %v3987 = vpop.f32.mrb[0].mxu0
  %v3988 = vadd.f32 0.0, %v3987
  %v3989 = vpop.f32.mrb[0].mxu0
  %3990 = vmatprep.mubr.bf16.mxu0 0
  %3991 = vmatmul.mubr.bf16.gmra.mrb[0].mxu0 %v3915
  %v3992 = vpop.f32.mrb[0].mxu0
  %v3993 = vadd.f32 0.0, %v3992
  %v3994 = vpop.f32.mrb[0].mxu0
  %v3995 = vpop.f32.mrb[0].mxu0
  %v3996 = vadd.f32 0.0, %v3995
  %v3997 = vpop.f32.mrb[0].mxu0
  %3998 = vmatprep.mubr.bf16.mxu0 0
  %3999 = vmatmul.mubr.bf16.gmra.mrb[0].mxu0 %v3918
  %v4000 = vpop.f32.mrb[0].mxu0
  %v4001 = vadd.f32 0.0, %v4000
  %v4002 = vpop.f32.mrb[0].mxu0
  %v4003 = vpop.f32.mrb[0].mxu0
  %v4004 = vadd.f32 0.0, %v4003
  %v4005 = vpop.f32.mrb[0].mxu0
  %4006 = vmatprep.mubr.bf16.mxu0 0
  %4007 = vmatmul.mubr.bf16.gmra.mrb[0].mxu0 %v3921
  %v4008 = vpop.f32.mrb[0].mxu0
  %v4009 = vadd.f32 0.0, %v4008
  %v4010 = vpop.f32.mrb[0].mxu0
  %v4011 = vpop.f32.mrb[0].mxu0
  %v4012 = vadd.f32 0.0, %v4011
  %v4013 = vpop.f32.mrb[0].mxu0
  %4014 = vmatprep.mubr.bf16.mxu0 0
  %4015 = vmatmul.mubr.bf16.gmra.mrb[0].mxu0 %v3924
  %v4016 = vpop.f32.mrb[0].mxu0
  %v4017 = vadd.f32 0.0, %v4016
  %v4018 = vpop.f32.mrb[0].mxu0
  %v4019 = vpop.f32.mrb[0].mxu0
  %v4020 = vadd.f32 0.0, %v4019
  %v4021 = vpop.f32.mrb[0].mxu0
  %4022 = vdwg.mxu0
  %v4023 = vadd.f32 %v3853, %v3961
  %v4024 = vadd.f32 %v3854, %v3964
  %v4025 = vadd.f32 %v3855, %v3969
  %v4026 = vadd.f32 %v3856, %v3972
  %v4027 = vadd.f32 %v3857, %v3977
  %v4028 = vadd.f32 %v3858, %v3980
  %v4029 = vadd.f32 %v3859, %v3985
  %v4030 = vadd.f32 %v3860, %v3988
  %v4031 = vadd.f32 %v3861, %v3993
  %v4032 = vadd.f32 %v3862, %v3996
  %v4033 = vadd.f32 %v3863, %v4001
  %v4034 = vadd.f32 %v3864, %v4004
  %v4035 = vadd.f32 %v3865, %v4009
  %v4036 = vadd.f32 %v3866, %v4012
  %v4037 = vadd.f32 %v3867, %v4017
  %v4038 = vadd.f32 %v3868, %v4020
  %v4039 = vld [vmem:[%s9] sm:$0xff]
  %v4040 = vld [vmem:[%s9 + $0x8] sm:$0xff]
  %v4041 = vld [vmem:[%s9 + $0x10] sm:$0xff]
  %v4042 = vld [vmem:[%s9 + $0x18] sm:$0xff]
  %v4043 = vld [vmem:[%s9 + $0x20] sm:$0xff]
  %v4044 = vld [vmem:[%s9 + $0x28] sm:$0xff]
  %v4045 = vld [vmem:[%s9 + $0x30] sm:$0xff]
  %v4046 = vld [vmem:[%s9 + $0x38] sm:$0xff]
  %v4047 = vld [vmem:[%s9 + $0x40] sm:$0xff]
  %v4048 = vld [vmem:[%s9 + $0x48] sm:$0xff]
  %v4049 = vld [vmem:[%s9 + $0x50] sm:$0xff]
  %v4050 = vld [vmem:[%s9 + $0x58] sm:$0xff]
  %v4051 = vld [vmem:[%s9 + $0x60] sm:$0xff]
  %v4052 = vld [vmem:[%s9 + $0x68] sm:$0xff]
  %v4053 = vld [vmem:[%s9 + $0x70] sm:$0xff]
  %v4054 = vld [vmem:[%s9 + $0x78] sm:$0xff]
  %v4055 = vld [vmem:[%s7] sm:$0x1]
  %v4056 = vld [vmem:[%s8] sm:$0x1]
  %v4057 = vadd.f32 %v4023, %v4024
  %v4058 = vadd.f32 %v4057, %v4025
  %v4059 = vadd.f32 %v4058, %v4026
  %v4060 = vadd.f32 %v4059, %v4027
  %v4061 = vadd.f32 %v4060, %v4028
  %v4062 = vadd.f32 %v4061, %v4029
  %v4063 = vadd.f32 %v4062, %v4030
  %v4064 = vadd.f32 %v4063, %v4031
  %v4065 = vadd.f32 %v4064, %v4032
  %v4066 = vadd.f32 %v4065, %v4033
  %v4067 = vadd.f32 %v4066, %v4034
  %v4068 = vadd.f32 %v4067, %v4035
  %v4069 = vadd.f32 %v4068, %v4036
  %v4070 = vadd.f32 %v4069, %v4037
  %v4071 = vadd.f32 %v4070, %v4038
  %v4072 = vrot.slane %v4071, 4
  %v4073 = vadd.f32 %v4071, %v4072
  %v4074 = vrot.slane %v4073, 2
  %v4075 = vadd.f32 %v4073, %v4074
  %v4076 = vrot.slane %v4075, 1
  %v4077 = vadd.f32 %v4075, %v4076
  %v4078 = vmul.f32 %v4023, %v4023
  %v4079 = vmul.f32 %v4024, %v4024
  %v4080 = vmul.f32 %v4025, %v4025
  %v4081 = vmul.f32 %v4026, %v4026
  %v4082 = vmul.f32 %v4027, %v4027
  %v4083 = vmul.f32 %v4028, %v4028
  %v4084 = vmul.f32 %v4029, %v4029
  %v4085 = vmul.f32 %v4030, %v4030
  %v4086 = vmul.f32 %v4031, %v4031
  %v4087 = vmul.f32 %v4032, %v4032
  %v4088 = vmul.f32 %v4033, %v4033
  %v4089 = vmul.f32 %v4034, %v4034
  %v4090 = vmul.f32 %v4035, %v4035
  %v4091 = vmul.f32 %v4036, %v4036
  %v4092 = vmul.f32 %v4037, %v4037
  %v4093 = vmul.f32 %v4038, %v4038
  %v4094 = vadd.f32 %v4078, %v4079
  %v4095 = vadd.f32 %v4094, %v4080
  %v4096 = vadd.f32 %v4095, %v4081
  %v4097 = vadd.f32 %v4096, %v4082
  %v4098 = vadd.f32 %v4097, %v4083
  %v4099 = vadd.f32 %v4098, %v4084
  %v4100 = vadd.f32 %v4099, %v4085
  %v4101 = vadd.f32 %v4100, %v4086
  %v4102 = vadd.f32 %v4101, %v4087
  %v4103 = vadd.f32 %v4102, %v4088
  %v4104 = vadd.f32 %v4103, %v4089
  %v4105 = vadd.f32 %v4104, %v4090
  %v4106 = vadd.f32 %v4105, %v4091
  %v4107 = vadd.f32 %v4106, %v4092
  %v4108 = vadd.f32 %v4107, %v4093
  %v4109 = vrot.slane %v4108, 4
  %v4110 = vadd.f32 %v4108, %v4109
  %v4111 = vrot.slane %v4110, 2
  %v4112 = vadd.f32 %v4110, %v4111
  %v4113 = vrot.slane %v4112, 1
  %v4114 = vadd.f32 %v4112, %v4113
  %4115 = vmatprep.subr.mxu0 0.0
  %4116 = vmatpush1.msra.mxu0 %v4039
  %4117 = vmatprep.subr.mxu0 0.0
  %4118 = vmatpush1.msra.mxu0 %v4040
  %4119 = vmatprep.subr.mxu0 0.0
  %4120 = vmatpush1.msra.mxu0 %v4041
  %4121 = vmatprep.subr.mxu0 0.0
  %4122 = vmatpush1.msra.mxu0 %v4042
  %4123 = vmatprep.subr.mxu0 0.0
  %4124 = vmatpush1.msra.mxu0 %v4043
  %4125 = vmatprep.subr.mxu0 0.0
  %4126 = vmatpush1.msra.mxu0 %v4044
  %4127 = vmatprep.subr.mxu0 0.0
  %4128 = vmatpush1.msra.mxu0 %v4045
  %4129 = vmatprep.subr.mxu0 0.0
  %4130 = vmatpush1.msra.mxu0 %v4046
  %4131 = vmatprep.subr.mxu0 0.0
  %4132 = vmatpush1.msra.mxu0 %v4047
  %4133 = vmatprep.subr.mxu0 0.0
  %4134 = vmatpush1.msra.mxu0 %v4048
  %4135 = vmatprep.subr.mxu0 0.0
  %4136 = vmatpush1.msra.mxu0 %v4049
  %4137 = vmatprep.subr.mxu0 0.0
  %4138 = vmatpush1.msra.mxu0 %v4050
  %4139 = vmatprep.subr.mxu0 0.0
  %4140 = vmatpush1.msra.mxu0 %v4051
  %4141 = vmatprep.subr.mxu0 0.0
  %4142 = vmatpush1.msra.mxu0 %v4052
  %4143 = vmatprep.subr.mxu0 0.0
  %4144 = vmatpush1.msra.mxu0 %v4053
  %4145 = vmatprep.subr.mxu0 0.0
  %4146 = vmatpush1.msra.mxu0 %v4054
  %4147 = vmatprep.subr.mxu0 0.0
  %4148 = vmatpush1.msra.mxu0 0.0
  %4149 = vmatprep.subr.mxu0 0.0
  %4150 = vmatpush1.msra.mxu0 0.0
  %4151 = vmatprep.subr.mxu0 0.0
  %4152 = vmatpush1.msra.mxu0 0.0
  %4153 = vmatprep.subr.mxu0 0.0
  %4154 = vmatpush1.msra.mxu0 0.0
  %4155 = vmatprep.subr.mxu0 0.0
  %4156 = vmatpush1.msra.mxu0 0.0
  %4157 = vmatprep.subr.mxu0 0.0
  %4158 = vmatpush1.msra.mxu0 0.0
  %4159 = vmatprep.subr.mxu0 0.0
  %4160 = vmatpush1.msra.mxu0 0.0
  %4161 = vmatprep.subr.mxu0 0.0
  %4162 = vmatpush1.msra.mxu0 0.0
  %4163 = vmatprep.subr.mxu0 0.0
  %4164 = vmatpush1.msra.mxu0 0.0
  %4165 = vmatprep.subr.mxu0 0.0
  %4166 = vmatpush1.msra.mxu0 0.0
  %4167 = vmatprep.subr.mxu0 0.0
  %4168 = vmatpush1.msra.mxu0 0.0
  %4169 = vmatprep.subr.mxu0 0.0
  %4170 = vmatpush1.msra.mxu0 0.0
  %4171 = vmatprep.subr.mxu0 0.0
  %4172 = vmatpush1.msra.mxu0 0.0
  %4173 = vmatprep.subr.mxu0 0.0
  %4174 = vmatpush1.msra.mxu0 0.0
  %4175 = vmatprep.subr.mxu0 0.0
  %4176 = vmatpush1.msra.mxu0 0.0
  %4177 = vmatprep.subr.mxu0 0.0
  %4178 = vmatpush1.msra.mxu0 0.0
  %4179 = vmatprep.mubr.f32.mxu0 0.0
  %4180 = vmatmul.mubr.f32.gmra.mrb[0].mxu0 %v4077
  %v4181 = vpop.f32.mrb[0].mxu0
  %v4182 = vadd.f32 0.0, %v4181
  %v4183 = vpop.f32.mrb[0].mxu0
  %4184 = vdwg.mxu0
  %4185 = vmatprep.subr.mxu0 0.0
  %4186 = vmatpush1.msra.mxu0 %v4039
  %4187 = vmatprep.subr.mxu0 0.0
  %4188 = vmatpush1.msra.mxu0 %v4040
  %4189 = vmatprep.subr.mxu0 0.0
  %4190 = vmatpush1.msra.mxu0 %v4041
  %4191 = vmatprep.subr.mxu0 0.0
  %4192 = vmatpush1.msra.mxu0 %v4042
  %4193 = vmatprep.subr.mxu0 0.0
  %4194 = vmatpush1.msra.mxu0 %v4043
  %4195 = vmatprep.subr.mxu0 0.0
  %4196 = vmatpush1.msra.mxu0 %v4044
  %4197 = vmatprep.subr.mxu0 0.0
  %4198 = vmatpush1.msra.mxu0 %v4045
  %4199 = vmatprep.subr.mxu0 0.0
  %4200 = vmatpush1.msra.mxu0 %v4046
  %4201 = vmatprep.subr.mxu0 0.0
  %4202 = vmatpush1.msra.mxu0 %v4047
  %4203 = vmatprep.subr.mxu0 0.0
  %4204 = vmatpush1.msra.mxu0 %v4048
  %4205 = vmatprep.subr.mxu0 0.0
  %4206 = vmatpush1.msra.mxu0 %v4049
  %4207 = vmatprep.subr.mxu0 0.0
  %4208 = vmatpush1.msra.mxu0 %v4050
  %4209 = vmatprep.subr.mxu0 0.0
  %4210 = vmatpush1.msra.mxu0 %v4051
  %4211 = vmatprep.subr.mxu0 0.0
  %4212 = vmatpush1.msra.mxu0 %v4052
  %4213 = vmatprep.subr.mxu0 0.0
  %4214 = vmatpush1.msra.mxu0 %v4053
  %4215 = vmatprep.subr.mxu0 0.0
  %4216 = vmatpush1.msra.mxu0 %v4054
  %4217 = vmatprep.subr.mxu0 0.0
  %4218 = vmatpush1.msra.mxu0 0.0
  %4219 = vmatprep.subr.mxu0 0.0
  %4220 = vmatpush1.msra.mxu0 0.0
  %4221 = vmatprep.subr.mxu0 0.0
  %4222 = vmatpush1.msra.mxu0 0.0
  %4223 = vmatprep.subr.mxu0 0.0
  %4224 = vmatpush1.msra.mxu0 0.0
  %4225 = vmatprep.subr.mxu0 0.0
  %4226 = vmatpush1.msra.mxu0 0.0
  %4227 = vmatprep.subr.mxu0 0.0
  %4228 = vmatpush1.msra.mxu0 0.0
  %4229 = vmatprep.subr.mxu0 0.0
  %4230 = vmatpush1.msra.mxu0 0.0
  %4231 = vmatprep.subr.mxu0 0.0
  %4232 = vmatpush1.msra.mxu0 0.0
  %4233 = vmatprep.subr.mxu0 0.0
  %4234 = vmatpush1.msra.mxu0 0.0
  %4235 = vmatprep.subr.mxu0 0.0
  %4236 = vmatpush1.msra.mxu0 0.0
  %4237 = vmatprep.subr.mxu0 0.0
  %4238 = vmatpush1.msra.mxu0 0.0
  %4239 = vmatprep.subr.mxu0 0.0
  %4240 = vmatpush1.msra.mxu0 0.0
  %4241 = vmatprep.subr.mxu0 0.0
  %4242 = vmatpush1.msra.mxu0 0.0
  %4243 = vmatprep.subr.mxu0 0.0
  %4244 = vmatpush1.msra.mxu0 0.0
  %4245 = vmatprep.subr.mxu0 0.0
  %4246 = vmatpush1.msra.mxu0 0.0
  %4247 = vmatprep.subr.mxu0 0.0
  %4248 = vmatpush1.msra.mxu0 0.0
  %4249 = vmatprep.mubr.f32.mxu0 0.0
  %4250 = vmatmul.mubr.f32.gmra.mrb[0].mxu0 %v4114
  %v4251 = vpop.f32.mrb[0].mxu0
  %v4252 = vadd.f32 0.0, %v4251
  %v4253 = vpop.f32.mrb[0].mxu0
  %4254 = vdwg.mxu0
  %v4255 = vmul.f32 %v4182, 0.0009765625
  %v4256 = vmul.f32 %v4252, 0.0009765625
  %v4257 = vmul.f32 %v4255, %v4255
  %v4258 = vsub.f32 %v4256, %v4257
  %v4259 = vmax.f32 %v4258, 0.0
  %v4260 = vadd.f32 %v4259, 1e-05
  %v4261 = vrsqrt.pop %v4260
  %v4262 = vmul.f32 %v4055, %v4261
  %v4263 = vmul.f32 %v4255, %v4262
  %v4264 = vsub.f32 %v4056, %v4263
  %v4266 = vlaneseq
  %v4267 = vshrl.u32 %v4266, 7
  %v4268 = vsub.s32 0, %v4267
  %v4269 = vrot.slane %v4262, %v4268
  %v4271 = vmul.f32 %v4023, %v4269
  %v4272 = vmul.f32 %v4024, %v4269
  %v4273 = vmul.f32 %v4025, %v4269
  %v4274 = vmul.f32 %v4026, %v4269
  %v4275 = vmul.f32 %v4027, %v4269
  %v4276 = vmul.f32 %v4028, %v4269
  %v4277 = vmul.f32 %v4029, %v4269
  %v4278 = vmul.f32 %v4030, %v4269
  %v4279 = vmul.f32 %v4031, %v4269
  %v4280 = vmul.f32 %v4032, %v4269
  %v4281 = vmul.f32 %v4033, %v4269
  %v4282 = vmul.f32 %v4034, %v4269
  %v4283 = vmul.f32 %v4035, %v4269
  %v4284 = vmul.f32 %v4036, %v4269
  %v4285 = vmul.f32 %v4037, %v4269
  %v4286 = vmul.f32 %v4038, %v4269
  %v4288 = vlaneseq
  %v4289 = vshrl.u32 %v4288, 7
  %v4290 = vsub.s32 0, %v4289
  %v4291 = vrot.slane %v4264, %v4290
  %v4293 = vadd.f32 %v4271, %v4291
  %v4294 = vadd.f32 %v4272, %v4291
  %v4295 = vadd.f32 %v4273, %v4291
  %v4296 = vadd.f32 %v4274, %v4291
  %v4297 = vadd.f32 %v4275, %v4291
  %v4298 = vadd.f32 %v4276, %v4291
  %v4299 = vadd.f32 %v4277, %v4291
  %v4300 = vadd.f32 %v4278, %v4291
  %v4301 = vadd.f32 %v4279, %v4291
  %v4302 = vadd.f32 %v4280, %v4291
  %v4303 = vadd.f32 %v4281, %v4291
  %v4304 = vadd.f32 %v4282, %v4291
  %v4305 = vadd.f32 %v4283, %v4291
  %v4306 = vadd.f32 %v4284, %v4291
  %v4307 = vadd.f32 %v4285, %v4291
  %v4308 = vadd.f32 %v4286, %v4291
  %v4309 = vmax.f32 %v4293, 0.0
  %v4310 = vmax.f32 %v4294, 0.0
  %v4311 = vmax.f32 %v4295, 0.0
  %v4312 = vmax.f32 %v4296, 0.0
  %v4313 = vmax.f32 %v4297, 0.0
  %v4314 = vmax.f32 %v4298, 0.0
  %v4315 = vmax.f32 %v4299, 0.0
  %v4316 = vmax.f32 %v4300, 0.0
  %v4317 = vmax.f32 %v4301, 0.0
  %v4318 = vmax.f32 %v4302, 0.0
  %v4319 = vmax.f32 %v4303, 0.0
  %v4320 = vmax.f32 %v4304, 0.0
  %v4321 = vmax.f32 %v4305, 0.0
  %v4322 = vmax.f32 %v4306, 0.0
  %v4323 = vmax.f32 %v4307, 0.0
  %v4324 = vmax.f32 %v4308, 0.0
  %4325 = vst [vmem:[%s10] sm:$0xff] %v4309
  %4326 = vst [vmem:[%s10 + $0x8] sm:$0xff] %v4310
  %4327 = vst [vmem:[%s10 + $0x10] sm:$0xff] %v4311
  %4328 = vst [vmem:[%s10 + $0x18] sm:$0xff] %v4312
  %4329 = vst [vmem:[%s10 + $0x20] sm:$0xff] %v4313
  %4330 = vst [vmem:[%s10 + $0x28] sm:$0xff] %v4314
  %4331 = vst [vmem:[%s10 + $0x30] sm:$0xff] %v4315
  %4332 = vst [vmem:[%s10 + $0x38] sm:$0xff] %v4316
  %4333 = vst [vmem:[%s10 + $0x40] sm:$0xff] %v4317
  %4334 = vst [vmem:[%s10 + $0x48] sm:$0xff] %v4318
  %4335 = vst [vmem:[%s10 + $0x50] sm:$0xff] %v4319
  %4336 = vst [vmem:[%s10 + $0x58] sm:$0xff] %v4320
  %4337 = vst [vmem:[%s10 + $0x60] sm:$0xff] %v4321
  %4338 = vst [vmem:[%s10 + $0x68] sm:$0xff] %v4322
  %4339 = vst [vmem:[%s10 + $0x70] sm:$0xff] %v4323
  %4340 = vst [vmem:[%s10 + $0x78] sm:$0xff] %v4324
  // Predicated region
  $region42: #{bottle_conv_resnet_block.1} parent=0 // pred_check
    _
  $region43: #{bottle_conv_resnet_block.1} parent=0 // pred_check_branch
    %4342 = sbr.rel (0) target = $region45
  $region44: #{bottle_conv_resnet_block.1} parent=0 // pred_region
    _
  $region45: #{bottle_conv_resnet_block.1} parent=0 // pred_fallthru
    _
  // Predicated region
  $region46: #{bottle_conv_resnet_block.1} parent=0 // pred_check
    _
  $region47: #{bottle_conv_resnet_block.1} parent=0 // pred_check_branch
    %4344 = sbr.rel (0) target = $region49
  $region48: #{bottle_conv_resnet_block.1} parent=0 // pred_region
    _
  $region49: #{bottle_conv_resnet_block.1} parent=0 // pred_fallthru
    _

</llo_original>
